<compile_context>
chip_gen: v5e
topology: v5e:2x2
jax: 0.10.0
libtpu: 0.0.40
codegen_flags: <defaults>
</compile_context>

<pallas_src>
import functools
import numpy as np

import jax
import jax.numpy as jnp
from jax.experimental import pallas as pl
from jax.experimental.pallas import tpu as pltpu

F32 = jnp.float32
BF16 = jnp.bfloat16


# ------------------------------ small helpers -------------------------------

def _dotf32(x, w):
    """bf16 x bf16 matmul with f32 accumulation on the MXU."""
    return jnp.dot(x.astype(BF16), w, preferred_element_type=jnp.float32)


def _full_spec(arr):
    """Full-array BlockSpec (weights / shift vectors resident in VMEM)."""
    nd = arr.ndim
    return pl.BlockSpec(arr.shape, lambda *idx: (0,) * nd)


def _pick_point_tile(n):
    # Prefer large tiles (mem-bound layers hit ~85% of HBM roofline at 512 on
    # v6e); cap at 512 so the fused chains also fit v7x's 64 MiB VMEM.
    for t in (512, 256, 128, 64, 32, 16, 8):
        if n % t == 0:
            return t
    # TODO(synk): ragged N (no divisor in {8..512}) needs a cdiv grid + masked
    #             tail; fall back to a single full-N block for now.
    return n


# ----------------------------- Pallas kernels ------------------------------

def _stn_kernel(x_ref, c1w, c1t, c2w, c2t, c3w, c3t,
                f1w, f1t, f2w, f2t, f3w, f3t,
                trans_ref, gmax_ref):
    """Fused STN: conv1->conv2->conv3 (+ReLU), running max over points,
    then fc1->fc2->fc3 (+identity, folded in t) on the final grid step."""
    n = pl.program_id(1)

    h = jnp.maximum(_dotf32(x_ref[0], c1w[...]) + c1t[...], 0.0)
    h = jnp.maximum(_dotf32(h, c2w[...]) + c2t[...], 0.0)
    h = jnp.maximum(_dotf32(h, c3w[...]) + c3t[...], 0.0)
    tile_max = jnp.max(h, axis=0, keepdims=True)          # (1, C3)

    @pl.when(n == 0)
    def _():
        gmax_ref[...] = tile_max

    @pl.when(n > 0)
    def _():
        gmax_ref[...] = jnp.maximum(gmax_ref[...], tile_max)

    @pl.when(n == pl.num_programs(1) - 1)
    def _():
        g = gmax_ref[...]                                  # (1, C3)
        g = jnp.maximum(_dotf32(g, f1w[...]) + f1t[...], 0.0)
        g = jnp.maximum(_dotf32(g, f2w[...]) + f2t[...], 0.0)
        trans_ref[0] = (_dotf32(g, f3w[...]) + f3t[...]).astype(trans_ref.dtype)


def _enc1_kernel(x_ref, w_ref, t_ref, o_ref):
    """enc conv1 with the 3x3 input transform pre-folded into a per-batch
    weight: y = relu(x @ W_b + t)."""
    y = jnp.dot(x_ref[0].astype(BF16), w_ref[0],
                preferred_element_type=jnp.float32)
    o_ref[0] = jnp.maximum(y + t_ref[...], 0.0).astype(o_ref.dtype)


def _enc_tail_kernel(x_ref, tf_ref, w2, t2, w3, t3, pf_ref, g_ref):
    """Fused: pointfeat = x @ trans_feat; h = relu(bn2(conv2(pf)));
    h = bn3(conv3(h)); running max over points -> global feature."""
    n = pl.program_id(1)

    pf = jnp.dot(x_ref[0].astype(BF16), tf_ref[0].astype(BF16),
                 preferred_element_type=jnp.float32)       # (tn, C1)
    pf_ref[0] = pf.astype(pf_ref.dtype)

    h = jnp.maximum(_dotf32(pf, w2[...]) + t2[...], 0.0)
    h = _dotf32(h, w3[...]) + t3[...]                      # enc_c3: BN, no ReLU
    tile_max = jnp.max(h, axis=0, keepdims=True)           # (1, C3)

    @pl.when(n == 0)
    def _():
        g_ref[0] = tile_max

    @pl.when(n > 0)
    def _():
        g_ref[0] = jnp.maximum(g_ref[0], tile_max)


def _head_kernel(g_ref, pf_ref, wg, wp, t1, w2, t2, w3, t3, w4, t4, o_ref):
    """Fused segmentation head: head_c1 (split into global-feat + pointfeat
    weight rows, so the (B,N,1088/c) concat is never built), head_c2, head_c3,
    head_c4, and log_softmax."""
    hg = jnp.dot(g_ref[0].astype(BF16), wg[...],
                 preferred_element_type=jnp.float32)       # (1, C512)
    h = jnp.dot(pf_ref[0].astype(BF16), wp[...],
                preferred_element_type=jnp.float32)        # (tn, C512)
    h = jnp.maximum(h + hg + t1[...], 0.0)
    h = jnp.maximum(_dotf32(h, w2[...]) + t2[...], 0.0)
    h = jnp.maximum(_dotf32(h, w3[...]) + t3[...], 0.0)
    logits = _dotf32(h, w4[...]) + t4[...]                 # (tn, k)

    m = jnp.max(logits, axis=-1, keepdims=True)
    z = logits - m
    lse = jnp.log(jnp.sum(jnp.exp(z), axis=-1, keepdims=True))
    o_ref[0] = (z - lse).astype(o_ref.dtype)


# ----------------------------- Pallas wrappers ------------------------------

_LAYERS_STN = ("c1", "c2", "c3", "f1", "f2", "f3")


def apply_stn(x, p, k_out, tn):
    B, N, cin = x.shape
    nt = N // tn
    c3 = p["c3"]["w"].shape[1]
    kk = k_out * k_out

    in_specs = [pl.BlockSpec((1, tn, cin), lambda b, n: (b, n, 0))]
    operands = [x]
    for layer in _LAYERS_STN:
        for key in ("w", "t"):
            in_specs.append(_full_spec(p[layer][key]))
            operands.append(p[layer][key])

    trans = pl.pallas_call(
        _stn_kernel,
        out_shape=jax.ShapeDtypeStruct((B, 1, kk), F32),
        grid=(B, nt),
        in_specs=in_specs,
        out_specs=pl.BlockSpec((1, 1, kk), lambda b, n: (b, 0, 0)),
        scratch_shapes=[pltpu.VMEM((1, c3), F32)],
        compiler_params=pltpu.CompilerParams(
            dimension_semantics=("parallel", "arbitrary")),
    )(*operands)
    return trans.reshape(B, k_out, k_out)


def apply_enc1(x, w_b, t, tn):
    B, N, cin = x.shape
    cout = w_b.shape[2]
    nt = N // tn
    return pl.pallas_call(
        _enc1_kernel,
        out_shape=jax.ShapeDtypeStruct((B, N, cout), BF16),
        grid=(B, nt),
        in_specs=[
            pl.BlockSpec((1, tn, cin), lambda b, n: (b, n, 0)),
            pl.BlockSpec((1, cin, cout), lambda b, n: (b, 0, 0)),
            _full_spec(t),
        ],
        out_specs=pl.BlockSpec((1, tn, cout), lambda b, n: (b, n, 0)),
        compiler_params=pltpu.CompilerParams(
            dimension_semantics=("parallel", "parallel")),
    )(x, w_b, t)


def apply_enc_tail(x1, trans_feat, p2, p3, tn):
    B, N, c1 = x1.shape
    c3 = p3["w"].shape[1]
    nt = N // tn
    pf, g = pl.pallas_call(
        _enc_tail_kernel,
        out_shape=(jax.ShapeDtypeStruct((B, N, c1), BF16),
                   jax.ShapeDtypeStruct((B, 1, c3), F32)),
        grid=(B, nt),
        in_specs=[
            pl.BlockSpec((1, tn, c1), lambda b, n: (b, n, 0)),
            pl.BlockSpec((1, c1, c1), lambda b, n: (b, 0, 0)),
            _full_spec(p2["w"]), _full_spec(p2["t"]),
            _full_spec(p3["w"]), _full_spec(p3["t"]),
        ],
        out_specs=(pl.BlockSpec((1, tn, c1), lambda b, n: (b, n, 0)),
                   pl.BlockSpec((1, 1, c3), lambda b, n: (b, 0, 0))),
        compiler_params=pltpu.CompilerParams(
            dimension_semantics=("parallel", "arbitrary")),
    )(x1, trans_feat, p2["w"], p2["t"], p3["w"], p3["t"])
    return pf, g


def apply_head(g, pf, params, num_class, tn):
    B, N, c1 = pf.shape
    cg = g.shape[2]
    nt = N // tn
    h1, h2 = params["head_c1"], params["head_c2"]
    h3, h4 = params["head_c3"], params["head_c4"]
    return pl.pallas_call(
        _head_kernel,
        out_shape=jax.ShapeDtypeStruct((B, N, num_class), F32),
        grid=(B, nt),
        in_specs=[
            pl.BlockSpec((1, 1, cg), lambda b, n: (b, 0, 0)),
            pl.BlockSpec((1, tn, c1), lambda b, n: (b, n, 0)),
            _full_spec(h1["wg"]), _full_spec(h1["wp"]), _full_spec(h1["t"]),
            _full_spec(h2["w"]), _full_spec(h2["t"]),
            _full_spec(h3["w"]), _full_spec(h3["t"]),
            _full_spec(h4["w"]), _full_spec(h4["t"]),
        ],
        out_specs=pl.BlockSpec((1, tn, num_class), lambda b, n: (b, n, 0)),
        compiler_params=pltpu.CompilerParams(
            dimension_semantics=("parallel", "parallel")),
    )(g, pf, h1["wg"], h1["wp"], h1["t"],
      h2["w"], h2["t"], h3["w"], h3["t"], h4["w"], h4["t"])


# ----------------------------- Parameter setup ------------------------------

def _init_layer(key, cin, cout, with_bn, extra_shift=None):
    ks = jax.random.split(key, 6)
    w = jax.random.normal(ks[0], (cin, cout), F32) / np.sqrt(cin)
    b = 0.05 * jax.random.normal(ks[1], (1, cout), F32)
    if with_bn:
        eps = 1e-5
        gamma = 1.0 + 0.1 * jax.random.normal(ks[2], (1, cout), F32)
        beta = 0.1 * jax.random.normal(ks[3], (1, cout), F32)
        mean = 0.1 * jax.random.normal(ks[4], (1, cout), F32)
        var = 0.5 + jnp.abs(jax.random.normal(ks[5], (1, cout), F32))
        s = gamma / jnp.sqrt(var + eps)
        t = beta - mean * s
    else:
        s = jnp.ones((1, cout), F32)
        t = jnp.zeros((1, cout), F32)
    if extra_shift is not None:
        t = t + extra_shift.reshape(1, cout)
    # Fold BatchNorm + bias:  (x @ w + b) * s + t  ==  x @ (w * s) + (b * s + t)
    return {"w": (w * s).astype(BF16), "t": (b * s + t).astype(F32)}


def _init_stn(key, cin, k_out, cp):
    ks = jax.random.split(key, 6)
    eye = jnp.eye(k_out, dtype=F32).reshape(-1)
    return {
        "c1": _init_layer(ks[0], cin, cp(64), True),
        "c2": _init_layer(ks[1], cp(64), cp(128), True),
        "c3": _init_layer(ks[2], cp(128), cp(1024), True),
        "f1": _init_layer(ks[3], cp(1024), cp(512), True),
        "f2": _init_layer(ks[4], cp(512), cp(256), True),
        "f3": _init_layer(ks[5], cp(256), k_out * k_out, False,
                          extra_shift=eye),
    }


def init_model_params(key, num_class, c_prune_rate=1, channel=9):
    cp = lambda c: int(c / c_prune_rate)
    ks = jax.random.split(key, 9)
    # head_c1 acts on concat([global_feat, pointfeat]); split its (folded)
    # weight by rows so the concat never needs to be materialized.
    h1 = _init_layer(ks[5], cp(1024) + cp(64), cp(512), True)
    return {
        "stn":     _init_stn(ks[0], channel, 3, cp),
        "fstn":    _init_stn(ks[1], cp(64), cp(64), cp),
        "enc_c1":  _init_layer(ks[2], channel, cp(64), True),
        "enc_c2":  _init_layer(ks[3], cp(64), cp(128), True),
        "enc_c3":  _init_layer(ks[4], cp(128), cp(1024), True),
        "head_c1": {"wg": h1["w"][:cp(1024)],
                    "wp": h1["w"][cp(1024):],
                    "t": h1["t"]},
        "head_c2": _init_layer(ks[6], cp(512), cp(256), True),
        "head_c3": _init_layer(ks[7], cp(256), cp(128), True),
        "head_c4": _init_layer(ks[8], cp(128), num_class, False),
    }


# ------------------------------- Forward pass -------------------------------

def get_model_forward(params, x_ncl, num_class, c_prune_rate=1, tn=None):
    # x_ncl: (B, 9, N) -- same layout as the PyTorch Conv1d input.
    B, _, N = x_ncl.shape
    if tn is None:
        tn = _pick_point_tile(N)
    x = jnp.transpose(x_ncl, (0, 2, 1))                  # (B, N, 9) channels-last

    # ---- PointNetEncoder(global_feat=False, feature_transform=True) ----
    trans = apply_stn(x, params["stn"], 3, tn)           # (B, 3, 3)

    # Fold the 3x3 coordinate transform into enc_c1's weight (per batch):
    #   concat([coords @ trans, feats]) @ W  ==  x @ [[trans @ W[:3]], [W[3:]]]
    w1 = params["enc_c1"]["w"]                           # (9, C1) bf16
    c1 = w1.shape[1]
    w_coords = jnp.einsum("bij,jc->bic", trans, w1[:3].astype(F32))
    w_feats = jnp.broadcast_to(w1[3:].astype(F32)[None], (B, w1.shape[0] - 3, c1))
    w_b = jnp.concatenate([w_coords, w_feats], axis=1).astype(BF16)  # (B, 9, C1)

    x1 = apply_enc1(x, w_b, params["enc_c1"]["t"], tn)   # (B, N, 64/c) bf16
    trans_feat = apply_stn(x1, params["fstn"], c1, tn)   # (B, 64/c, 64/c)

    # bmm with trans_feat + enc_c2 + enc_c3 + global max, all fused:
    pf, g = apply_enc_tail(x1, trans_feat,
                           params["enc_c2"], params["enc_c3"], tn)

    # ---- segmentation head (+ fused log_softmax) ----
    logp = apply_head(g, pf, params, num_class, tn)      # (B, N, k)
    return logp, trans_feat


# ---------------------------------- Driver ----------------------------------

if __name__ == "__main__":
    num_class = 13
    c_prune_rate = 4          # pruned channels -> small shapes for the test
    B, C, N = 2, 9, 128

    key = jax.random.PRNGKey(0)
    kp, kx = jax.random.split(key)
    params = init_model_params(kp, num_class, c_prune_rate, channel=C)
    x = jax.random.normal(kx, (B, C, N), F32)

    fwd = jax.jit(functools.partial(
        get_model_forward, num_class=num_class, c_prune_rate=c_prune_rate))
    logp, trans_feat = fwd(params, x)
    jax.block_until_ready((logp, trans_feat))

    kf = 64 // c_prune_rate
    assert logp.shape == (B, N, num_class)
    assert trans_feat.shape == (B, kf, kf)
    assert bool(jnp.all(jnp.isfinite(logp)))
    assert bool(jnp.allclose(jnp.sum(jnp.exp(logp), axis=-1), 1.0, atol=1e-3))
    print("KERNEL_OK")
</pallas_src>

<mosaic_0001>
module attributes {stable_mosaic.version = 11 : i64} {
  func.func @_stn_kernel(%arg0: i32, %arg1: i32, %arg2: memref<1x128x9xf32, #tpu.memory_space<vmem>>, %arg3: memref<9x16xbf16, #tpu.memory_space<vmem>>, %arg4: memref<1x16xf32, #tpu.memory_space<vmem>>, %arg5: memref<16x32xbf16, #tpu.memory_space<vmem>>, %arg6: memref<1x32xf32, #tpu.memory_space<vmem>>, %arg7: memref<32x256xbf16, #tpu.memory_space<vmem>>, %arg8: memref<1x256xf32, #tpu.memory_space<vmem>>, %arg9: memref<256x128xbf16, #tpu.memory_space<vmem>>, %arg10: memref<1x128xf32, #tpu.memory_space<vmem>>, %arg11: memref<128x64xbf16, #tpu.memory_space<vmem>>, %arg12: memref<1x64xf32, #tpu.memory_space<vmem>>, %arg13: memref<64x9xbf16, #tpu.memory_space<vmem>>, %arg14: memref<1x9xf32, #tpu.memory_space<vmem>>, %arg15: memref<1x1x9xf32, #tpu.memory_space<vmem>>, %arg16: memref<1x256xf32, #tpu.memory_space<vmem>>) attributes {dimension_semantics = [#tpu.dimension_semantics<parallel>, #tpu.dimension_semantics<arbitrary>], iteration_bounds = array<i64: 2, 1>, scalar_prefetch = 0 : i64, scratch_operands = 1 : i64, tpu.core_type = #tpu.core_type<tc>, window_params = [{transform_indices = @transform_0, window_bounds = array<i64: 1, 128, 9>}, {pipeline_mode = #tpu.pipeline_mode<synchronous>, transform_indices = @transform_1, window_bounds = array<i64: 9, 16>}, {pipeline_mode = #tpu.pipeline_mode<synchronous>, transform_indices = @transform_2, window_bounds = array<i64: 1, 16>}, {pipeline_mode = #tpu.pipeline_mode<synchronous>, transform_indices = @transform_3, window_bounds = array<i64: 16, 32>}, {pipeline_mode = #tpu.pipeline_mode<synchronous>, transform_indices = @transform_4, window_bounds = array<i64: 1, 32>}, {pipeline_mode = #tpu.pipeline_mode<synchronous>, transform_indices = @transform_5, window_bounds = array<i64: 32, 256>}, {pipeline_mode = #tpu.pipeline_mode<synchronous>, transform_indices = @transform_6, window_bounds = array<i64: 1, 256>}, {pipeline_mode = #tpu.pipeline_mode<synchronous>, transform_indices = @transform_7, window_bounds = array<i64: 256, 128>}, {pipeline_mode = #tpu.pipeline_mode<synchronous>, transform_indices = @transform_8, window_bounds = array<i64: 1, 128>}, {pipeline_mode = #tpu.pipeline_mode<synchronous>, transform_indices = @transform_9, window_bounds = array<i64: 128, 64>}, {pipeline_mode = #tpu.pipeline_mode<synchronous>, transform_indices = @transform_10, window_bounds = array<i64: 1, 64>}, {pipeline_mode = #tpu.pipeline_mode<synchronous>, transform_indices = @transform_11, window_bounds = array<i64: 64, 9>}, {pipeline_mode = #tpu.pipeline_mode<synchronous>, transform_indices = @transform_12, window_bounds = array<i64: 1, 9>}, {transform_indices = @transform_13, window_bounds = array<i64: 1, 1, 9>}]} {
    %c0 = arith.constant 0 : index
    %c0_0 = arith.constant 0 : index
    %c0_1 = arith.constant 0 : index
    %0 = vector.load %arg2[%c0, %c0_0, %c0_1] : memref<1x128x9xf32, #tpu.memory_space<vmem>>, vector<1x128x9xf32>
    %1 = vector.shape_cast %0 : vector<1x128x9xf32> to vector<128x9xf32>
    %c0_2 = arith.constant 0 : index
    %c0_3 = arith.constant 0 : index
    %2 = vector.load %arg3[%c0_2, %c0_3] : memref<9x16xbf16, #tpu.memory_space<vmem>>, vector<9x16xbf16>
    %3 = arith.truncf %1 : vector<128x9xf32> to vector<128x9xbf16>
    %cst = arith.constant dense<0.000000e+00> : vector<128x16xf32>
    %4 = tpu.matmul %3, %2, %cst {dimension_numbers = #tpu.dot_dimension_numbers<[1], [0], [0], [1], [0, 0, 1, 1], [], []>} : vector<128x9xbf16>, vector<9x16xbf16>, vector<128x16xf32> -> vector<128x16xf32>
    %c0_4 = arith.constant 0 : index
    %c0_5 = arith.constant 0 : index
    %5 = vector.load %arg4[%c0_4, %c0_5] : memref<1x16xf32, #tpu.memory_space<vmem>>, vector<1x16xf32>
    %6 = vector.broadcast %5 : vector<1x16xf32> to vector<128x16xf32>
    %7 = arith.addf %4, %6 : vector<128x16xf32>
    %cst_6 = arith.constant 0.000000e+00 : f32
    %8 = vector.broadcast %cst_6 : f32 to vector<128x16xf32>
    %9 = arith.maximumf %7, %8 : vector<128x16xf32>
    %c0_7 = arith.constant 0 : index
    %c0_8 = arith.constant 0 : index
    %10 = vector.load %arg5[%c0_7, %c0_8] : memref<16x32xbf16, #tpu.memory_space<vmem>>, vector<16x32xbf16>
    %11 = arith.truncf %9 : vector<128x16xf32> to vector<128x16xbf16>
    %cst_9 = arith.constant dense<0.000000e+00> : vector<128x32xf32>
    %12 = tpu.matmul %11, %10, %cst_9 {dimension_numbers = #tpu.dot_dimension_numbers<[1], [0], [0], [1], [0, 0, 1, 1], [], []>} : vector<128x16xbf16>, vector<16x32xbf16>, vector<128x32xf32> -> vector<128x32xf32>
    %c0_10 = arith.constant 0 : index
    %c0_11 = arith.constant 0 : index
    %13 = vector.load %arg6[%c0_10, %c0_11] : memref<1x32xf32, #tpu.memory_space<vmem>>, vector<1x32xf32>
    %14 = vector.broadcast %13 : vector<1x32xf32> to vector<128x32xf32>
    %15 = arith.addf %12, %14 : vector<128x32xf32>
    %cst_12 = arith.constant 0.000000e+00 : f32
    %16 = vector.broadcast %cst_12 : f32 to vector<128x32xf32>
    %17 = arith.maximumf %15, %16 : vector<128x32xf32>
    %c0_13 = arith.constant 0 : index
    %c0_14 = arith.constant 0 : index
    %18 = vector.load %arg7[%c0_13, %c0_14] : memref<32x256xbf16, #tpu.memory_space<vmem>>, vector<32x256xbf16>
    %19 = arith.truncf %17 : vector<128x32xf32> to vector<128x32xbf16>
    %cst_15 = arith.constant dense<0.000000e+00> : vector<128x256xf32>
    %20 = tpu.matmul %19, %18, %cst_15 {dimension_numbers = #tpu.dot_dimension_numbers<[1], [0], [0], [1], [0, 0, 1, 1], [], []>} : vector<128x32xbf16>, vector<32x256xbf16>, vector<128x256xf32> -> vector<128x256xf32>
    %c0_16 = arith.constant 0 : index
    %c0_17 = arith.constant 0 : index
    %21 = vector.load %arg8[%c0_16, %c0_17] : memref<1x256xf32, #tpu.memory_space<vmem>>, vector<1x256xf32>
    %22 = vector.broadcast %21 : vector<1x256xf32> to vector<128x256xf32>
    %23 = arith.addf %20, %22 : vector<128x256xf32>
    %cst_18 = arith.constant 0.000000e+00 : f32
    %24 = vector.broadcast %cst_18 : f32 to vector<128x256xf32>
    %25 = arith.maximumf %23, %24 : vector<128x256xf32>
    %cst_19 = arith.constant dense<0xFF800000> : vector<256xf32>
    %26 = vector.multi_reduction <maximumf>, %25, %cst_19 [0] : vector<128x256xf32> to vector<256xf32>
    %27 = vector.shape_cast %26 : vector<256xf32> to vector<1x256xf32>
    %c0_i32 = arith.constant 0 : i32
    %28 = arith.cmpi eq, %arg1, %c0_i32 : i32
    %29 = arith.extui %28 : i1 to i32
    %c0_i32_20 = arith.constant 0 : i32
    %30 = arith.cmpi ne, %29, %c0_i32_20 : i32
    scf.if %30 {
      %c0_25 = arith.constant 0 : index
      %c0_26 = arith.constant 0 : index
      %37 = vector.load %arg16[%c0_25, %c0_26] : memref<1x256xf32, #tpu.memory_space<vmem>>, vector<1x256xf32>
      tpu.vector_store %arg16[%c0_25, %c0_26], %27 {strides = array<i32>} : memref<1x256xf32, #tpu.memory_space<vmem>>, vector<1x256xf32>,
    } else {
    }
    %c0_i32_21 = arith.constant 0 : i32
    %31 = arith.cmpi sgt, %arg1, %c0_i32_21 : i32
    %32 = arith.extui %31 : i1 to i32
    %c0_i32_22 = arith.constant 0 : i32
    %33 = arith.cmpi ne, %32, %c0_i32_22 : i32
    scf.if %33 {
      %c0_25 = arith.constant 0 : index
      %c0_26 = arith.constant 0 : index
      %37 = vector.load %arg16[%c0_25, %c0_26] : memref<1x256xf32, #tpu.memory_space<vmem>>, vector<1x256xf32>
      %38 = arith.maximumf %37, %27 : vector<1x256xf32>
      %c0_27 = arith.constant 0 : index
      %c0_28 = arith.constant 0 : index
      %39 = vector.load %arg16[%c0_27, %c0_28] : memref<1x256xf32, #tpu.memory_space<vmem>>, vector<1x256xf32>
      tpu.vector_store %arg16[%c0_27, %c0_28], %38 {strides = array<i32>} : memref<1x256xf32, #tpu.memory_space<vmem>>, vector<1x256xf32>,
    } else {
    }
    %c0_i32_23 = arith.constant 0 : i32
    %34 = arith.cmpi eq, %arg1, %c0_i32_23 : i32
    %35 = arith.extui %34 : i1 to i32
    %c0_i32_24 = arith.constant 0 : i32
    %36 = arith.cmpi ne, %35, %c0_i32_24 : i32
    scf.if %36 {
      %c0_25 = arith.constant 0 : index
      %c0_26 = arith.constant 0 : index
      %37 = vector.load %arg16[%c0_25, %c0_26] : memref<1x256xf32, #tpu.memory_space<vmem>>, vector<1x256xf32>
      %c0_27 = arith.constant 0 : index
      %c0_28 = arith.constant 0 : index
      %38 = vector.load %arg9[%c0_27, %c0_28] : memref<256x128xbf16, #tpu.memory_space<vmem>>, vector<256x128xbf16>
      %39 = arith.truncf %37 : vector<1x256xf32> to vector<1x256xbf16>
      %cst_29 = arith.constant dense<0.000000e+00> : vector<1x128xf32>
      %40 = tpu.matmul %39, %38, %cst_29 {dimension_numbers = #tpu.dot_dimension_numbers<[1], [0], [0], [1], [0, 0, 1, 1], [], []>} : vector<1x256xbf16>, vector<256x128xbf16>, vector<1x128xf32> -> vector<1x128xf32>
      %c0_30 = arith.constant 0 : index
      %c0_31 = arith.constant 0 : index
      %41 = vector.load %arg10[%c0_30, %c0_31] : memref<1x128xf32, #tpu.memory_space<vmem>>, vector<1x128xf32>
      %42 = arith.addf %40, %41 : vector<1x128xf32>
      %cst_32 = arith.constant 0.000000e+00 : f32
      %43 = vector.broadcast %cst_32 : f32 to vector<1x128xf32>
      %44 = arith.maximumf %42, %43 : vector<1x128xf32>
      %c0_33 = arith.constant 0 : index
      %c0_34 = arith.constant 0 : index
      %45 = vector.load %arg11[%c0_33, %c0_34] : memref<128x64xbf16, #tpu.memory_space<vmem>>, vector<128x64xbf16>
      %46 = arith.truncf %44 : vector<1x128xf32> to vector<1x128xbf16>
      %cst_35 = arith.constant dense<0.000000e+00> : vector<1x64xf32>
      %47 = tpu.matmul %46, %45, %cst_35 {dimension_numbers = #tpu.dot_dimension_numbers<[1], [0], [0], [1], [0, 0, 1, 1], [], []>} : vector<1x128xbf16>, vector<128x64xbf16>, vector<1x64xf32> -> vector<1x64xf32>
      %c0_36 = arith.constant 0 : index
      %c0_37 = arith.constant 0 : index
      %48 = vector.load %arg12[%c0_36, %c0_37] : memref<1x64xf32, #tpu.memory_space<vmem>>, vector<1x64xf32>
      %49 = arith.addf %47, %48 : vector<1x64xf32>
      %cst_38 = arith.constant 0.000000e+00 : f32
      %50 = vector.broadcast %cst_38 : f32 to vector<1x64xf32>
      %51 = arith.maximumf %49, %50 : vector<1x64xf32>
      %c0_39 = arith.constant 0 : index
      %c0_40 = arith.constant 0 : index
      %52 = vector.load %arg13[%c0_39, %c0_40] : memref<64x9xbf16, #tpu.memory_space<vmem>>, vector<64x9xbf16>
      %53 = arith.truncf %51 : vector<1x64xf32> to vector<1x64xbf16>
      %cst_41 = arith.constant dense<0.000000e+00> : vector<1x9xf32>
      %54 = tpu.matmul %53, %52, %cst_41 {dimension_numbers = #tpu.dot_dimension_numbers<[1], [0], [0], [1], [0, 0, 1, 1], [], []>} : vector<1x64xbf16>, vector<64x9xbf16>, vector<1x9xf32> -> vector<1x9xf32>
      %c0_42 = arith.constant 0 : index
      %c0_43 = arith.constant 0 : index
      %55 = vector.load %arg14[%c0_42, %c0_43] : memref<1x9xf32, #tpu.memory_space<vmem>>, vector<1x9xf32>
      %56 = arith.addf %54, %55 : vector<1x9xf32>
      %c0_44 = arith.constant 0 : index
      %c0_45 = arith.constant 0 : index
      %c0_46 = arith.constant 0 : index
      %57 = vector.load %arg15[%c0_44, %c0_45, %c0_46] : memref<1x1x9xf32, #tpu.memory_space<vmem>>, vector<1x1x9xf32>
      %58 = vector.shape_cast %57 : vector<1x1x9xf32> to vector<1x9xf32>
      %59 = vector.shape_cast %56 : vector<1x9xf32> to vector<1x1x9xf32>
      tpu.vector_store %arg15[%c0_44, %c0_45, %c0_46], %59 {strides = array<i32>} : memref<1x1x9xf32, #tpu.memory_space<vmem>>, vector<1x1x9xf32>,
    } else {
    }
    return
  }
  func.func @transform_0(%arg0: i32, %arg1: i32) -> (i32, i32, i32) {
    %c0_i32 = arith.constant 0 : i32
    %c0_i32_0 = arith.constant 0 : i32
    return %arg0, %arg1, %c0_i32 : i32, i32, i32
  }
  func.func @transform_1(%arg0: i32, %arg1: i32) -> (i32, i32) {
    %c0_i32 = arith.constant 0 : i32
    %c0_i32_0 = arith.constant 0 : i32
    %c0_i32_1 = arith.constant 0 : i32
    return %c0_i32, %c0_i32_0 : i32, i32
  }
  func.func @transform_2(%arg0: i32, %arg1: i32) -> (i32, i32) {
    %c0_i32 = arith.constant 0 : i32
    %c0_i32_0 = arith.constant 0 : i32
    %c0_i32_1 = arith.constant 0 : i32
    return %c0_i32, %c0_i32_0 : i32, i32
  }
  func.func @transform_3(%arg0: i32, %arg1: i32) -> (i32, i32) {
    %c0_i32 = arith.constant 0 : i32
    %c0_i32_0 = arith.constant 0 : i32
    %c0_i32_1 = arith.constant 0 : i32
    return %c0_i32, %c0_i32_0 : i32, i32
  }
  func.func @transform_4(%arg0: i32, %arg1: i32) -> (i32, i32) {
    %c0_i32 = arith.constant 0 : i32
    %c0_i32_0 = arith.constant 0 : i32
    %c0_i32_1 = arith.constant 0 : i32
    return %c0_i32, %c0_i32_0 : i32, i32
  }
  func.func @transform_5(%arg0: i32, %arg1: i32) -> (i32, i32) {
    %c0_i32 = arith.constant 0 : i32
    %c0_i32_0 = arith.constant 0 : i32
    %c0_i32_1 = arith.constant 0 : i32
    return %c0_i32, %c0_i32_0 : i32, i32
  }
  func.func @transform_6(%arg0: i32, %arg1: i32) -> (i32, i32) {
    %c0_i32 = arith.constant 0 : i32
    %c0_i32_0 = arith.constant 0 : i32
    %c0_i32_1 = arith.constant 0 : i32
    return %c0_i32, %c0_i32_0 : i32, i32
  }
  func.func @transform_7(%arg0: i32, %arg1: i32) -> (i32, i32) {
    %c0_i32 = arith.constant 0 : i32
    %c0_i32_0 = arith.constant 0 : i32
    %c0_i32_1 = arith.constant 0 : i32
    return %c0_i32, %c0_i32_0 : i32, i32
  }
  func.func @transform_8(%arg0: i32, %arg1: i32) -> (i32, i32) {
    %c0_i32 = arith.constant 0 : i32
    %c0_i32_0 = arith.constant 0 : i32
    %c0_i32_1 = arith.constant 0 : i32
    return %c0_i32, %c0_i32_0 : i32, i32
  }
  func.func @transform_9(%arg0: i32, %arg1: i32) -> (i32, i32) {
    %c0_i32 = arith.constant 0 : i32
    %c0_i32_0 = arith.constant 0 : i32
    %c0_i32_1 = arith.constant 0 : i32
    return %c0_i32, %c0_i32_0 : i32, i32
  }
  func.func @transform_10(%arg0: i32, %arg1: i32) -> (i32, i32) {
    %c0_i32 = arith.constant 0 : i32
    %c0_i32_0 = arith.constant 0 : i32
    %c0_i32_1 = arith.constant 0 : i32
    return %c0_i32, %c0_i32_0 : i32, i32
  }
  func.func @transform_11(%arg0: i32, %arg1: i32) -> (i32, i32) {
    %c0_i32 = arith.constant 0 : i32
    %c0_i32_0 = arith.constant 0 : i32
    %c0_i32_1 = arith.constant 0 : i32
    return %c0_i32, %c0_i32_0 : i32, i32
  }
  func.func @transform_12(%arg0: i32, %arg1: i32) -> (i32, i32) {
    %c0_i32 = arith.constant 0 : i32
    %c0_i32_0 = arith.constant 0 : i32
    %c0_i32_1 = arith.constant 0 : i32
    return %c0_i32, %c0_i32_0 : i32, i32
  }
  func.func @transform_13(%arg0: i32, %arg1: i32) -> (i32, i32, i32) {
    %c0_i32 = arith.constant 0 : i32
    %c0_i32_0 = arith.constant 0 : i32
    %c0_i32_1 = arith.constant 0 : i32
    return %arg0, %c0_i32, %c0_i32_0 : i32, i32, i32
  }
}

module attributes {stable_mosaic.version = 11 : i64} {
  func.func @_stn_kernel(%arg0: i32, %arg1: i32, %arg2: memref<1x128x16xbf16, #tpu.memory_space<vmem>>, %arg3: memref<16x16xbf16, #tpu.memory_space<vmem>>, %arg4: memref<1x16xf32, #tpu.memory_space<vmem>>, %arg5: memref<16x32xbf16, #tpu.memory_space<vmem>>, %arg6: memref<1x32xf32, #tpu.memory_space<vmem>>, %arg7: memref<32x256xbf16, #tpu.memory_space<vmem>>, %arg8: memref<1x256xf32, #tpu.memory_space<vmem>>, %arg9: memref<256x128xbf16, #tpu.memory_space<vmem>>, %arg10: memref<1x128xf32, #tpu.memory_space<vmem>>, %arg11: memref<128x64xbf16, #tpu.memory_space<vmem>>, %arg12: memref<1x64xf32, #tpu.memory_space<vmem>>, %arg13: memref<64x256xbf16, #tpu.memory_space<vmem>>, %arg14: memref<1x256xf32, #tpu.memory_space<vmem>>, %arg15: memref<1x1x256xf32, #tpu.memory_space<vmem>>, %arg16: memref<1x256xf32, #tpu.memory_space<vmem>>) attributes {dimension_semantics = [#tpu.dimension_semantics<parallel>, #tpu.dimension_semantics<arbitrary>], iteration_bounds = array<i64: 2, 1>, scalar_prefetch = 0 : i64, scratch_operands = 1 : i64, tpu.core_type = #tpu.core_type<tc>, window_params = [{transform_indices = @transform_0, window_bounds = array<i64: 1, 128, 16>}, {pipeline_mode = #tpu.pipeline_mode<synchronous>, transform_indices = @transform_1, window_bounds = array<i64: 16, 16>}, {pipeline_mode = #tpu.pipeline_mode<synchronous>, transform_indices = @transform_2, window_bounds = array<i64: 1, 16>}, {pipeline_mode = #tpu.pipeline_mode<synchronous>, transform_indices = @transform_3, window_bounds = array<i64: 16, 32>}, {pipeline_mode = #tpu.pipeline_mode<synchronous>, transform_indices = @transform_4, window_bounds = array<i64: 1, 32>}, {pipeline_mode = #tpu.pipeline_mode<synchronous>, transform_indices = @transform_5, window_bounds = array<i64: 32, 256>}, {pipeline_mode = #tpu.pipeline_mode<synchronous>, transform_indices = @transform_6, window_bounds = array<i64: 1, 256>}, {pipeline_mode = #tpu.pipeline_mode<synchronous>, transform_indices = @transform_7, window_bounds = array<i64: 256, 128>}, {pipeline_mode = #tpu.pipeline_mode<synchronous>, transform_indices = @transform_8, window_bounds = array<i64: 1, 128>}, {pipeline_mode = #tpu.pipeline_mode<synchronous>, transform_indices = @transform_9, window_bounds = array<i64: 128, 64>}, {pipeline_mode = #tpu.pipeline_mode<synchronous>, transform_indices = @transform_10, window_bounds = array<i64: 1, 64>}, {pipeline_mode = #tpu.pipeline_mode<synchronous>, transform_indices = @transform_11, window_bounds = array<i64: 64, 256>}, {pipeline_mode = #tpu.pipeline_mode<synchronous>, transform_indices = @transform_12, window_bounds = array<i64: 1, 256>}, {transform_indices = @transform_13, window_bounds = array<i64: 1, 1, 256>}]} {
    %c0 = arith.constant 0 : index
    %c0_0 = arith.constant 0 : index
    %c0_1 = arith.constant 0 : index
    %0 = vector.load %arg2[%c0, %c0_0, %c0_1] : memref<1x128x16xbf16, #tpu.memory_space<vmem>>, vector<1x128x16xbf16>
    %1 = vector.shape_cast %0 : vector<1x128x16xbf16> to vector<128x16xbf16>
    %c0_2 = arith.constant 0 : index
    %c0_3 = arith.constant 0 : index
    %2 = vector.load %arg3[%c0_2, %c0_3] : memref<16x16xbf16, #tpu.memory_space<vmem>>, vector<16x16xbf16>
    %cst = arith.constant dense<0.000000e+00> : vector<128x16xf32>
    %3 = tpu.matmul %1, %2, %cst {dimension_numbers = #tpu.dot_dimension_numbers<[1], [0], [0], [1], [0, 0, 1, 1], [], []>} : vector<128x16xbf16>, vector<16x16xbf16>, vector<128x16xf32> -> vector<128x16xf32>
    %c0_4 = arith.constant 0 : index
    %c0_5 = arith.constant 0 : index
    %4 = vector.load %arg4[%c0_4, %c0_5] : memref<1x16xf32, #tpu.memory_space<vmem>>, vector<1x16xf32>
    %5 = vector.broadcast %4 : vector<1x16xf32> to vector<128x16xf32>
    %6 = arith.addf %3, %5 : vector<128x16xf32>
    %cst_6 = arith.constant 0.000000e+00 : f32
    %7 = vector.broadcast %cst_6 : f32 to vector<128x16xf32>
    %8 = arith.maximumf %6, %7 : vector<128x16xf32>
    %c0_7 = arith.constant 0 : index
    %c0_8 = arith.constant 0 : index
    %9 = vector.load %arg5[%c0_7, %c0_8] : memref<16x32xbf16, #tpu.memory_space<vmem>>, vector<16x32xbf16>
    %10 = arith.truncf %8 : vector<128x16xf32> to vector<128x16xbf16>
    %cst_9 = arith.constant dense<0.000000e+00> : vector<128x32xf32>
    %11 = tpu.matmul %10, %9, %cst_9 {dimension_numbers = #tpu.dot_dimension_numbers<[1], [0], [0], [1], [0, 0, 1, 1], [], []>} : vector<128x16xbf16>, vector<16x32xbf16>, vector<128x32xf32> -> vector<128x32xf32>
    %c0_10 = arith.constant 0 : index
    %c0_11 = arith.constant 0 : index
    %12 = vector.load %arg6[%c0_10, %c0_11] : memref<1x32xf32, #tpu.memory_space<vmem>>, vector<1x32xf32>
    %13 = vector.broadcast %12 : vector<1x32xf32> to vector<128x32xf32>
    %14 = arith.addf %11, %13 : vector<128x32xf32>
    %cst_12 = arith.constant 0.000000e+00 : f32
    %15 = vector.broadcast %cst_12 : f32 to vector<128x32xf32>
    %16 = arith.maximumf %14, %15 : vector<128x32xf32>
    %c0_13 = arith.constant 0 : index
    %c0_14 = arith.constant 0 : index
    %17 = vector.load %arg7[%c0_13, %c0_14] : memref<32x256xbf16, #tpu.memory_space<vmem>>, vector<32x256xbf16>
    %18 = arith.truncf %16 : vector<128x32xf32> to vector<128x32xbf16>
    %cst_15 = arith.constant dense<0.000000e+00> : vector<128x256xf32>
    %19 = tpu.matmul %18, %17, %cst_15 {dimension_numbers = #tpu.dot_dimension_numbers<[1], [0], [0], [1], [0, 0, 1, 1], [], []>} : vector<128x32xbf16>, vector<32x256xbf16>, vector<128x256xf32> -> vector<128x256xf32>
    %c0_16 = arith.constant 0 : index
    %c0_17 = arith.constant 0 : index
    %20 = vector.load %arg8[%c0_16, %c0_17] : memref<1x256xf32, #tpu.memory_space<vmem>>, vector<1x256xf32>
    %21 = vector.broadcast %20 : vector<1x256xf32> to vector<128x256xf32>
    %22 = arith.addf %19, %21 : vector<128x256xf32>
    %cst_18 = arith.constant 0.000000e+00 : f32
    %23 = vector.broadcast %cst_18 : f32 to vector<128x256xf32>
    %24 = arith.maximumf %22, %23 : vector<128x256xf32>
    %cst_19 = arith.constant dense<0xFF800000> : vector<256xf32>
    %25 = vector.multi_reduction <maximumf>, %24, %cst_19 [0] : vector<128x256xf32> to vector<256xf32>
    %26 = vector.shape_cast %25 : vector<256xf32> to vector<1x256xf32>
    %c0_i32 = arith.constant 0 : i32
    %27 = arith.cmpi eq, %arg1, %c0_i32 : i32
    %28 = arith.extui %27 : i1 to i32
    %c0_i32_20 = arith.constant 0 : i32
    %29 = arith.cmpi ne, %28, %c0_i32_20 : i32
    scf.if %29 {
      %c0_25 = arith.constant 0 : index
      %c0_26 = arith.constant 0 : index
      %36 = vector.load %arg16[%c0_25, %c0_26] : memref<1x256xf32, #tpu.memory_space<vmem>>, vector<1x256xf32>
      tpu.vector_store %arg16[%c0_25, %c0_26], %26 {strides = array<i32>} : memref<1x256xf32, #tpu.memory_space<vmem>>, vector<1x256xf32>,
    } else {
    }
    %c0_i32_21 = arith.constant 0 : i32
    %30 = arith.cmpi sgt, %arg1, %c0_i32_21 : i32
    %31 = arith.extui %30 : i1 to i32
    %c0_i32_22 = arith.constant 0 : i32
    %32 = arith.cmpi ne, %31, %c0_i32_22 : i32
    scf.if %32 {
      %c0_25 = arith.constant 0 : index
      %c0_26 = arith.constant 0 : index
      %36 = vector.load %arg16[%c0_25, %c0_26] : memref<1x256xf32, #tpu.memory_space<vmem>>, vector<1x256xf32>
      %37 = arith.maximumf %36, %26 : vector<1x256xf32>
      %c0_27 = arith.constant 0 : index
      %c0_28 = arith.constant 0 : index
      %38 = vector.load %arg16[%c0_27, %c0_28] : memref<1x256xf32, #tpu.memory_space<vmem>>, vector<1x256xf32>
      tpu.vector_store %arg16[%c0_27, %c0_28], %37 {strides = array<i32>} : memref<1x256xf32, #tpu.memory_space<vmem>>, vector<1x256xf32>,
    } else {
    }
    %c0_i32_23 = arith.constant 0 : i32
    %33 = arith.cmpi eq, %arg1, %c0_i32_23 : i32
    %34 = arith.extui %33 : i1 to i32
    %c0_i32_24 = arith.constant 0 : i32
    %35 = arith.cmpi ne, %34, %c0_i32_24 : i32
    scf.if %35 {
      %c0_25 = arith.constant 0 : index
      %c0_26 = arith.constant 0 : index
      %36 = vector.load %arg16[%c0_25, %c0_26] : memref<1x256xf32, #tpu.memory_space<vmem>>, vector<1x256xf32>
      %c0_27 = arith.constant 0 : index
      %c0_28 = arith.constant 0 : index
      %37 = vector.load %arg9[%c0_27, %c0_28] : memref<256x128xbf16, #tpu.memory_space<vmem>>, vector<256x128xbf16>
      %38 = arith.truncf %36 : vector<1x256xf32> to vector<1x256xbf16>
      %cst_29 = arith.constant dense<0.000000e+00> : vector<1x128xf32>
      %39 = tpu.matmul %38, %37, %cst_29 {dimension_numbers = #tpu.dot_dimension_numbers<[1], [0], [0], [1], [0, 0, 1, 1], [], []>} : vector<1x256xbf16>, vector<256x128xbf16>, vector<1x128xf32> -> vector<1x128xf32>
      %c0_30 = arith.constant 0 : index
      %c0_31 = arith.constant 0 : index
      %40 = vector.load %arg10[%c0_30, %c0_31] : memref<1x128xf32, #tpu.memory_space<vmem>>, vector<1x128xf32>
      %41 = arith.addf %39, %40 : vector<1x128xf32>
      %cst_32 = arith.constant 0.000000e+00 : f32
      %42 = vector.broadcast %cst_32 : f32 to vector<1x128xf32>
      %43 = arith.maximumf %41, %42 : vector<1x128xf32>
      %c0_33 = arith.constant 0 : index
      %c0_34 = arith.constant 0 : index
      %44 = vector.load %arg11[%c0_33, %c0_34] : memref<128x64xbf16, #tpu.memory_space<vmem>>, vector<128x64xbf16>
      %45 = arith.truncf %43 : vector<1x128xf32> to vector<1x128xbf16>
      %cst_35 = arith.constant dense<0.000000e+00> : vector<1x64xf32>
      %46 = tpu.matmul %45, %44, %cst_35 {dimension_numbers = #tpu.dot_dimension_numbers<[1], [0], [0], [1], [0, 0, 1, 1], [], []>} : vector<1x128xbf16>, vector<128x64xbf16>, vector<1x64xf32> -> vector<1x64xf32>
      %c0_36 = arith.constant 0 : index
      %c0_37 = arith.constant 0 : index
      %47 = vector.load %arg12[%c0_36, %c0_37] : memref<1x64xf32, #tpu.memory_space<vmem>>, vector<1x64xf32>
      %48 = arith.addf %46, %47 : vector<1x64xf32>
      %cst_38 = arith.constant 0.000000e+00 : f32
      %49 = vector.broadcast %cst_38 : f32 to vector<1x64xf32>
      %50 = arith.maximumf %48, %49 : vector<1x64xf32>
      %c0_39 = arith.constant 0 : index
      %c0_40 = arith.constant 0 : index
      %51 = vector.load %arg13[%c0_39, %c0_40] : memref<64x256xbf16, #tpu.memory_space<vmem>>, vector<64x256xbf16>
      %52 = arith.truncf %50 : vector<1x64xf32> to vector<1x64xbf16>
      %cst_41 = arith.constant dense<0.000000e+00> : vector<1x256xf32>
      %53 = tpu.matmul %52, %51, %cst_41 {dimension_numbers = #tpu.dot_dimension_numbers<[1], [0], [0], [1], [0, 0, 1, 1], [], []>} : vector<1x64xbf16>, vector<64x256xbf16>, vector<1x256xf32> -> vector<1x256xf32>
      %c0_42 = arith.constant 0 : index
      %c0_43 = arith.constant 0 : index
      %54 = vector.load %arg14[%c0_42, %c0_43] : memref<1x256xf32, #tpu.memory_space<vmem>>, vector<1x256xf32>
      %55 = arith.addf %53, %54 : vector<1x256xf32>
      %c0_44 = arith.constant 0 : index
      %c0_45 = arith.constant 0 : index
      %c0_46 = arith.constant 0 : index
      %56 = vector.load %arg15[%c0_44, %c0_45, %c0_46] : memref<1x1x256xf32, #tpu.memory_space<vmem>>, vector<1x1x256xf32>
      %57 = vector.shape_cast %56 : vector<1x1x256xf32> to vector<1x256xf32>
      %58 = vector.shape_cast %55 : vector<1x256xf32> to vector<1x1x256xf32>
      tpu.vector_store %arg15[%c0_44, %c0_45, %c0_46], %58 {strides = array<i32>} : memref<1x1x256xf32, #tpu.memory_space<vmem>>, vector<1x1x256xf32>,
    } else {
    }
    return
  }
  func.func @transform_0(%arg0: i32, %arg1: i32) -> (i32, i32, i32) {
    %c0_i32 = arith.constant 0 : i32
    %c0_i32_0 = arith.constant 0 : i32
    return %arg0, %arg1, %c0_i32 : i32, i32, i32
  }
  func.func @transform_1(%arg0: i32, %arg1: i32) -> (i32, i32) {
    %c0_i32 = arith.constant 0 : i32
    %c0_i32_0 = arith.constant 0 : i32
    %c0_i32_1 = arith.constant 0 : i32
    return %c0_i32, %c0_i32_0 : i32, i32
  }
  func.func @transform_2(%arg0: i32, %arg1: i32) -> (i32, i32) {
    %c0_i32 = arith.constant 0 : i32
    %c0_i32_0 = arith.constant 0 : i32
    %c0_i32_1 = arith.constant 0 : i32
    return %c0_i32, %c0_i32_0 : i32, i32
  }
  func.func @transform_3(%arg0: i32, %arg1: i32) -> (i32, i32) {
    %c0_i32 = arith.constant 0 : i32
    %c0_i32_0 = arith.constant 0 : i32
    %c0_i32_1 = arith.constant 0 : i32
    return %c0_i32, %c0_i32_0 : i32, i32
  }
  func.func @transform_4(%arg0: i32, %arg1: i32) -> (i32, i32) {
    %c0_i32 = arith.constant 0 : i32
    %c0_i32_0 = arith.constant 0 : i32
    %c0_i32_1 = arith.constant 0 : i32
    return %c0_i32, %c0_i32_0 : i32, i32
  }
  func.func @transform_5(%arg0: i32, %arg1: i32) -> (i32, i32) {
    %c0_i32 = arith.constant 0 : i32
    %c0_i32_0 = arith.constant 0 : i32
    %c0_i32_1 = arith.constant 0 : i32
    return %c0_i32, %c0_i32_0 : i32, i32
  }
  func.func @transform_6(%arg0: i32, %arg1: i32) -> (i32, i32) {
    %c0_i32 = arith.constant 0 : i32
    %c0_i32_0 = arith.constant 0 : i32
    %c0_i32_1 = arith.constant 0 : i32
    return %c0_i32, %c0_i32_0 : i32, i32
  }
  func.func @transform_7(%arg0: i32, %arg1: i32) -> (i32, i32) {
    %c0_i32 = arith.constant 0 : i32
    %c0_i32_0 = arith.constant 0 : i32
    %c0_i32_1 = arith.constant 0 : i32
    return %c0_i32, %c0_i32_0 : i32, i32
  }
  func.func @transform_8(%arg0: i32, %arg1: i32) -> (i32, i32) {
    %c0_i32 = arith.constant 0 : i32
    %c0_i32_0 = arith.constant 0 : i32
    %c0_i32_1 = arith.constant 0 : i32
    return %c0_i32, %c0_i32_0 : i32, i32
  }
  func.func @transform_9(%arg0: i32, %arg1: i32) -> (i32, i32) {
    %c0_i32 = arith.constant 0 : i32
    %c0_i32_0 = arith.constant 0 : i32
    %c0_i32_1 = arith.constant 0 : i32
    return %c0_i32, %c0_i32_0 : i32, i32
  }
  func.func @transform_10(%arg0: i32, %arg1: i32) -> (i32, i32) {
    %c0_i32 = arith.constant 0 : i32
    %c0_i32_0 = arith.constant 0 : i32
    %c0_i32_1 = arith.constant 0 : i32
    return %c0_i32, %c0_i32_0 : i32, i32
  }
  func.func @transform_11(%arg0: i32, %arg1: i32) -> (i32, i32) {
    %c0_i32 = arith.constant 0 : i32
    %c0_i32_0 = arith.constant 0 : i32
    %c0_i32_1 = arith.constant 0 : i32
    return %c0_i32, %c0_i32_0 : i32, i32
  }
  func.func @transform_12(%arg0: i32, %arg1: i32) -> (i32, i32) {
    %c0_i32 = arith.constant 0 : i32
    %c0_i32_0 = arith.constant 0 : i32
    %c0_i32_1 = arith.constant 0 : i32
    return %c0_i32, %c0_i32_0 : i32, i32
  }
  func.func @transform_13(%arg0: i32, %arg1: i32) -> (i32, i32, i32) {
    %c0_i32 = arith.constant 0 : i32
    %c0_i32_0 = arith.constant 0 : i32
    %c0_i32_1 = arith.constant 0 : i32
    return %arg0, %c0_i32, %c0_i32_0 : i32, i32, i32
  }
}

module attributes {stable_mosaic.version = 11 : i64} {
  func.func @_enc1_kernel(%arg0: i32, %arg1: i32, %arg2: memref<1x128x9xf32, #tpu.memory_space<vmem>>, %arg3: memref<1x9x16xbf16, #tpu.memory_space<vmem>>, %arg4: memref<1x16xf32, #tpu.memory_space<vmem>>, %arg5: memref<1x128x16xbf16, #tpu.memory_space<vmem>>) attributes {dimension_semantics = [#tpu.dimension_semantics<parallel>, #tpu.dimension_semantics<parallel>], iteration_bounds = array<i64: 2, 1>, scalar_prefetch = 0 : i64, scratch_operands = 0 : i64, tpu.core_type = #tpu.core_type<tc>, window_params = [{transform_indices = @transform_0, window_bounds = array<i64: 1, 128, 9>}, {transform_indices = @transform_1, window_bounds = array<i64: 1, 9, 16>}, {pipeline_mode = #tpu.pipeline_mode<synchronous>, transform_indices = @transform_2, window_bounds = array<i64: 1, 16>}, {transform_indices = @transform_3, window_bounds = array<i64: 1, 128, 16>}]} {
    %c0 = arith.constant 0 : index
    %c0_0 = arith.constant 0 : index
    %c0_1 = arith.constant 0 : index
    %0 = vector.load %arg2[%c0, %c0_0, %c0_1] : memref<1x128x9xf32, #tpu.memory_space<vmem>>, vector<1x128x9xf32>
    %1 = vector.shape_cast %0 : vector<1x128x9xf32> to vector<128x9xf32>
    %2 = arith.truncf %1 : vector<128x9xf32> to vector<128x9xbf16>
    %c0_2 = arith.constant 0 : index
    %c0_3 = arith.constant 0 : index
    %c0_4 = arith.constant 0 : index
    %3 = vector.load %arg3[%c0_2, %c0_3, %c0_4] : memref<1x9x16xbf16, #tpu.memory_space<vmem>>, vector<1x9x16xbf16>
    %4 = vector.shape_cast %3 : vector<1x9x16xbf16> to vector<9x16xbf16>
    %cst = arith.constant dense<0.000000e+00> : vector<128x16xf32>
    %5 = tpu.matmul %2, %4, %cst {dimension_numbers = #tpu.dot_dimension_numbers<[1], [0], [0], [1], [0, 0, 1, 1], [], []>} : vector<128x9xbf16>, vector<9x16xbf16>, vector<128x16xf32> -> vector<128x16xf32>
    %c0_5 = arith.constant 0 : index
    %c0_6 = arith.constant 0 : index
    %6 = vector.load %arg4[%c0_5, %c0_6] : memref<1x16xf32, #tpu.memory_space<vmem>>, vector<1x16xf32>
    %7 = vector.broadcast %6 : vector<1x16xf32> to vector<128x16xf32>
    %8 = arith.addf %5, %7 : vector<128x16xf32>
    %cst_7 = arith.constant 0.000000e+00 : f32
    %9 = vector.broadcast %cst_7 : f32 to vector<128x16xf32>
    %10 = arith.maximumf %8, %9 : vector<128x16xf32>
    %11 = arith.truncf %10 : vector<128x16xf32> to vector<128x16xbf16>
    %c0_8 = arith.constant 0 : index
    %c0_9 = arith.constant 0 : index
    %c0_10 = arith.constant 0 : index
    %12 = vector.load %arg5[%c0_8, %c0_9, %c0_10] : memref<1x128x16xbf16, #tpu.memory_space<vmem>>, vector<1x128x16xbf16>
    %13 = vector.shape_cast %12 : vector<1x128x16xbf16> to vector<128x16xbf16>
    %14 = vector.shape_cast %11 : vector<128x16xbf16> to vector<1x128x16xbf16>
    tpu.vector_store %arg5[%c0_8, %c0_9, %c0_10], %14 {strides = array<i32>} : memref<1x128x16xbf16, #tpu.memory_space<vmem>>, vector<1x128x16xbf16>,
    return
  }
  func.func @transform_0(%arg0: i32, %arg1: i32) -> (i32, i32, i32) {
    %c0_i32 = arith.constant 0 : i32
    %c0_i32_0 = arith.constant 0 : i32
    return %arg0, %arg1, %c0_i32 : i32, i32, i32
  }
  func.func @transform_1(%arg0: i32, %arg1: i32) -> (i32, i32, i32) {
    %c0_i32 = arith.constant 0 : i32
    %c0_i32_0 = arith.constant 0 : i32
    %c0_i32_1 = arith.constant 0 : i32
    return %arg0, %c0_i32, %c0_i32_0 : i32, i32, i32
  }
  func.func @transform_2(%arg0: i32, %arg1: i32) -> (i32, i32) {
    %c0_i32 = arith.constant 0 : i32
    %c0_i32_0 = arith.constant 0 : i32
    %c0_i32_1 = arith.constant 0 : i32
    return %c0_i32, %c0_i32_0 : i32, i32
  }
  func.func @transform_3(%arg0: i32, %arg1: i32) -> (i32, i32, i32) {
    %c0_i32 = arith.constant 0 : i32
    %c0_i32_0 = arith.constant 0 : i32
    return %arg0, %arg1, %c0_i32 : i32, i32, i32
  }
}

module attributes {stable_mosaic.version = 11 : i64} {
  func.func @_enc_tail_kernel(%arg0: i32, %arg1: i32, %arg2: memref<1x128x16xbf16, #tpu.memory_space<vmem>>, %arg3: memref<1x16x16xf32, #tpu.memory_space<vmem>>, %arg4: memref<16x32xbf16, #tpu.memory_space<vmem>>, %arg5: memref<1x32xf32, #tpu.memory_space<vmem>>, %arg6: memref<32x256xbf16, #tpu.memory_space<vmem>>, %arg7: memref<1x256xf32, #tpu.memory_space<vmem>>, %arg8: memref<1x128x16xbf16, #tpu.memory_space<vmem>>, %arg9: memref<1x1x256xf32, #tpu.memory_space<vmem>>) attributes {dimension_semantics = [#tpu.dimension_semantics<parallel>, #tpu.dimension_semantics<arbitrary>], iteration_bounds = array<i64: 2, 1>, scalar_prefetch = 0 : i64, scratch_operands = 0 : i64, tpu.core_type = #tpu.core_type<tc>, window_params = [{transform_indices = @transform_0, window_bounds = array<i64: 1, 128, 16>}, {transform_indices = @transform_1, window_bounds = array<i64: 1, 16, 16>}, {pipeline_mode = #tpu.pipeline_mode<synchronous>, transform_indices = @transform_2, window_bounds = array<i64: 16, 32>}, {pipeline_mode = #tpu.pipeline_mode<synchronous>, transform_indices = @transform_3, window_bounds = array<i64: 1, 32>}, {pipeline_mode = #tpu.pipeline_mode<synchronous>, transform_indices = @transform_4, window_bounds = array<i64: 32, 256>}, {pipeline_mode = #tpu.pipeline_mode<synchronous>, transform_indices = @transform_5, window_bounds = array<i64: 1, 256>}, {transform_indices = @transform_6, window_bounds = array<i64: 1, 128, 16>}, {transform_indices = @transform_7, window_bounds = array<i64: 1, 1, 256>}]} {
    %c0 = arith.constant 0 : index
    %c0_0 = arith.constant 0 : index
    %c0_1 = arith.constant 0 : index
    %0 = vector.load %arg2[%c0, %c0_0, %c0_1] : memref<1x128x16xbf16, #tpu.memory_space<vmem>>, vector<1x128x16xbf16>
    %1 = vector.shape_cast %0 : vector<1x128x16xbf16> to vector<128x16xbf16>
    %c0_2 = arith.constant 0 : index
    %c0_3 = arith.constant 0 : index
    %c0_4 = arith.constant 0 : index
    %2 = vector.load %arg3[%c0_2, %c0_3, %c0_4] : memref<1x16x16xf32, #tpu.memory_space<vmem>>, vector<1x16x16xf32>
    %3 = vector.shape_cast %2 : vector<1x16x16xf32> to vector<16x16xf32>
    %4 = arith.truncf %3 : vector<16x16xf32> to vector<16x16xbf16>
    %cst = arith.constant dense<0.000000e+00> : vector<128x16xf32>
    %5 = tpu.matmul %1, %4, %cst {dimension_numbers = #tpu.dot_dimension_numbers<[1], [0], [0], [1], [0, 0, 1, 1], [], []>} : vector<128x16xbf16>, vector<16x16xbf16>, vector<128x16xf32> -> vector<128x16xf32>
    %6 = arith.truncf %5 : vector<128x16xf32> to vector<128x16xbf16>
    %c0_5 = arith.constant 0 : index
    %c0_6 = arith.constant 0 : index
    %c0_7 = arith.constant 0 : index
    %7 = vector.load %arg8[%c0_5, %c0_6, %c0_7] : memref<1x128x16xbf16, #tpu.memory_space<vmem>>, vector<1x128x16xbf16>
    %8 = vector.shape_cast %7 : vector<1x128x16xbf16> to vector<128x16xbf16>
    %9 = vector.shape_cast %6 : vector<128x16xbf16> to vector<1x128x16xbf16>
    tpu.vector_store %arg8[%c0_5, %c0_6, %c0_7], %9 {strides = array<i32>} : memref<1x128x16xbf16, #tpu.memory_space<vmem>>, vector<1x128x16xbf16>,
    %c0_8 = arith.constant 0 : index
    %c0_9 = arith.constant 0 : index
    %10 = vector.load %arg4[%c0_8, %c0_9] : memref<16x32xbf16, #tpu.memory_space<vmem>>, vector<16x32xbf16>
    %11 = arith.truncf %5 : vector<128x16xf32> to vector<128x16xbf16>
    %cst_10 = arith.constant dense<0.000000e+00> : vector<128x32xf32>
    %12 = tpu.matmul %11, %10, %cst_10 {dimension_numbers = #tpu.dot_dimension_numbers<[1], [0], [0], [1], [0, 0, 1, 1], [], []>} : vector<128x16xbf16>, vector<16x32xbf16>, vector<128x32xf32> -> vector<128x32xf32>
    %c0_11 = arith.constant 0 : index
    %c0_12 = arith.constant 0 : index
    %13 = vector.load %arg5[%c0_11, %c0_12] : memref<1x32xf32, #tpu.memory_space<vmem>>, vector<1x32xf32>
    %14 = vector.broadcast %13 : vector<1x32xf32> to vector<128x32xf32>
    %15 = arith.addf %12, %14 : vector<128x32xf32>
    %cst_13 = arith.constant 0.000000e+00 : f32
    %16 = vector.broadcast %cst_13 : f32 to vector<128x32xf32>
    %17 = arith.maximumf %15, %16 : vector<128x32xf32>
    %c0_14 = arith.constant 0 : index
    %c0_15 = arith.constant 0 : index
    %18 = vector.load %arg6[%c0_14, %c0_15] : memref<32x256xbf16, #tpu.memory_space<vmem>>, vector<32x256xbf16>
    %19 = arith.truncf %17 : vector<128x32xf32> to vector<128x32xbf16>
    %cst_16 = arith.constant dense<0.000000e+00> : vector<128x256xf32>
    %20 = tpu.matmul %19, %18, %cst_16 {dimension_numbers = #tpu.dot_dimension_numbers<[1], [0], [0], [1], [0, 0, 1, 1], [], []>} : vector<128x32xbf16>, vector<32x256xbf16>, vector<128x256xf32> -> vector<128x256xf32>
    %c0_17 = arith.constant 0 : index
    %c0_18 = arith.constant 0 : index
    %21 = vector.load %arg7[%c0_17, %c0_18] : memref<1x256xf32, #tpu.memory_space<vmem>>, vector<1x256xf32>
    %22 = vector.broadcast %21 : vector<1x256xf32> to vector<128x256xf32>
    %23 = arith.addf %20, %22 : vector<128x256xf32>
    %cst_19 = arith.constant dense<0xFF800000> : vector<256xf32>
    %24 = vector.multi_reduction <maximumf>, %23, %cst_19 [0] : vector<128x256xf32> to vector<256xf32>
    %25 = vector.shape_cast %24 : vector<256xf32> to vector<1x256xf32>
    %c0_i32 = arith.constant 0 : i32
    %26 = arith.cmpi eq, %arg1, %c0_i32 : i32
    %27 = arith.extui %26 : i1 to i32
    %c0_i32_20 = arith.constant 0 : i32
    %28 = arith.cmpi ne, %27, %c0_i32_20 : i32
    scf.if %28 {
      %c0_23 = arith.constant 0 : index
      %c0_24 = arith.constant 0 : index
      %c0_25 = arith.constant 0 : index
      %32 = vector.load %arg9[%c0_23, %c0_24, %c0_25] : memref<1x1x256xf32, #tpu.memory_space<vmem>>, vector<1x1x256xf32>
      %33 = vector.shape_cast %32 : vector<1x1x256xf32> to vector<1x256xf32>
      %34 = vector.shape_cast %25 : vector<1x256xf32> to vector<1x1x256xf32>
      tpu.vector_store %arg9[%c0_23, %c0_24, %c0_25], %34 {strides = array<i32>} : memref<1x1x256xf32, #tpu.memory_space<vmem>>, vector<1x1x256xf32>,
    } else {
    }
    %c0_i32_21 = arith.constant 0 : i32
    %29 = arith.cmpi sgt, %arg1, %c0_i32_21 : i32
    %30 = arith.extui %29 : i1 to i32
    %c0_i32_22 = arith.constant 0 : i32
    %31 = arith.cmpi ne, %30, %c0_i32_22 : i32
    scf.if %31 {
      %c0_23 = arith.constant 0 : index
      %c0_24 = arith.constant 0 : index
      %c0_25 = arith.constant 0 : index
      %32 = vector.load %arg9[%c0_23, %c0_24, %c0_25] : memref<1x1x256xf32, #tpu.memory_space<vmem>>, vector<1x1x256xf32>
      %33 = vector.shape_cast %32 : vector<1x1x256xf32> to vector<1x256xf32>
      %34 = arith.maximumf %33, %25 : vector<1x256xf32>
      %c0_26 = arith.constant 0 : index
      %c0_27 = arith.constant 0 : index
      %c0_28 = arith.constant 0 : index
      %35 = vector.load %arg9[%c0_26, %c0_27, %c0_28] : memref<1x1x256xf32, #tpu.memory_space<vmem>>, vector<1x1x256xf32>
      %36 = vector.shape_cast %35 : vector<1x1x256xf32> to vector<1x256xf32>
      %37 = vector.shape_cast %34 : vector<1x256xf32> to vector<1x1x256xf32>
      tpu.vector_store %arg9[%c0_26, %c0_27, %c0_28], %37 {strides = array<i32>} : memref<1x1x256xf32, #tpu.memory_space<vmem>>, vector<1x1x256xf32>,
    } else {
    }
    return
  }
  func.func @transform_0(%arg0: i32, %arg1: i32) -> (i32, i32, i32) {
    %c0_i32 = arith.constant 0 : i32
    %c0_i32_0 = arith.constant 0 : i32
    return %arg0, %arg1, %c0_i32 : i32, i32, i32
  }
  func.func @transform_1(%arg0: i32, %arg1: i32) -> (i32, i32, i32) {
    %c0_i32 = arith.constant 0 : i32
    %c0_i32_0 = arith.constant 0 : i32
    %c0_i32_1 = arith.constant 0 : i32
    return %arg0, %c0_i32, %c0_i32_0 : i32, i32, i32
  }
  func.func @transform_2(%arg0: i32, %arg1: i32) -> (i32, i32) {
    %c0_i32 = arith.constant 0 : i32
    %c0_i32_0 = arith.constant 0 : i32
    %c0_i32_1 = arith.constant 0 : i32
    return %c0_i32, %c0_i32_0 : i32, i32
  }
  func.func @transform_3(%arg0: i32, %arg1: i32) -> (i32, i32) {
    %c0_i32 = arith.constant 0 : i32
    %c0_i32_0 = arith.constant 0 : i32
    %c0_i32_1 = arith.constant 0 : i32
    return %c0_i32, %c0_i32_0 : i32, i32
  }
  func.func @transform_4(%arg0: i32, %arg1: i32) -> (i32, i32) {
    %c0_i32 = arith.constant 0 : i32
    %c0_i32_0 = arith.constant 0 : i32
    %c0_i32_1 = arith.constant 0 : i32
    return %c0_i32, %c0_i32_0 : i32, i32
  }
  func.func @transform_5(%arg0: i32, %arg1: i32) -> (i32, i32) {
    %c0_i32 = arith.constant 0 : i32
    %c0_i32_0 = arith.constant 0 : i32
    %c0_i32_1 = arith.constant 0 : i32
    return %c0_i32, %c0_i32_0 : i32, i32
  }
  func.func @transform_6(%arg0: i32, %arg1: i32) -> (i32, i32, i32) {
    %c0_i32 = arith.constant 0 : i32
    %c0_i32_0 = arith.constant 0 : i32
    return %arg0, %arg1, %c0_i32 : i32, i32, i32
  }
  func.func @transform_7(%arg0: i32, %arg1: i32) -> (i32, i32, i32) {
    %c0_i32 = arith.constant 0 : i32
    %c0_i32_0 = arith.constant 0 : i32
    %c0_i32_1 = arith.constant 0 : i32
    return %arg0, %c0_i32, %c0_i32_0 : i32, i32, i32
  }
}

module attributes {stable_mosaic.version = 11 : i64} {
  func.func @_head_kernel(%arg0: i32, %arg1: i32, %arg2: memref<1x1x256xf32, #tpu.memory_space<vmem>>, %arg3: memref<1x128x16xbf16, #tpu.memory_space<vmem>>, %arg4: memref<256x128xbf16, #tpu.memory_space<vmem>>, %arg5: memref<16x128xbf16, #tpu.memory_space<vmem>>, %arg6: memref<1x128xf32, #tpu.memory_space<vmem>>, %arg7: memref<128x64xbf16, #tpu.memory_space<vmem>>, %arg8: memref<1x64xf32, #tpu.memory_space<vmem>>, %arg9: memref<64x32xbf16, #tpu.memory_space<vmem>>, %arg10: memref<1x32xf32, #tpu.memory_space<vmem>>, %arg11: memref<32x13xbf16, #tpu.memory_space<vmem>>, %arg12: memref<1x13xf32, #tpu.memory_space<vmem>>, %arg13: memref<1x128x13xf32, #tpu.memory_space<vmem>>) attributes {dimension_semantics = [#tpu.dimension_semantics<parallel>, #tpu.dimension_semantics<parallel>], iteration_bounds = array<i64: 2, 1>, scalar_prefetch = 0 : i64, scratch_operands = 0 : i64, tpu.core_type = #tpu.core_type<tc>, window_params = [{transform_indices = @transform_0, window_bounds = array<i64: 1, 1, 256>}, {transform_indices = @transform_1, window_bounds = array<i64: 1, 128, 16>}, {pipeline_mode = #tpu.pipeline_mode<synchronous>, transform_indices = @transform_2, window_bounds = array<i64: 256, 128>}, {pipeline_mode = #tpu.pipeline_mode<synchronous>, transform_indices = @transform_3, window_bounds = array<i64: 16, 128>}, {pipeline_mode = #tpu.pipeline_mode<synchronous>, transform_indices = @transform_4, window_bounds = array<i64: 1, 128>}, {pipeline_mode = #tpu.pipeline_mode<synchronous>, transform_indices = @transform_5, window_bounds = array<i64: 128, 64>}, {pipeline_mode = #tpu.pipeline_mode<synchronous>, transform_indices = @transform_6, window_bounds = array<i64: 1, 64>}, {pipeline_mode = #tpu.pipeline_mode<synchronous>, transform_indices = @transform_7, window_bounds = array<i64: 64, 32>}, {pipeline_mode = #tpu.pipeline_mode<synchronous>, transform_indices = @transform_8, window_bounds = array<i64: 1, 32>}, {pipeline_mode = #tpu.pipeline_mode<synchronous>, transform_indices = @transform_9, window_bounds = array<i64: 32, 13>}, {pipeline_mode = #tpu.pipeline_mode<synchronous>, transform_indices = @transform_10, window_bounds = array<i64: 1, 13>}, {transform_indices = @transform_11, window_bounds = array<i64: 1, 128, 13>}]} {
    %c0 = arith.constant 0 : index
    %c0_0 = arith.constant 0 : index
    %c0_1 = arith.constant 0 : index
    %0 = vector.load %arg2[%c0, %c0_0, %c0_1] : memref<1x1x256xf32, #tpu.memory_space<vmem>>, vector<1x1x256xf32>
    %1 = vector.shape_cast %0 : vector<1x1x256xf32> to vector<1x256xf32>
    %2 = arith.truncf %1 : vector<1x256xf32> to vector<1x256xbf16>
    %c0_2 = arith.constant 0 : index
    %c0_3 = arith.constant 0 : index
    %3 = vector.load %arg4[%c0_2, %c0_3] : memref<256x128xbf16, #tpu.memory_space<vmem>>, vector<256x128xbf16>
    %cst = arith.constant dense<0.000000e+00> : vector<1x128xf32>
    %4 = tpu.matmul %2, %3, %cst {dimension_numbers = #tpu.dot_dimension_numbers<[1], [0], [0], [1], [0, 0, 1, 1], [], []>} : vector<1x256xbf16>, vector<256x128xbf16>, vector<1x128xf32> -> vector<1x128xf32>
    %c0_4 = arith.constant 0 : index
    %c0_5 = arith.constant 0 : index
    %c0_6 = arith.constant 0 : index
    %5 = vector.load %arg3[%c0_4, %c0_5, %c0_6] : memref<1x128x16xbf16, #tpu.memory_space<vmem>>, vector<1x128x16xbf16>
    %6 = vector.shape_cast %5 : vector<1x128x16xbf16> to vector<128x16xbf16>
    %c0_7 = arith.constant 0 : index
    %c0_8 = arith.constant 0 : index
    %7 = vector.load %arg5[%c0_7, %c0_8] : memref<16x128xbf16, #tpu.memory_space<vmem>>, vector<16x128xbf16>
    %cst_9 = arith.constant dense<0.000000e+00> : vector<128x128xf32>
    %8 = tpu.matmul %6, %7, %cst_9 {dimension_numbers = #tpu.dot_dimension_numbers<[1], [0], [0], [1], [0, 0, 1, 1], [], []>} : vector<128x16xbf16>, vector<16x128xbf16>, vector<128x128xf32> -> vector<128x128xf32>
    %9 = vector.broadcast %4 : vector<1x128xf32> to vector<128x128xf32>
    %10 = arith.addf %8, %9 : vector<128x128xf32>
    %c0_10 = arith.constant 0 : index
    %c0_11 = arith.constant 0 : index
    %11 = vector.load %arg6[%c0_10, %c0_11] : memref<1x128xf32, #tpu.memory_space<vmem>>, vector<1x128xf32>
    %12 = vector.broadcast %11 : vector<1x128xf32> to vector<128x128xf32>
    %13 = arith.addf %10, %12 : vector<128x128xf32>
    %cst_12 = arith.constant 0.000000e+00 : f32
    %14 = vector.broadcast %cst_12 : f32 to vector<128x128xf32>
    %15 = arith.maximumf %13, %14 : vector<128x128xf32>
    %c0_13 = arith.constant 0 : index
    %c0_14 = arith.constant 0 : index
    %16 = vector.load %arg7[%c0_13, %c0_14] : memref<128x64xbf16, #tpu.memory_space<vmem>>, vector<128x64xbf16>
    %17 = arith.truncf %15 : vector<128x128xf32> to vector<128x128xbf16>
    %cst_15 = arith.constant dense<0.000000e+00> : vector<128x64xf32>
    %18 = tpu.matmul %17, %16, %cst_15 {dimension_numbers = #tpu.dot_dimension_numbers<[1], [0], [0], [1], [0, 0, 1, 1], [], []>} : vector<128x128xbf16>, vector<128x64xbf16>, vector<128x64xf32> -> vector<128x64xf32>
    %c0_16 = arith.constant 0 : index
    %c0_17 = arith.constant 0 : index
    %19 = vector.load %arg8[%c0_16, %c0_17] : memref<1x64xf32, #tpu.memory_space<vmem>>, vector<1x64xf32>
    %20 = vector.broadcast %19 : vector<1x64xf32> to vector<128x64xf32>
    %21 = arith.addf %18, %20 : vector<128x64xf32>
    %cst_18 = arith.constant 0.000000e+00 : f32
    %22 = vector.broadcast %cst_18 : f32 to vector<128x64xf32>
    %23 = arith.maximumf %21, %22 : vector<128x64xf32>
    %c0_19 = arith.constant 0 : index
    %c0_20 = arith.constant 0 : index
    %24 = vector.load %arg9[%c0_19, %c0_20] : memref<64x32xbf16, #tpu.memory_space<vmem>>, vector<64x32xbf16>
    %25 = arith.truncf %23 : vector<128x64xf32> to vector<128x64xbf16>
    %cst_21 = arith.constant dense<0.000000e+00> : vector<128x32xf32>
    %26 = tpu.matmul %25, %24, %cst_21 {dimension_numbers = #tpu.dot_dimension_numbers<[1], [0], [0], [1], [0, 0, 1, 1], [], []>} : vector<128x64xbf16>, vector<64x32xbf16>, vector<128x32xf32> -> vector<128x32xf32>
    %c0_22 = arith.constant 0 : index
    %c0_23 = arith.constant 0 : index
    %27 = vector.load %arg10[%c0_22, %c0_23] : memref<1x32xf32, #tpu.memory_space<vmem>>, vector<1x32xf32>
    %28 = vector.broadcast %27 : vector<1x32xf32> to vector<128x32xf32>
    %29 = arith.addf %26, %28 : vector<128x32xf32>
    %cst_24 = arith.constant 0.000000e+00 : f32
    %30 = vector.broadcast %cst_24 : f32 to vector<128x32xf32>
    %31 = arith.maximumf %29, %30 : vector<128x32xf32>
    %c0_25 = arith.constant 0 : index
    %c0_26 = arith.constant 0 : index
    %32 = vector.load %arg11[%c0_25, %c0_26] : memref<32x13xbf16, #tpu.memory_space<vmem>>, vector<32x13xbf16>
    %33 = arith.truncf %31 : vector<128x32xf32> to vector<128x32xbf16>
    %cst_27 = arith.constant dense<0.000000e+00> : vector<128x13xf32>
    %34 = tpu.matmul %33, %32, %cst_27 {dimension_numbers = #tpu.dot_dimension_numbers<[1], [0], [0], [1], [0, 0, 1, 1], [], []>} : vector<128x32xbf16>, vector<32x13xbf16>, vector<128x13xf32> -> vector<128x13xf32>
    %c0_28 = arith.constant 0 : index
    %c0_29 = arith.constant 0 : index
    %35 = vector.load %arg12[%c0_28, %c0_29] : memref<1x13xf32, #tpu.memory_space<vmem>>, vector<1x13xf32>
    %36 = vector.broadcast %35 : vector<1x13xf32> to vector<128x13xf32>
    %37 = arith.addf %34, %36 : vector<128x13xf32>
    %cst_30 = arith.constant dense<0xFF800000> : vector<128xf32>
    %38 = vector.multi_reduction <maximumf>, %37, %cst_30 [1] : vector<128x13xf32> to vector<128xf32>
    %39 = vector.shape_cast %38 : vector<128xf32> to vector<128x1xf32>
    %40 = vector.broadcast %39 : vector<128x1xf32> to vector<128x13xf32>
    %41 = arith.subf %37, %40 : vector<128x13xf32>
    %42 = math.exp %41 : vector<128x13xf32>
    %cst_31 = arith.constant dense<0.000000e+00> : vector<128xf32>
    %43 = vector.multi_reduction <add>, %42, %cst_31 [1] : vector<128x13xf32> to vector<128xf32>
    %44 = vector.shape_cast %43 : vector<128xf32> to vector<128x1xf32>
    %45 = math.log %44 : vector<128x1xf32>
    %46 = vector.broadcast %45 : vector<128x1xf32> to vector<128x13xf32>
    %47 = arith.subf %41, %46 : vector<128x13xf32>
    %c0_32 = arith.constant 0 : index
    %c0_33 = arith.constant 0 : index
    %c0_34 = arith.constant 0 : index
    %48 = vector.load %arg13[%c0_32, %c0_33, %c0_34] : memref<1x128x13xf32, #tpu.memory_space<vmem>>, vector<1x128x13xf32>
    %49 = vector.shape_cast %48 : vector<1x128x13xf32> to vector<128x13xf32>
    %50 = vector.shape_cast %47 : vector<128x13xf32> to vector<1x128x13xf32>
    tpu.vector_store %arg13[%c0_32, %c0_33, %c0_34], %50 {strides = array<i32>} : memref<1x128x13xf32, #tpu.memory_space<vmem>>, vector<1x128x13xf32>,
    return
  }
  func.func @transform_0(%arg0: i32, %arg1: i32) -> (i32, i32, i32) {
    %c0_i32 = arith.constant 0 : i32
    %c0_i32_0 = arith.constant 0 : i32
    %c0_i32_1 = arith.constant 0 : i32
    return %arg0, %c0_i32, %c0_i32_0 : i32, i32, i32
  }
  func.func @transform_1(%arg0: i32, %arg1: i32) -> (i32, i32, i32) {
    %c0_i32 = arith.constant 0 : i32
    %c0_i32_0 = arith.constant 0 : i32
    return %arg0, %arg1, %c0_i32 : i32, i32, i32
  }
  func.func @transform_2(%arg0: i32, %arg1: i32) -> (i32, i32) {
    %c0_i32 = arith.constant 0 : i32
    %c0_i32_0 = arith.constant 0 : i32
    %c0_i32_1 = arith.constant 0 : i32
    return %c0_i32, %c0_i32_0 : i32, i32
  }
  func.func @transform_3(%arg0: i32, %arg1: i32) -> (i32, i32) {
    %c0_i32 = arith.constant 0 : i32
    %c0_i32_0 = arith.constant 0 : i32
    %c0_i32_1 = arith.constant 0 : i32
    return %c0_i32, %c0_i32_0 : i32, i32
  }
  func.func @transform_4(%arg0: i32, %arg1: i32) -> (i32, i32) {
    %c0_i32 = arith.constant 0 : i32
    %c0_i32_0 = arith.constant 0 : i32
    %c0_i32_1 = arith.constant 0 : i32
    return %c0_i32, %c0_i32_0 : i32, i32
  }
  func.func @transform_5(%arg0: i32, %arg1: i32) -> (i32, i32) {
    %c0_i32 = arith.constant 0 : i32
    %c0_i32_0 = arith.constant 0 : i32
    %c0_i32_1 = arith.constant 0 : i32
    return %c0_i32, %c0_i32_0 : i32, i32
  }
  func.func @transform_6(%arg0: i32, %arg1: i32) -> (i32, i32) {
    %c0_i32 = arith.constant 0 : i32
    %c0_i32_0 = arith.constant 0 : i32
    %c0_i32_1 = arith.constant 0 : i32
    return %c0_i32, %c0_i32_0 : i32, i32
  }
  func.func @transform_7(%arg0: i32, %arg1: i32) -> (i32, i32) {
    %c0_i32 = arith.constant 0 : i32
    %c0_i32_0 = arith.constant 0 : i32
    %c0_i32_1 = arith.constant 0 : i32
    return %c0_i32, %c0_i32_0 : i32, i32
  }
  func.func @transform_8(%arg0: i32, %arg1: i32) -> (i32, i32) {
    %c0_i32 = arith.constant 0 : i32
    %c0_i32_0 = arith.constant 0 : i32
    %c0_i32_1 = arith.constant 0 : i32
    return %c0_i32, %c0_i32_0 : i32, i32
  }
  func.func @transform_9(%arg0: i32, %arg1: i32) -> (i32, i32) {
    %c0_i32 = arith.constant 0 : i32
    %c0_i32_0 = arith.constant 0 : i32
    %c0_i32_1 = arith.constant 0 : i32
    return %c0_i32, %c0_i32_0 : i32, i32
  }
  func.func @transform_10(%arg0: i32, %arg1: i32) -> (i32, i32) {
    %c0_i32 = arith.constant 0 : i32
    %c0_i32_0 = arith.constant 0 : i32
    %c0_i32_1 = arith.constant 0 : i32
    return %c0_i32, %c0_i32_0 : i32, i32
  }
  func.func @transform_11(%arg0: i32, %arg1: i32) -> (i32, i32, i32) {
    %c0_i32 = arith.constant 0 : i32
    %c0_i32_0 = arith.constant 0 : i32
    return %arg0, %arg1, %c0_i32 : i32, i32, i32
  }
}

</mosaic_0001>

<llo_original>
// kernel: get_model_forward.6
$region0: #{get_model_forward.6}
  #allocation0 [shape = 'u32[]', space=smem, size = 0x4, offset = 0x4, fixed_abs, tag = 'smem constant byte address 0x4 - core index']
  #allocation1 [shape = 'u32[72,128]{1,0:T(1,128)}', space=vmem, size = 0x9000, scoped, tag = 'internal scratch']
  %s0 = inlined_call_operand.vmem [shape: f32[2,128,9], index: 0, kind: input, shape index: {}]
  %s1 = inlined_call_operand.vmem [shape: bf16[2,9,16], index: 1, kind: input, shape index: {}]
  %s2 = inlined_call_operand.vmem [shape: f32[1,16], index: 2, kind: input, shape index: {}]
  %s3 = inlined_call_operand.vmem [shape: bf16[2,128,16], index: 3, kind: output, shape index: {}]
  %s4 = sld [smem:[#allocation0]]
  $region45: #{get_model_forward.6} parent=0
    _
  %s6 = ssub.s32 1, %s4
  %s7 = scalar_select 0, %s6, %s4
  loop: start=0, step=1, limit=4
  $region2: #{get_model_forward.6} parent=0 // loop_pre_header
    _
  $region3: #{get_model_forward.6} parent=0 // loop_header
    %s9 = sphi 0, %s13
    %p10 = scmp.ge.s32.totalorder %s9, 4
    %s16 = sphi 0, %s28
    %s17 = sphi 0, %s24
    %s18 = sphi 0, %s16
    %s19 = sphi 0, %s17
    %s20 = sphi 0, %s18
    %s21 = sphi 0, %s19
    %s33 = sphi 0, %s35
    %s36 = sphi 0, %s33
    %s37 = sphi 0, %s36
    %s53 = sphi 0, %s37
    %s59 = sphi 0, %s61
    %s62 = sphi 0, %s59
    %s63 = sphi 0, %s62
    %s79 = sphi 0, %s63
    %s83 = sphi 0, %s83
    %s85 = sphi 0, %s83
    %s86 = sphi 0, %s85
    %s100 = sphi 0, %s86
    %s108 = sphi 0, %s110
    %s111 = sphi 0, %s108
    %s112 = sphi 0, %s111
    %s128 = sphi 0, %s112
  $region4: #{get_model_forward.6} parent=0 // loop_header_branch
    %12 = sbr.rel (%p10) target = $region8
  $region5: #{get_model_forward.6} parent=0 // loop_body
    %s14 = ssub.s32 %s9, 1
    %s15 = ssub.s32 %s9, 2
    %s22 = sadd.s32 1, %s17
    %p23 = scmp.ge.s32.totalorder %s22, 1
    %s24 = scalar_select %p23, 0, %s22
    %s25 = sadd.s32 1, %s16
    %s26 = scalar_select %p23, %s25, %s16
    %p27 = scmp.ge.s32.totalorder %s26, 2
    %s28 = scalar_select %p27, 0, %s26
    %s29 = ssub.s32 %s16, %s28
    %s30 = ssub.s32 %s17, %s24
    %s31 = sor.u32 %s29, %s30
    %p32 = scmp.eq.s32.totalorder %s31, 0
    %s34 = sadd.s32 %s33, 1
    %s35 = scalar_select %p32, %s33, %s34
    %p38 = pneg %p32
    %p39 = scmp.eq.s32.totalorder %s9, 1
    %p40 = por %p38, %p39
    %p41 = scmp.ne.s32.totalorder %s33, %s36
    %p42 = scmp.eq.s32.totalorder %s9, 0
    %p43 = por %p41, %p42
    %p44 = scmp.ne.s32.totalorder %s33, %s36
    %p45 = scmp.eq.s32.totalorder %s14, 1
    %p46 = por %p44, %p45
    %p47 = scmp.ne.s32.totalorder %s36, %s37
    %p48 = scmp.eq.s32.totalorder %s14, 0
    %p49 = por %p47, %p48
    %p50 = scmp.ne.s32.totalorder %s36, %s37
    %p51 = scmp.eq.s32.totalorder %s15, 1
    %p52 = por %p50, %p51
    %p54 = scmp.ne.s32.totalorder %s37, %s53
    %p55 = scmp.eq.s32.totalorder %s15, 0
    %p56 = por %p54, %p55
    %s57 = ssub.s32 %s16, %s28
    %p58 = scmp.eq.s32.totalorder %s57, 0
    %s60 = sadd.s32 %s59, 1
    %s61 = scalar_select %p58, %s59, %s60
    %p64 = pneg %p58
    %p65 = scmp.eq.s32.totalorder %s9, 1
    %p66 = por %p64, %p65
    %p67 = scmp.ne.s32.totalorder %s59, %s62
    %p68 = scmp.eq.s32.totalorder %s9, 0
    %p69 = por %p67, %p68
    %p70 = scmp.ne.s32.totalorder %s59, %s62
    %p71 = scmp.eq.s32.totalorder %s14, 1
    %p72 = por %p70, %p71
    %p73 = scmp.ne.s32.totalorder %s62, %s63
    %p74 = scmp.eq.s32.totalorder %s14, 0
    %p75 = por %p73, %p74
    %p76 = scmp.ne.s32.totalorder %s62, %s63
    %p77 = scmp.eq.s32.totalorder %s15, 1
    %p78 = por %p76, %p77
    %p80 = scmp.ne.s32.totalorder %s63, %s79
    %p81 = scmp.eq.s32.totalorder %s15, 0
    %p82 = por %p80, %p81
    %s84 = sadd.s32 %s83, 1
    %p87 = scmp.eq.s32.totalorder %s9, 1
    %p88 = scmp.ne.s32.totalorder %s83, %s85
    %p89 = scmp.eq.s32.totalorder %s9, 0
    %p90 = por %p88, %p89
    %p91 = scmp.ne.s32.totalorder %s83, %s85
    %p92 = scmp.eq.s32.totalorder %s14, 1
    %p93 = por %p91, %p92
    %p94 = scmp.ne.s32.totalorder %s85, %s86
    %p95 = scmp.eq.s32.totalorder %s14, 0
    %p96 = por %p94, %p95
    %p97 = scmp.ne.s32.totalorder %s85, %s86
    %p98 = scmp.eq.s32.totalorder %s15, 1
    %p99 = por %p97, %p98
    %p101 = scmp.ne.s32.totalorder %s86, %s100
    %p102 = scmp.eq.s32.totalorder %s15, 0
    %p103 = por %p101, %p102
    %s104 = ssub.s32 %s16, %s28
    %s105 = ssub.s32 %s17, %s24
    %s106 = sor.u32 %s104, %s105
    %p107 = scmp.eq.s32.totalorder %s106, 0
    %s109 = sadd.s32 %s108, 1
    %s110 = scalar_select %p107, %s108, %s109
    %p113 = pneg %p107
    %p114 = scmp.eq.s32.totalorder %s9, 1
    %p115 = por %p113, %p114
    %p116 = scmp.ne.s32.totalorder %s108, %s111
    %p117 = scmp.eq.s32.totalorder %s9, 0
    %p118 = por %p116, %p117
    %p119 = scmp.ne.s32.totalorder %s108, %s111
    %p120 = scmp.eq.s32.totalorder %s14, 1
    %p121 = por %p119, %p120
    %p122 = scmp.ne.s32.totalorder %s111, %s112
    %p123 = scmp.eq.s32.totalorder %s14, 0
    %p124 = por %p122, %p123
    %p125 = scmp.ne.s32.totalorder %s111, %s112
    %p126 = scmp.eq.s32.totalorder %s15, 1
    %p127 = por %p125, %p126
    %p129 = scmp.ne.s32.totalorder %s112, %s128
    %p130 = scmp.eq.s32.totalorder %s15, 0
    %p131 = por %p129, %p130
    %p132 = scmp.le.s32.totalorder 1, %s9
    %p133 = scmp.lt.s32.totalorder %s9, 3
    %p134 = pnand %p132, %p133
    %p135 = pneg %p134
    // Predicated region
    $region9: #{get_model_forward.6} parent=5 // pred_check
      _
    $region10: #{get_model_forward.6} parent=5 // pred_check_branch
      %137 = sbr.rel (%p134) target = $region12
    $region11: #{get_model_forward.6} parent=5 // pred_region
      %s138 = ssub.s32 %s9, 1
      // Predicated region
      $region13: #{get_model_forward.6} parent=11 // pred_check
        %p139 = pneg %p96
      $region14: #{get_model_forward.6} parent=11 // pred_check_branch
        %141 = sbr.rel (%p139) target = $region16
      $region15: #{get_model_forward.6} parent=11 // pred_region
        _
      $region16: #{get_model_forward.6} parent=11 // pred_fallthru
        _
    $region12: #{get_model_forward.6} parent=5 // pred_fallthru
      _
    %p142 = scmp.lt.s32.totalorder %s9, 2
    // Predicated region
    $region17: #{get_model_forward.6} parent=5 // pred_check
      %p143 = pneg %p142
    $region18: #{get_model_forward.6} parent=5 // pred_check_branch
      %145 = sbr.rel (%p143) target = $region20
    $region19: #{get_model_forward.6} parent=5 // pred_region
      // Predicated region
      $region21: #{get_model_forward.6} parent=19 // pred_check
        %p146 = pneg %p43
      $region22: #{get_model_forward.6} parent=19 // pred_check_branch
        %148 = sbr.rel (%p146) target = $region24
      $region23: #{get_model_forward.6} parent=19 // pred_region
        %s149 = smul.u32 16, %s17
        %p150 = scmp.lt.s32.totalorder %s16, 1
        %s151 = scalar_select %p150, %s16, 1
        %p152 = scmp.lt.s32.totalorder %s149, 15
        %s153 = scalar_select %p152, %s149, 15
        %s154 = smul.addr %s151, 16
        %s155 = sadd.s32 %s153, %s154
        %s156 = smul.addr %s155, 8
        %s157 = scalar_lea.vmem %s0, %s156
        %s158 = smul.u32 16, %s17
      $region24: #{get_model_forward.6} parent=19 // pred_fallthru
        _
      // Predicated region
      $region25: #{get_model_forward.6} parent=19 // pred_check
        %p159 = pneg %p69
      $region26: #{get_model_forward.6} parent=19 // pred_check_branch
        %161 = sbr.rel (%p159) target = $region28
      $region27: #{get_model_forward.6} parent=19 // pred_region
        %p162 = scmp.lt.s32.totalorder %s16, 1
        %s163 = scalar_select %p162, %s16, 1
        %s164 = smul.addr %s163, 2
        %s165 = smul.addr %s164, 4
        %s166 = scalar_lea.vmem %s1, %s165
      $region28: #{get_model_forward.6} parent=19 // pred_fallthru
        _
    $region20: #{get_model_forward.6} parent=5 // pred_fallthru
      _
    %p167 = scmp.le.s32.totalorder 1, %s9
    %p168 = scmp.lt.s32.totalorder %s9, 3
    %p169 = pnand %p167, %p168
    %p170 = pneg %p169
    // Predicated region
    $region29: #{get_model_forward.6} parent=5 // pred_check
      _
    $region30: #{get_model_forward.6} parent=5 // pred_check_branch
      %172 = sbr.rel (%p169) target = $region32
    $region31: #{get_model_forward.6} parent=5 // pred_region
      %s173 = ssub.s32 %s9, 1
      %s174 = smul.u32 16, %s19
      %p175 = scmp.lt.s32.totalorder %s18, 1
      %s176 = scalar_select %p175, %s18, 1
      %p177 = scmp.lt.s32.totalorder %s174, 15
      %s178 = scalar_select %p177, %s174, 15
      %s179 = smul.addr %s176, 16
      %s180 = sadd.s32 %s178, %s179
      %s181 = smul.addr %s180, 8
      %s182 = scalar_lea.vmem %s0, %s181
      %p183 = pneg %p49
      %p184 = pneg %p46
      %p185 = scmp.lt.s32.totalorder %s18, 1
      %s186 = scalar_select %p185, %s18, 1
      %s187 = smul.addr %s186, 2
      %s188 = smul.addr %s187, 4
      %s189 = scalar_lea.vmem %s1, %s188
      %p190 = pneg %p75
      %p191 = pneg %p72
      %p192 = pneg %p96
      %p193 = pneg %p93
      %p194 = pneg %p124
      %p195 = pneg %p121
      %s196 = smul.u32 16, %s19
      %p197 = scmp.lt.s32.totalorder %s18, 1
      %s198 = scalar_select %p197, %s18, 1
      %p199 = scmp.lt.s32.totalorder %s196, 15
      %s200 = scalar_select %p199, %s196, 15
      %s201 = smul.addr %s198, 16
      %s202 = sadd.s32 %s200, %s201
      %s203 = smul.addr %s202, 4
      %s204 = scalar_lea.vmem %s3, %s203
      %s205 = smul.u32 16, %s19
      %p206 = scmp.lt.s32.totalorder %s18, 1
      %s207 = scalar_select %p206, %s18, 1
      %p208 = scmp.lt.s32.totalorder %s205, 15
      %s209 = scalar_select %p208, %s205, 15
      %s210 = smul.addr %s207, 16
      %s211 = sadd.s32 %s209, %s210
      %s212 = smul.addr %s211, 8
      %s213 = scalar_lea.vmem %s0, %s212
      %s214 = smul.u32 16, %s19
      %p215 = scmp.lt.s32.totalorder %s18, 1
      %s216 = scalar_select %p215, %s18, 1
      %s217 = smul.addr %s216, 2
      %s218 = smul.addr %s217, 4
      %s219 = scalar_lea.vmem %s1, %s218
      %s220 = smul.u32 16, %s19
      %p221 = scmp.lt.s32.totalorder %s18, 1
      %s222 = scalar_select %p221, %s18, 1
      %p223 = scmp.lt.s32.totalorder %s220, 15
      %s224 = scalar_select %p223, %s220, 15
      %s225 = smul.addr %s222, 16
      %s226 = sadd.s32 %s224, %s225
      %s227 = smul.addr %s226, 4
      %s228 = scalar_lea.vmem %s3, %s227
      %s229 = smul.u32 16, %s19
      %v231 = vld [vmem:[%s213] sm:$0xff]
      %v232 = vld [vmem:[%s213 + $0x8] sm:$0xff]
      %v233 = vld [vmem:[%s213 + $0x10] sm:$0xff]
      %v234 = vld [vmem:[%s213 + $0x18] sm:$0xff]
      %v235 = vld [vmem:[%s213 + $0x20] sm:$0xff]
      %v236 = vld [vmem:[%s213 + $0x28] sm:$0xff]
      %v237 = vld [vmem:[%s213 + $0x30] sm:$0xff]
      %v238 = vld [vmem:[%s213 + $0x38] sm:$0xff]
      %v239 = vld [vmem:[%s213 + $0x40] sm:$0xff]
      %v240 = vld [vmem:[%s213 + $0x48] sm:$0xff]
      %v241 = vld [vmem:[%s213 + $0x50] sm:$0xff]
      %v242 = vld [vmem:[%s213 + $0x58] sm:$0xff]
      %v243 = vld [vmem:[%s213 + $0x60] sm:$0xff]
      %v244 = vld [vmem:[%s213 + $0x68] sm:$0xff]
      %v245 = vld [vmem:[%s213 + $0x70] sm:$0xff]
      %v246 = vld [vmem:[%s213 + $0x78] sm:$0xff]
      %v247 = vpack.c.bf16 %v232, %v231
      %v248 = vpack.c.bf16 %v234, %v233
      %v249 = vpack.c.bf16 %v236, %v235
      %v250 = vpack.c.bf16 %v238, %v237
      %v251 = vpack.c.bf16 %v240, %v239
      %v252 = vpack.c.bf16 %v242, %v241
      %v253 = vpack.c.bf16 %v244, %v243
      %v254 = vpack.c.bf16 %v246, %v245
      %v255 = vld [vmem:[%s219] sm:$0xf]
      %v256 = vld [vmem:[%s219 + $0x4] sm:$0x1]
      %v257 = vld [vmem:[%s2] sm:$0x1]
      %v259 = vperm.slane %v257, 0
      %v263 = vunpack.c.l.b16 %v255
      %v264 = vunpack.c.l.b16 %v256
      %v265 = vpack.c.b16 %v264, %v263
      %vm266 = vcmask 72704
      %v268 = vsel %vm266, %v247, 0
      %v271 = vsel %vm266, %v248, 0
      %v274 = vsel %vm266, %v249, 0
      %v277 = vsel %vm266, %v250, 0
      %v280 = vsel %vm266, %v251, 0
      %v283 = vsel %vm266, %v252, 0
      %v286 = vsel %vm266, %v253, 0
      %v289 = vsel %vm266, %v254, 0
      %vm291 = vcmask 1043456
      %vm292 = vcmask 1044480
      %v293 = vsel %vm291, 4294967295, 65535
      %v294 = vsel %vm292, %v293, 0
      %v296 = vand.u32 %v265, %v294
      %298 = vmatpush.bf16.msra.mxu0 0
      %299 = vmatpush.bf16.msra.mxu0 0
      %300 = vmatpush.bf16.msra.mxu0 0
      %301 = vmatpush.bf16.msra.mxu0 0
      %302 = vmatpush.bf16.msra.mxu0 0
      %303 = vmatpush.bf16.msra.mxu0 0
      %304 = vmatpush.bf16.msra.mxu0 0
      %305 = vmatpush.bf16.msra.mxu0 %v296
      %306 = vmatmul.bf16.gmra.mxu0 %v268
      %v307 = vpop.f32.mrf.mxu0
      %v308 = vadd.f32 %v259, %v307
      %v309 = vpop.f32.mrf.mxu0
      %v310 = vadd.f32 %v259, %v309
      %311 = vmatmul.bf16.gmra.mxu0 %v271
      %v312 = vpop.f32.mrf.mxu0
      %v313 = vadd.f32 %v259, %v312
      %v314 = vpop.f32.mrf.mxu0
      %v315 = vadd.f32 %v259, %v314
      %316 = vmatmul.bf16.gmra.mxu0 %v274
      %v317 = vpop.f32.mrf.mxu0
      %v318 = vadd.f32 %v259, %v317
      %v319 = vpop.f32.mrf.mxu0
      %v320 = vadd.f32 %v259, %v319
      %321 = vmatmul.bf16.gmra.mxu0 %v277
      %v322 = vpop.f32.mrf.mxu0
      %v323 = vadd.f32 %v259, %v322
      %v324 = vpop.f32.mrf.mxu0
      %v325 = vadd.f32 %v259, %v324
      %326 = vmatmul.bf16.gmra.mxu0 %v280
      %v327 = vpop.f32.mrf.mxu0
      %v328 = vadd.f32 %v259, %v327
      %v329 = vpop.f32.mrf.mxu0
      %v330 = vadd.f32 %v259, %v329
      %331 = vmatmul.bf16.gmra.mxu0 %v283
      %v332 = vpop.f32.mrf.mxu0
      %v333 = vadd.f32 %v259, %v332
      %v334 = vpop.f32.mrf.mxu0
      %v335 = vadd.f32 %v259, %v334
      %336 = vmatmul.bf16.gmra.mxu0 %v286
      %v337 = vpop.f32.mrf.mxu0
      %v338 = vadd.f32 %v259, %v337
      %v339 = vpop.f32.mrf.mxu0
      %v340 = vadd.f32 %v259, %v339
      %341 = vmatmul.bf16.gmra.mxu0 %v289
      %v342 = vpop.f32.mrf.mxu0
      %v343 = vadd.f32 %v259, %v342
      %v344 = vpop.f32.mrf.mxu0
      %v345 = vadd.f32 %v259, %v344
      %346 = vdwg.mxu0
      %v347 = vmax.f32 %v308, 0.0
      %v348 = vmax.f32 %v310, 0.0
      %v349 = vmax.f32 %v313, 0.0
      %v350 = vmax.f32 %v315, 0.0
      %v351 = vmax.f32 %v318, 0.0
      %v352 = vmax.f32 %v320, 0.0
      %v353 = vmax.f32 %v323, 0.0
      %v354 = vmax.f32 %v325, 0.0
      %v355 = vmax.f32 %v328, 0.0
      %v356 = vmax.f32 %v330, 0.0
      %v357 = vmax.f32 %v333, 0.0
      %v358 = vmax.f32 %v335, 0.0
      %v359 = vmax.f32 %v338, 0.0
      %v360 = vmax.f32 %v340, 0.0
      %v361 = vmax.f32 %v343, 0.0
      %v362 = vmax.f32 %v345, 0.0
      %v363 = vpack.c.bf16 %v347, %v347
      %v364 = vpack.c.bf16 %v348, %v348
      %v365 = vpack.c.bf16 %v349, %v349
      %v366 = vpack.c.bf16 %v350, %v350
      %v367 = vpack.c.bf16 %v351, %v351
      %v368 = vpack.c.bf16 %v352, %v352
      %v369 = vpack.c.bf16 %v353, %v353
      %v370 = vpack.c.bf16 %v354, %v354
      %v371 = vpack.c.bf16 %v355, %v355
      %v372 = vpack.c.bf16 %v356, %v356
      %v373 = vpack.c.bf16 %v357, %v357
      %v374 = vpack.c.bf16 %v358, %v358
      %v375 = vpack.c.bf16 %v359, %v359
      %v376 = vpack.c.bf16 %v360, %v360
      %v377 = vpack.c.bf16 %v361, %v361
      %v378 = vpack.c.bf16 %v362, %v362
      %vm379 = vcmask 125952
      %380 = vst.msk [vmem:[%s228] sm:$0xf] %vm379, %v363
      %381 = vst.msk [vmem:[%s228 + $0x4] sm:$0xf] %vm379, %v364
      %382 = vst.msk [vmem:[%s228 + $0x8] sm:$0xf] %vm379, %v365
      %383 = vst.msk [vmem:[%s228 + $0xc] sm:$0xf] %vm379, %v366
      %384 = vst.msk [vmem:[%s228 + $0x10] sm:$0xf] %vm379, %v367
      %385 = vst.msk [vmem:[%s228 + $0x14] sm:$0xf] %vm379, %v368
      %386 = vst.msk [vmem:[%s228 + $0x18] sm:$0xf] %vm379, %v369
      %387 = vst.msk [vmem:[%s228 + $0x1c] sm:$0xf] %vm379, %v370
      %388 = vst.msk [vmem:[%s228 + $0x20] sm:$0xf] %vm379, %v371
      %389 = vst.msk [vmem:[%s228 + $0x24] sm:$0xf] %vm379, %v372
      %390 = vst.msk [vmem:[%s228 + $0x28] sm:$0xf] %vm379, %v373
      %391 = vst.msk [vmem:[%s228 + $0x2c] sm:$0xf] %vm379, %v374
      %392 = vst.msk [vmem:[%s228 + $0x30] sm:$0xf] %vm379, %v375
      %393 = vst.msk [vmem:[%s228 + $0x34] sm:$0xf] %vm379, %v376
      %394 = vst.msk [vmem:[%s228 + $0x38] sm:$0xf] %vm379, %v377
      %395 = vst.msk [vmem:[%s228 + $0x3c] sm:$0xf] %vm379, %v378
      %s396 = smul.u32 16, %s19
      %p397 = scmp.lt.s32.totalorder %s18, 1
      %s398 = scalar_select %p397, %s18, 1
      %p399 = scmp.lt.s32.totalorder %s396, 15
      %s400 = scalar_select %p399, %s396, 15
      %s401 = smul.addr %s398, 16
      %s402 = sadd.s32 %s400, %s401
      %s403 = smul.addr %s402, 4
      %s404 = scalar_lea.vmem %s3, %s403
      // Predicated region
      $region33: #{get_model_forward.6} parent=31 // pred_check
        %p405 = pneg %p121
      $region34: #{get_model_forward.6} parent=31 // pred_check_branch
        %407 = sbr.rel (%p405) target = $region36
      $region35: #{get_model_forward.6} parent=31 // pred_region
        %s408 = smul.u32 16, %s19
      $region36: #{get_model_forward.6} parent=31 // pred_fallthru
        _
    $region32: #{get_model_forward.6} parent=5 // pred_fallthru
      _
    %p409 = scmp.le.s32.totalorder 2, %s9
    // Predicated region
    $region37: #{get_model_forward.6} parent=5 // pred_check
      %p410 = pneg %p409
    $region38: #{get_model_forward.6} parent=5 // pred_check_branch
      %412 = sbr.rel (%p410) target = $region40
    $region39: #{get_model_forward.6} parent=5 // pred_region
      %s413 = ssub.s32 %s9, 2
      // Predicated region
      $region41: #{get_model_forward.6} parent=39 // pred_check
        %p414 = pneg %p127
      $region42: #{get_model_forward.6} parent=39 // pred_check_branch
        %416 = sbr.rel (%p414) target = $region44
      $region43: #{get_model_forward.6} parent=39 // pred_region
        %s417 = smul.u32 16, %s21
        %p418 = scmp.lt.s32.totalorder %s20, 1
        %s419 = scalar_select %p418, %s20, 1
        %p420 = scmp.lt.s32.totalorder %s417, 15
        %s421 = scalar_select %p420, %s417, 15
        %s422 = smul.addr %s419, 16
        %s423 = sadd.s32 %s421, %s422
        %s424 = smul.addr %s423, 4
        %s425 = scalar_lea.vmem %s3, %s424
      $region44: #{get_model_forward.6} parent=39 // pred_fallthru
        _
    $region40: #{get_model_forward.6} parent=5 // pred_fallthru
      _
  $region6: #{get_model_forward.6} parent=0 // loop_footer
    %s13 = sadd.s32 1, %s9
  $region7: #{get_model_forward.6} parent=0 // loop_footer_branch
    %8 = sbr.rel target = $region3
  $region8: #{get_model_forward.6} parent=0 // loop_exit
    _

// kernel: get_model_forward.8
$region0: #{get_model_forward.8}
  #allocation0 [shape = 'u32[]', space=smem, size = 0x4, offset = 0x4, fixed_abs, tag = 'smem constant byte address 0x4 - core index']
  #allocation1 [shape = 'u32[72,128]{1,0:T(1,128)}', space=vmem, size = 0x9000, scoped, tag = 'internal scratch']
  %s0 = inlined_call_operand.vmem [shape: bf16[2,128,16], index: 0, kind: input, shape index: {}]
  %s1 = inlined_call_operand.vmem [shape: f32[2,16,16], index: 1, kind: input, shape index: {}]
  %s2 = inlined_call_operand.hbm [shape: bf16[16,32], index: 2, kind: input, shape index: {}]
  %s3 = inlined_call_operand.hbm [shape: f32[1,32], index: 3, kind: input, shape index: {}]
  %s4 = inlined_call_operand.hbm [shape: bf16[32,256], index: 4, kind: input, shape index: {}]
  %s5 = inlined_call_operand.vmem [shape: f32[1,256], index: 5, kind: input, shape index: {}]
  %s6 = inlined_call_operand.vmem [shape: bf16[2,128,16], index: 6, kind: output, shape index: {0}]
  %s7 = inlined_call_operand.vmem [shape: f32[2,1,256], index: 7, kind: output, shape index: {1}]
  %8 = xla_tuple %s6, %s7
  %s9 = sld [smem:[#allocation0]]
  $region85: #{get_model_forward.8} parent=0
    _
  %s11 = ssub.s32 1, %s9
  %s12 = scalar_select 0, %s11, %s9
  $region1: #{get_model_forward.8} parent=0
    #allocation2 [shape = 'u8[4096]{0}', space=vmem, size = 0x1000, scoped, tag = 'input window, operand 2, single buffered']
    #allocation3 [shape = 's32[2]{0}', space=sflag, size = 0x8, scoped, tag = 'scoped memory for get_model_forward.8']
    #allocation4 [shape = 'u8[512]{0}', space=vmem, size = 0x400, scoped, tag = 'input window, operand 3, single buffered']
    #allocation5 [shape = 's32[1]{0}', space=sflag, size = 0x4, scoped, tag = 'scoped memory for get_model_forward.8']
    #allocation6 [shape = 'u8[16384]{0}', space=vmem, size = 0x4000, scoped, tag = 'input window, operand 4, single buffered']
    %13 = vsyncpa [#allocation3], 0
    %14 = vsyncpa [#allocation5], 0
    loop: start=0, step=1, limit=4
    $region2: #{get_model_forward.8} parent=1 // loop_pre_header
      _
    $region3: #{get_model_forward.8} parent=1 // loop_header
      %s16 = sphi 0, %s20
      %p17 = scmp.ge.s32.totalorder %s16, 4
      %s23 = sphi 0, %s35
      %s24 = sphi 0, %s31
      %s25 = sphi 0, %s23
      %s26 = sphi 0, %s24
      %s27 = sphi 0, %s25
      %s28 = sphi 0, %s26
      %s40 = sphi 0, %s42
      %s43 = sphi 0, %s40
      %s44 = sphi 0, %s43
      %s60 = sphi 0, %s44
      %s66 = sphi 0, %s68
      %s69 = sphi 0, %s66
      %s70 = sphi 0, %s69
      %s86 = sphi 0, %s70
      %s90 = sphi 0, %s90
      %s92 = sphi 0, %s90
      %s93 = sphi 0, %s92
      %s107 = sphi 0, %s93
      %s111 = sphi 0, %s111
      %s113 = sphi 0, %s111
      %s114 = sphi 0, %s113
      %s128 = sphi 0, %s114
      %s132 = sphi 0, %s132
      %s134 = sphi 0, %s132
      %s135 = sphi 0, %s134
      %s149 = sphi 0, %s135
      %s153 = sphi 0, %s153
      %s155 = sphi 0, %s153
      %s156 = sphi 0, %s155
      %s170 = sphi 0, %s156
      %s178 = sphi 0, %s180
      %s181 = sphi 0, %s178
      %s182 = sphi 0, %s181
      %s198 = sphi 0, %s182
      %s204 = sphi 0, %s206
      %s207 = sphi 0, %s204
      %s208 = sphi 0, %s207
      %s224 = sphi 0, %s208
    $region4: #{get_model_forward.8} parent=1 // loop_header_branch
      %19 = sbr.rel (%p17) target = $region8
    $region5: #{get_model_forward.8} parent=1 // loop_body
      %s21 = ssub.s32 %s16, 1
      %s22 = ssub.s32 %s16, 2
      %s29 = sadd.s32 1, %s24
      %p30 = scmp.ge.s32.totalorder %s29, 1
      %s31 = scalar_select %p30, 0, %s29
      %s32 = sadd.s32 1, %s23
      %s33 = scalar_select %p30, %s32, %s23
      %p34 = scmp.ge.s32.totalorder %s33, 2
      %s35 = scalar_select %p34, 0, %s33
      %s36 = ssub.s32 %s23, %s35
      %s37 = ssub.s32 %s24, %s31
      %s38 = sor.u32 %s36, %s37
      %p39 = scmp.eq.s32.totalorder %s38, 0
      %s41 = sadd.s32 %s40, 1
      %s42 = scalar_select %p39, %s40, %s41
      %p45 = pneg %p39
      %p46 = scmp.eq.s32.totalorder %s16, 1
      %p47 = por %p45, %p46
      %p48 = scmp.ne.s32.totalorder %s40, %s43
      %p49 = scmp.eq.s32.totalorder %s16, 0
      %p50 = por %p48, %p49
      %p51 = scmp.ne.s32.totalorder %s40, %s43
      %p52 = scmp.eq.s32.totalorder %s21, 1
      %p53 = por %p51, %p52
      %p54 = scmp.ne.s32.totalorder %s43, %s44
      %p55 = scmp.eq.s32.totalorder %s21, 0
      %p56 = por %p54, %p55
      %p57 = scmp.ne.s32.totalorder %s43, %s44
      %p58 = scmp.eq.s32.totalorder %s22, 1
      %p59 = por %p57, %p58
      %p61 = scmp.ne.s32.totalorder %s44, %s60
      %p62 = scmp.eq.s32.totalorder %s22, 0
      %p63 = por %p61, %p62
      %s64 = ssub.s32 %s23, %s35
      %p65 = scmp.eq.s32.totalorder %s64, 0
      %s67 = sadd.s32 %s66, 1
      %s68 = scalar_select %p65, %s66, %s67
      %p71 = pneg %p65
      %p72 = scmp.eq.s32.totalorder %s16, 1
      %p73 = por %p71, %p72
      %p74 = scmp.ne.s32.totalorder %s66, %s69
      %p75 = scmp.eq.s32.totalorder %s16, 0
      %p76 = por %p74, %p75
      %p77 = scmp.ne.s32.totalorder %s66, %s69
      %p78 = scmp.eq.s32.totalorder %s21, 1
      %p79 = por %p77, %p78
      %p80 = scmp.ne.s32.totalorder %s69, %s70
      %p81 = scmp.eq.s32.totalorder %s21, 0
      %p82 = por %p80, %p81
      %p83 = scmp.ne.s32.totalorder %s69, %s70
      %p84 = scmp.eq.s32.totalorder %s22, 1
      %p85 = por %p83, %p84
      %p87 = scmp.ne.s32.totalorder %s70, %s86
      %p88 = scmp.eq.s32.totalorder %s22, 0
      %p89 = por %p87, %p88
      %s91 = sadd.s32 %s90, 1
      %p94 = scmp.eq.s32.totalorder %s16, 1
      %p95 = scmp.ne.s32.totalorder %s90, %s92
      %p96 = scmp.eq.s32.totalorder %s16, 0
      %p97 = por %p95, %p96
      %p98 = scmp.ne.s32.totalorder %s90, %s92
      %p99 = scmp.eq.s32.totalorder %s21, 1
      %p100 = por %p98, %p99
      %p101 = scmp.ne.s32.totalorder %s92, %s93
      %p102 = scmp.eq.s32.totalorder %s21, 0
      %p103 = por %p101, %p102
      %p104 = scmp.ne.s32.totalorder %s92, %s93
      %p105 = scmp.eq.s32.totalorder %s22, 1
      %p106 = por %p104, %p105
      %p108 = scmp.ne.s32.totalorder %s93, %s107
      %p109 = scmp.eq.s32.totalorder %s22, 0
      %p110 = por %p108, %p109
      %s112 = sadd.s32 %s111, 1
      %p115 = scmp.eq.s32.totalorder %s16, 1
      %p116 = scmp.ne.s32.totalorder %s111, %s113
      %p117 = scmp.eq.s32.totalorder %s16, 0
      %p118 = por %p116, %p117
      %p119 = scmp.ne.s32.totalorder %s111, %s113
      %p120 = scmp.eq.s32.totalorder %s21, 1
      %p121 = por %p119, %p120
      %p122 = scmp.ne.s32.totalorder %s113, %s114
      %p123 = scmp.eq.s32.totalorder %s21, 0
      %p124 = por %p122, %p123
      %p125 = scmp.ne.s32.totalorder %s113, %s114
      %p126 = scmp.eq.s32.totalorder %s22, 1
      %p127 = por %p125, %p126
      %p129 = scmp.ne.s32.totalorder %s114, %s128
      %p130 = scmp.eq.s32.totalorder %s22, 0
      %p131 = por %p129, %p130
      %s133 = sadd.s32 %s132, 1
      %p136 = scmp.eq.s32.totalorder %s16, 1
      %p137 = scmp.ne.s32.totalorder %s132, %s134
      %p138 = scmp.eq.s32.totalorder %s16, 0
      %p139 = por %p137, %p138
      %p140 = scmp.ne.s32.totalorder %s132, %s134
      %p141 = scmp.eq.s32.totalorder %s21, 1
      %p142 = por %p140, %p141
      %p143 = scmp.ne.s32.totalorder %s134, %s135
      %p144 = scmp.eq.s32.totalorder %s21, 0
      %p145 = por %p143, %p144
      %p146 = scmp.ne.s32.totalorder %s134, %s135
      %p147 = scmp.eq.s32.totalorder %s22, 1
      %p148 = por %p146, %p147
      %p150 = scmp.ne.s32.totalorder %s135, %s149
      %p151 = scmp.eq.s32.totalorder %s22, 0
      %p152 = por %p150, %p151
      %s154 = sadd.s32 %s153, 1
      %p157 = scmp.eq.s32.totalorder %s16, 1
      %p158 = scmp.ne.s32.totalorder %s153, %s155
      %p159 = scmp.eq.s32.totalorder %s16, 0
      %p160 = por %p158, %p159
      %p161 = scmp.ne.s32.totalorder %s153, %s155
      %p162 = scmp.eq.s32.totalorder %s21, 1
      %p163 = por %p161, %p162
      %p164 = scmp.ne.s32.totalorder %s155, %s156
      %p165 = scmp.eq.s32.totalorder %s21, 0
      %p166 = por %p164, %p165
      %p167 = scmp.ne.s32.totalorder %s155, %s156
      %p168 = scmp.eq.s32.totalorder %s22, 1
      %p169 = por %p167, %p168
      %p171 = scmp.ne.s32.totalorder %s156, %s170
      %p172 = scmp.eq.s32.totalorder %s22, 0
      %p173 = por %p171, %p172
      %s174 = ssub.s32 %s23, %s35
      %s175 = ssub.s32 %s24, %s31
      %s176 = sor.u32 %s174, %s175
      %p177 = scmp.eq.s32.totalorder %s176, 0
      %s179 = sadd.s32 %s178, 1
      %s180 = scalar_select %p177, %s178, %s179
      %p183 = pneg %p177
      %p184 = scmp.eq.s32.totalorder %s16, 1
      %p185 = por %p183, %p184
      %p186 = scmp.ne.s32.totalorder %s178, %s181
      %p187 = scmp.eq.s32.totalorder %s16, 0
      %p188 = por %p186, %p187
      %p189 = scmp.ne.s32.totalorder %s178, %s181
      %p190 = scmp.eq.s32.totalorder %s21, 1
      %p191 = por %p189, %p190
      %p192 = scmp.ne.s32.totalorder %s181, %s182
      %p193 = scmp.eq.s32.totalorder %s21, 0
      %p194 = por %p192, %p193
      %p195 = scmp.ne.s32.totalorder %s181, %s182
      %p196 = scmp.eq.s32.totalorder %s22, 1
      %p197 = por %p195, %p196
      %p199 = scmp.ne.s32.totalorder %s182, %s198
      %p200 = scmp.eq.s32.totalorder %s22, 0
      %p201 = por %p199, %p200
      %s202 = ssub.s32 %s23, %s35
      %p203 = scmp.eq.s32.totalorder %s202, 0
      %s205 = sadd.s32 %s204, 1
      %s206 = scalar_select %p203, %s204, %s205
      %p209 = pneg %p203
      %p210 = scmp.eq.s32.totalorder %s16, 1
      %p211 = por %p209, %p210
      %p212 = scmp.ne.s32.totalorder %s204, %s207
      %p213 = scmp.eq.s32.totalorder %s16, 0
      %p214 = por %p212, %p213
      %p215 = scmp.ne.s32.totalorder %s204, %s207
      %p216 = scmp.eq.s32.totalorder %s21, 1
      %p217 = por %p215, %p216
      %p218 = scmp.ne.s32.totalorder %s207, %s208
      %p219 = scmp.eq.s32.totalorder %s21, 0
      %p220 = por %p218, %p219
      %p221 = scmp.ne.s32.totalorder %s207, %s208
      %p222 = scmp.eq.s32.totalorder %s22, 1
      %p223 = por %p221, %p222
      %p225 = scmp.ne.s32.totalorder %s208, %s224
      %p226 = scmp.eq.s32.totalorder %s22, 0
      %p227 = por %p225, %p226
      %p228 = scmp.le.s32.totalorder 1, %s16
      %p229 = scmp.lt.s32.totalorder %s16, 3
      %p230 = pnand %p228, %p229
      %p231 = pneg %p230
      // Predicated region
      $region9: #{get_model_forward.8} parent=5 // pred_check
        _
      $region10: #{get_model_forward.8} parent=5 // pred_check_branch
        %233 = sbr.rel (%p230) target = $region12
      $region11: #{get_model_forward.8} parent=5 // pred_region
        %s234 = ssub.s32 %s16, 1
        // Predicated region
        $region13: #{get_model_forward.8} parent=11 // pred_check
          %p235 = pneg %p103
        $region14: #{get_model_forward.8} parent=11 // pred_check_branch
          %237 = sbr.rel (%p235) target = $region16
        $region15: #{get_model_forward.8} parent=11 // pred_region
          %239 = vsyncadd [#allocation3], 0
          %s240 = sshll.u32 %s2, 4
          %s241 = int_to_ptr.hbm [resolvable:$true] %s240
          %s242 = sshll.u32 [#allocation2], 4
          %s243 = int_to_ptr.vmem [resolvable:$true] %s242
          %248 = dma.hbm_to_vmem [thread:$0]  %s241, 128, %s243, [#allocation3], 64, 64, 4
        $region16: #{get_model_forward.8} parent=11 // pred_fallthru
          _
        // Predicated region
        $region17: #{get_model_forward.8} parent=11 // pred_check
          %p249 = pneg %p124
        $region18: #{get_model_forward.8} parent=11 // pred_check_branch
          %251 = sbr.rel (%p249) target = $region20
        $region19: #{get_model_forward.8} parent=11 // pred_region
          %253 = vsyncadd [#allocation5], 0
          %s255 = sshll.u32 %s3, 4
          %s256 = int_to_ptr.hbm [resolvable:$true] %s255
          %s257 = sshll.u32 [#allocation4], 4
          %s258 = int_to_ptr.vmem [resolvable:$true] %s257
          %260 = dma.hbm_to_vmem [thread:$0]  %s256, 16, %s258, [#allocation5]
        $region20: #{get_model_forward.8} parent=11 // pred_fallthru
          _
        // Predicated region
        $region21: #{get_model_forward.8} parent=11 // pred_check
          %p261 = pneg %p145
        $region22: #{get_model_forward.8} parent=11 // pred_check_branch
          %263 = sbr.rel (%p261) target = $region24
        $region23: #{get_model_forward.8} parent=11 // pred_region
          %265 = vsyncadd [#allocation5], 0
          %s266 = sshll.u32 %s4, 4
          %s267 = int_to_ptr.hbm [resolvable:$true] %s266
          %s268 = sshll.u32 [#allocation6], 4
          %s269 = int_to_ptr.vmem [resolvable:$true] %s268
          %274 = dma.hbm_to_vmem [thread:$0]  %s267, 512, %s269, [#allocation5], 128, 128, 8
        $region24: #{get_model_forward.8} parent=11 // pred_fallthru
          _
        // Predicated region
        $region25: #{get_model_forward.8} parent=11 // pred_check
          %p275 = pneg %p166
        $region26: #{get_model_forward.8} parent=11 // pred_check_branch
          %277 = sbr.rel (%p275) target = $region28
        $region27: #{get_model_forward.8} parent=11 // pred_region
          _
        $region28: #{get_model_forward.8} parent=11 // pred_fallthru
          _
      $region12: #{get_model_forward.8} parent=5 // pred_fallthru
        _
      %p278 = scmp.lt.s32.totalorder %s16, 2
      // Predicated region
      $region29: #{get_model_forward.8} parent=5 // pred_check
        %p279 = pneg %p278
      $region30: #{get_model_forward.8} parent=5 // pred_check_branch
        %281 = sbr.rel (%p279) target = $region32
      $region31: #{get_model_forward.8} parent=5 // pred_region
        // Predicated region
        $region33: #{get_model_forward.8} parent=31 // pred_check
          %p282 = pneg %p50
        $region34: #{get_model_forward.8} parent=31 // pred_check_branch
          %284 = sbr.rel (%p282) target = $region36
        $region35: #{get_model_forward.8} parent=31 // pred_region
          %s285 = smul.u32 16, %s24
          %p286 = scmp.lt.s32.totalorder %s23, 1
          %s287 = scalar_select %p286, %s23, 1
          %p288 = scmp.lt.s32.totalorder %s285, 15
          %s289 = scalar_select %p288, %s285, 15
          %s290 = smul.addr %s287, 16
          %s291 = sadd.s32 %s289, %s290
          %s292 = smul.addr %s291, 4
          %s293 = scalar_lea.vmem %s0, %s292
          %s294 = smul.u32 16, %s24
        $region36: #{get_model_forward.8} parent=31 // pred_fallthru
          _
        // Predicated region
        $region37: #{get_model_forward.8} parent=31 // pred_check
          %p295 = pneg %p76
        $region38: #{get_model_forward.8} parent=31 // pred_check_branch
          %297 = sbr.rel (%p295) target = $region40
        $region39: #{get_model_forward.8} parent=31 // pred_region
          %p298 = scmp.lt.s32.totalorder %s23, 1
          %s299 = scalar_select %p298, %s23, 1
          %s300 = smul.addr %s299, 2
          %s301 = smul.addr %s300, 8
          %s302 = scalar_lea.vmem %s1, %s301
        $region40: #{get_model_forward.8} parent=31 // pred_fallthru
          _
      $region32: #{get_model_forward.8} parent=5 // pred_fallthru
        _
      %p303 = scmp.le.s32.totalorder 1, %s16
      %p304 = scmp.lt.s32.totalorder %s16, 3
      %p305 = pnand %p303, %p304
      %p306 = pneg %p305
      // Predicated region
      $region41: #{get_model_forward.8} parent=5 // pred_check
        _
      $region42: #{get_model_forward.8} parent=5 // pred_check_branch
        %308 = sbr.rel (%p305) target = $region44
      $region43: #{get_model_forward.8} parent=5 // pred_region
        %s309 = ssub.s32 %s16, 1
        // Predicated region
        $region45: #{get_model_forward.8} parent=43 // pred_check
          %p310 = pneg %p103
        $region46: #{get_model_forward.8} parent=43 // pred_check_branch
          %312 = sbr.rel (%p310) target = $region48
        $region47: #{get_model_forward.8} parent=43 // pred_region
          %314 = dma.done [#allocation3], 128
        $region48: #{get_model_forward.8} parent=43 // pred_fallthru
          _
        // Predicated region
        $region49: #{get_model_forward.8} parent=43 // pred_check
          %p315 = pneg %p124
        $region50: #{get_model_forward.8} parent=43 // pred_check_branch
          %317 = sbr.rel (%p315) target = $region52
        $region51: #{get_model_forward.8} parent=43 // pred_region
          %319 = dma.done [#allocation5], 16
        $region52: #{get_model_forward.8} parent=43 // pred_fallthru
          _
        // Predicated region
        $region53: #{get_model_forward.8} parent=43 // pred_check
          %p320 = pneg %p145
        $region54: #{get_model_forward.8} parent=43 // pred_check_branch
          %322 = sbr.rel (%p320) target = $region56
        $region55: #{get_model_forward.8} parent=43 // pred_region
          %324 = dma.done [#allocation5], 512
        $region56: #{get_model_forward.8} parent=43 // pred_fallthru
          _
        %s325 = smul.u32 16, %s26
        %p326 = scmp.lt.s32.totalorder %s25, 1
        %s327 = scalar_select %p326, %s25, 1
        %p328 = scmp.lt.s32.totalorder %s325, 15
        %s329 = scalar_select %p328, %s325, 15
        %s330 = smul.addr %s327, 16
        %s331 = sadd.s32 %s329, %s330
        %s332 = smul.addr %s331, 4
        %s333 = scalar_lea.vmem %s0, %s332
        %p334 = pneg %p56
        %p335 = pneg %p53
        %p336 = scmp.lt.s32.totalorder %s25, 1
        %s337 = scalar_select %p336, %s25, 1
        %s338 = smul.addr %s337, 2
        %s339 = smul.addr %s338, 8
        %s340 = scalar_lea.vmem %s1, %s339
        %p341 = pneg %p82
        %p342 = pneg %p79
        %p343 = pneg %p103
        %p344 = pneg %p100
        %p345 = pneg %p124
        %p346 = pneg %p121
        %p347 = pneg %p145
        %p348 = pneg %p142
        %p349 = pneg %p166
        %p350 = pneg %p163
        %p351 = pneg %p194
        %p352 = pneg %p191
        %s353 = smul.u32 16, %s26
        %p354 = scmp.lt.s32.totalorder %s25, 1
        %s355 = scalar_select %p354, %s25, 1
        %p356 = scmp.lt.s32.totalorder %s353, 15
        %s357 = scalar_select %p356, %s353, 15
        %s358 = smul.addr %s355, 16
        %s359 = sadd.s32 %s357, %s358
        %s360 = smul.addr %s359, 4
        %s361 = scalar_lea.vmem %s6, %s360
        %p362 = pneg %p220
        %p363 = pneg %p217
        %p364 = scmp.lt.s32.totalorder %s25, 1
        %s365 = scalar_select %p364, %s25, 1
        %s366 = smul.addr %s365, 2
        %s367 = scalar_lea.vmem %s7, %s366
        %s368 = smul.u32 16, %s26
        %p369 = scmp.lt.s32.totalorder %s25, 1
        %s370 = scalar_select %p369, %s25, 1
        %p371 = scmp.lt.s32.totalorder %s368, 15
        %s372 = scalar_select %p371, %s368, 15
        %s373 = smul.addr %s370, 16
        %s374 = sadd.s32 %s372, %s373
        %s375 = smul.addr %s374, 4
        %s376 = scalar_lea.vmem %s0, %s375
        %s377 = smul.u32 16, %s26
        %p378 = scmp.lt.s32.totalorder %s25, 1
        %s379 = scalar_select %p378, %s25, 1
        %s380 = smul.addr %s379, 2
        %s381 = smul.addr %s380, 8
        %s382 = scalar_lea.vmem %s1, %s381
        %s383 = smul.u32 16, %s26
        %p384 = scmp.lt.s32.totalorder %s25, 1
        %s385 = scalar_select %p384, %s25, 1
        %p386 = scmp.lt.s32.totalorder %s383, 15
        %s387 = scalar_select %p386, %s383, 15
        %s388 = smul.addr %s385, 16
        %s389 = sadd.s32 %s387, %s388
        %s390 = smul.addr %s389, 4
        %s391 = scalar_lea.vmem %s6, %s390
        %s392 = smul.u32 16, %s26
        %p393 = scmp.lt.s32.totalorder %s25, 1
        %s394 = scalar_select %p393, %s25, 1
        %s395 = smul.addr %s394, 2
        %s396 = scalar_lea.vmem %s7, %s395
        %v398 = vld [vmem:[%s376] sm:$0xf]
        %v399 = vld [vmem:[%s376 + $0x4] sm:$0xf]
        %v400 = vld [vmem:[%s376 + $0x8] sm:$0xf]
        %v401 = vld [vmem:[%s376 + $0xc] sm:$0xf]
        %v402 = vld [vmem:[%s376 + $0x10] sm:$0xf]
        %v403 = vld [vmem:[%s376 + $0x14] sm:$0xf]
        %v404 = vld [vmem:[%s376 + $0x18] sm:$0xf]
        %v405 = vld [vmem:[%s376 + $0x1c] sm:$0xf]
        %v406 = vld [vmem:[%s376 + $0x20] sm:$0xf]
        %v407 = vld [vmem:[%s376 + $0x24] sm:$0xf]
        %v408 = vld [vmem:[%s376 + $0x28] sm:$0xf]
        %v409 = vld [vmem:[%s376 + $0x2c] sm:$0xf]
        %v410 = vld [vmem:[%s376 + $0x30] sm:$0xf]
        %v411 = vld [vmem:[%s376 + $0x34] sm:$0xf]
        %v412 = vld [vmem:[%s376 + $0x38] sm:$0xf]
        %v413 = vld [vmem:[%s376 + $0x3c] sm:$0xf]
        %v414 = vld [vmem:[%s382] sm:$0xff]
        %v415 = vld [vmem:[%s382 + $0x8] sm:$0xff]
        %v416 = vpack.c.bf16 %v415, %v414
        %v433 = vunpack.c.l.b16 %v398
        %v434 = vunpack.c.l.b16 %v399
        %v435 = vunpack.c.l.b16 %v400
        %v436 = vunpack.c.l.b16 %v401
        %v437 = vunpack.c.l.b16 %v402
        %v438 = vunpack.c.l.b16 %v403
        %v439 = vunpack.c.l.b16 %v404
        %v440 = vunpack.c.l.b16 %v405
        %v441 = vunpack.c.l.b16 %v406
        %v442 = vunpack.c.l.b16 %v407
        %v443 = vunpack.c.l.b16 %v408
        %v444 = vunpack.c.l.b16 %v409
        %v445 = vunpack.c.l.b16 %v410
        %v446 = vunpack.c.l.b16 %v411
        %v447 = vunpack.c.l.b16 %v412
        %v448 = vunpack.c.l.b16 %v413
        %v449 = vpack.c.b16 %v434, %v433
        %v450 = vpack.c.b16 %v436, %v435
        %v451 = vpack.c.b16 %v438, %v437
        %v452 = vpack.c.b16 %v440, %v439
        %v453 = vpack.c.b16 %v442, %v441
        %v454 = vpack.c.b16 %v444, %v443
        %v455 = vpack.c.b16 %v446, %v445
        %v456 = vpack.c.b16 %v448, %v447
        %vm457 = vcmask 130048
        %v459 = vsel %vm457, %v449, 0
        %v462 = vsel %vm457, %v450, 0
        %v465 = vsel %vm457, %v451, 0
        %v468 = vsel %vm457, %v452, 0
        %v471 = vsel %vm457, %v453, 0
        %v474 = vsel %vm457, %v454, 0
        %v477 = vsel %vm457, %v455, 0
        %v480 = vsel %vm457, %v456, 0
        %482 = vmatpush.bf16.msra.mxu0 0
        %483 = vmatpush.bf16.msra.mxu0 0
        %484 = vmatpush.bf16.msra.mxu0 0
        %485 = vmatpush.bf16.msra.mxu0 0
        %486 = vmatpush.bf16.msra.mxu0 0
        %487 = vmatpush.bf16.msra.mxu0 0
        %488 = vmatpush.bf16.msra.mxu0 0
        %489 = vmatpush.bf16.msra.mxu0 %v416
        %490 = vmatmul.bf16.gmra.mxu0 %v459
        %v491 = vpop.f32.mrf.mxu0
        %v492 = vadd.f32 0.0, %v491
        %v493 = vpop.f32.mrf.mxu0
        %v494 = vadd.f32 0.0, %v493
        %495 = vmatmul.bf16.gmra.mxu0 %v462
        %v496 = vpop.f32.mrf.mxu0
        %v497 = vadd.f32 0.0, %v496
        %v498 = vpop.f32.mrf.mxu0
        %v499 = vadd.f32 0.0, %v498
        %500 = vmatmul.bf16.gmra.mxu0 %v465
        %v501 = vpop.f32.mrf.mxu0
        %v502 = vadd.f32 0.0, %v501
        %v503 = vpop.f32.mrf.mxu0
        %v504 = vadd.f32 0.0, %v503
        %505 = vmatmul.bf16.gmra.mxu0 %v468
        %v506 = vpop.f32.mrf.mxu0
        %v507 = vadd.f32 0.0, %v506
        %v508 = vpop.f32.mrf.mxu0
        %v509 = vadd.f32 0.0, %v508
        %510 = vmatmul.bf16.gmra.mxu0 %v471
        %v511 = vpop.f32.mrf.mxu0
        %v512 = vadd.f32 0.0, %v511
        %v513 = vpop.f32.mrf.mxu0
        %v514 = vadd.f32 0.0, %v513
        %515 = vmatmul.bf16.gmra.mxu0 %v474
        %v516 = vpop.f32.mrf.mxu0
        %v517 = vadd.f32 0.0, %v516
        %v518 = vpop.f32.mrf.mxu0
        %v519 = vadd.f32 0.0, %v518
        %520 = vmatmul.bf16.gmra.mxu0 %v477
        %v521 = vpop.f32.mrf.mxu0
        %v522 = vadd.f32 0.0, %v521
        %v523 = vpop.f32.mrf.mxu0
        %v524 = vadd.f32 0.0, %v523
        %525 = vmatmul.bf16.gmra.mxu0 %v480
        %v526 = vpop.f32.mrf.mxu0
        %v527 = vadd.f32 0.0, %v526
        %v528 = vpop.f32.mrf.mxu0
        %v529 = vadd.f32 0.0, %v528
        %530 = vdwg.mxu0
        %v531 = vpack.c.bf16 %v492, %v492
        %v532 = vpack.c.bf16 %v494, %v494
        %v533 = vpack.c.bf16 %v497, %v497
        %v534 = vpack.c.bf16 %v499, %v499
        %v535 = vpack.c.bf16 %v502, %v502
        %v536 = vpack.c.bf16 %v504, %v504
        %v537 = vpack.c.bf16 %v507, %v507
        %v538 = vpack.c.bf16 %v509, %v509
        %v539 = vpack.c.bf16 %v512, %v512
        %v540 = vpack.c.bf16 %v514, %v514
        %v541 = vpack.c.bf16 %v517, %v517
        %v542 = vpack.c.bf16 %v519, %v519
        %v543 = vpack.c.bf16 %v522, %v522
        %v544 = vpack.c.bf16 %v524, %v524
        %v545 = vpack.c.bf16 %v527, %v527
        %v546 = vpack.c.bf16 %v529, %v529
        %vm547 = vcmask 125952
        %548 = vst.msk [vmem:[%s391] sm:$0xf] %vm547, %v531
        %549 = vst.msk [vmem:[%s391 + $0x4] sm:$0xf] %vm547, %v532
        %550 = vst.msk [vmem:[%s391 + $0x8] sm:$0xf] %vm547, %v533
        %551 = vst.msk [vmem:[%s391 + $0xc] sm:$0xf] %vm547, %v534
        %552 = vst.msk [vmem:[%s391 + $0x10] sm:$0xf] %vm547, %v535
        %553 = vst.msk [vmem:[%s391 + $0x14] sm:$0xf] %vm547, %v536
        %554 = vst.msk [vmem:[%s391 + $0x18] sm:$0xf] %vm547, %v537
        %555 = vst.msk [vmem:[%s391 + $0x1c] sm:$0xf] %vm547, %v538
        %556 = vst.msk [vmem:[%s391 + $0x20] sm:$0xf] %vm547, %v539
        %557 = vst.msk [vmem:[%s391 + $0x24] sm:$0xf] %vm547, %v540
        %558 = vst.msk [vmem:[%s391 + $0x28] sm:$0xf] %vm547, %v541
        %559 = vst.msk [vmem:[%s391 + $0x2c] sm:$0xf] %vm547, %v542
        %560 = vst.msk [vmem:[%s391 + $0x30] sm:$0xf] %vm547, %v543
        %561 = vst.msk [vmem:[%s391 + $0x34] sm:$0xf] %vm547, %v544
        %562 = vst.msk [vmem:[%s391 + $0x38] sm:$0xf] %vm547, %v545
        %563 = vst.msk [vmem:[%s391 + $0x3c] sm:$0xf] %vm547, %v546
        %v564 = vld [vmem:[#allocation2] sm:$0xf]
        %v565 = vld [vmem:[#allocation2 + $0x4] sm:$0xf]
        %v566 = vld [vmem:[#allocation4] sm:$0x1]
        %v568 = vperm.slane %v566, 0
        %v586 = vunpack.c.l.b16 %v531
        %v587 = vunpack.c.l.b16 %v532
        %v588 = vunpack.c.l.b16 %v533
        %v589 = vunpack.c.l.b16 %v534
        %v590 = vunpack.c.l.b16 %v535
        %v591 = vunpack.c.l.b16 %v536
        %v592 = vunpack.c.l.b16 %v537
        %v593 = vunpack.c.l.b16 %v538
        %v594 = vunpack.c.l.b16 %v539
        %v595 = vunpack.c.l.b16 %v540
        %v596 = vunpack.c.l.b16 %v541
        %v597 = vunpack.c.l.b16 %v542
        %v598 = vunpack.c.l.b16 %v543
        %v599 = vunpack.c.l.b16 %v544
        %v600 = vunpack.c.l.b16 %v545
        %v601 = vunpack.c.l.b16 %v546
        %v602 = vpack.c.b16 %v587, %v586
        %v603 = vpack.c.b16 %v589, %v588
        %v604 = vpack.c.b16 %v591, %v590
        %v605 = vpack.c.b16 %v593, %v592
        %v606 = vpack.c.b16 %v595, %v594
        %v607 = vpack.c.b16 %v597, %v596
        %v608 = vpack.c.b16 %v599, %v598
        %v609 = vpack.c.b16 %v601, %v600
        %v612 = vunpack.c.l.b16 %v564
        %v613 = vunpack.c.l.b16 %v565
        %v614 = vpack.c.b16 %v613, %v612
        %v617 = vsel %vm457, %v602, 0
        %v620 = vsel %vm457, %v603, 0
        %v623 = vsel %vm457, %v604, 0
        %v626 = vsel %vm457, %v605, 0
        %v629 = vsel %vm457, %v606, 0
        %v632 = vsel %vm457, %v607, 0
        %v635 = vsel %vm457, %v608, 0
        %v638 = vsel %vm457, %v609, 0
        %640 = vmatpush.bf16.msra.mxu0 0
        %641 = vmatpush.bf16.msra.mxu0 0
        %642 = vmatpush.bf16.msra.mxu0 0
        %643 = vmatpush.bf16.msra.mxu0 0
        %644 = vmatpush.bf16.msra.mxu0 0
        %645 = vmatpush.bf16.msra.mxu0 0
        %646 = vmatpush.bf16.msra.mxu0 0
        %647 = vmatpush.bf16.msra.mxu0 %v614
        %648 = vmatmul.bf16.gmra.mxu0 %v617
        %v649 = vpop.f32.mrf.mxu0
        %v650 = vadd.f32 %v568, %v649
        %v651 = vpop.f32.mrf.mxu0
        %v652 = vadd.f32 %v568, %v651
        %653 = vmatmul.bf16.gmra.mxu0 %v620
        %v654 = vpop.f32.mrf.mxu0
        %v655 = vadd.f32 %v568, %v654
        %v656 = vpop.f32.mrf.mxu0
        %v657 = vadd.f32 %v568, %v656
        %658 = vmatmul.bf16.gmra.mxu0 %v623
        %v659 = vpop.f32.mrf.mxu0
        %v660 = vadd.f32 %v568, %v659
        %v661 = vpop.f32.mrf.mxu0
        %v662 = vadd.f32 %v568, %v661
        %663 = vmatmul.bf16.gmra.mxu0 %v626
        %v664 = vpop.f32.mrf.mxu0
        %v665 = vadd.f32 %v568, %v664
        %v666 = vpop.f32.mrf.mxu0
        %v667 = vadd.f32 %v568, %v666
        %668 = vmatmul.bf16.gmra.mxu0 %v629
        %v669 = vpop.f32.mrf.mxu0
        %v670 = vadd.f32 %v568, %v669
        %v671 = vpop.f32.mrf.mxu0
        %v672 = vadd.f32 %v568, %v671
        %673 = vmatmul.bf16.gmra.mxu0 %v632
        %v674 = vpop.f32.mrf.mxu0
        %v675 = vadd.f32 %v568, %v674
        %v676 = vpop.f32.mrf.mxu0
        %v677 = vadd.f32 %v568, %v676
        %678 = vmatmul.bf16.gmra.mxu0 %v635
        %v679 = vpop.f32.mrf.mxu0
        %v680 = vadd.f32 %v568, %v679
        %v681 = vpop.f32.mrf.mxu0
        %v682 = vadd.f32 %v568, %v681
        %683 = vmatmul.bf16.gmra.mxu0 %v638
        %v684 = vpop.f32.mrf.mxu0
        %v685 = vadd.f32 %v568, %v684
        %v686 = vpop.f32.mrf.mxu0
        %v687 = vadd.f32 %v568, %v686
        %688 = vdwg.mxu0
        %v689 = vmax.f32 %v650, 0.0
        %v690 = vmax.f32 %v652, 0.0
        %v691 = vmax.f32 %v655, 0.0
        %v692 = vmax.f32 %v657, 0.0
        %v693 = vmax.f32 %v660, 0.0
        %v694 = vmax.f32 %v662, 0.0
        %v695 = vmax.f32 %v665, 0.0
        %v696 = vmax.f32 %v667, 0.0
        %v697 = vmax.f32 %v670, 0.0
        %v698 = vmax.f32 %v672, 0.0
        %v699 = vmax.f32 %v675, 0.0
        %v700 = vmax.f32 %v677, 0.0
        %v701 = vmax.f32 %v680, 0.0
        %v702 = vmax.f32 %v682, 0.0
        %v703 = vmax.f32 %v685, 0.0
        %v704 = vmax.f32 %v687, 0.0
        %v705 = vld [vmem:[#allocation6] sm:$0xff]
        %v706 = vld [vmem:[#allocation6 + $0x8] sm:$0xff]
        %v707 = vld [vmem:[#allocation6 + $0x10] sm:$0xff]
        %v708 = vld [vmem:[#allocation6 + $0x18] sm:$0xff]
        %v709 = vpack.c.bf16 %v690, %v689
        %v710 = vpack.c.bf16 %v692, %v691
        %v711 = vpack.c.bf16 %v694, %v693
        %v712 = vpack.c.bf16 %v696, %v695
        %v713 = vpack.c.bf16 %v698, %v697
        %v714 = vpack.c.bf16 %v700, %v699
        %v715 = vpack.c.bf16 %v702, %v701
        %v716 = vpack.c.bf16 %v704, %v703
        %v717 = vld [vmem:[%s5] sm:$0x3]
        %v719 = vperm.slane %v717, 0
        %v720 = vperm.slane %v717, 1
        %v727 = vunpack.c.l.b16 %v705
        %v728 = vunpack.c.h.b16 %v705
        %v729 = vunpack.c.l.b16 %v706
        %v730 = vunpack.c.h.b16 %v706
        %v731 = vunpack.c.l.b16 %v707
        %v732 = vunpack.c.h.b16 %v707
        %v733 = vunpack.c.l.b16 %v708
        %v734 = vunpack.c.h.b16 %v708
        %v735 = vpack.c.b16 %v729, %v727
        %v736 = vpack.c.b16 %v730, %v728
        %v737 = vpack.c.b16 %v733, %v731
        %v738 = vpack.c.b16 %v734, %v732
        %vm743 = vcmask 261120
        %v745 = vsel %vm743, %v709, 0
        %v748 = vsel %vm743, %v710, 0
        %v751 = vsel %vm743, %v711, 0
        %v754 = vsel %vm743, %v712, 0
        %v757 = vsel %vm743, %v713, 0
        %v760 = vsel %vm743, %v714, 0
        %v763 = vsel %vm743, %v715, 0
        %v766 = vsel %vm743, %v716, 0
        %768 = vmatpush.bf16.msra.mxu0 0
        %769 = vmatpush.bf16.msra.mxu0 0
        %770 = vmatpush.bf16.msra.mxu0 0
        %771 = vmatpush.bf16.msra.mxu0 0
        %772 = vmatpush.bf16.msra.mxu0 0
        %773 = vmatpush.bf16.msra.mxu0 0
        %774 = vmatpush.bf16.msra.mxu0 %v737
        %775 = vmatpush.bf16.msra.mxu0 %v735
        %776 = vmatmul.bf16.gmra.mxu0 %v745
        %v777 = vpop.f32.mrf.mxu0
        %v778 = vadd.f32 %v719, %v777
        %v779 = vpop.f32.mrf.mxu0
        %v780 = vadd.f32 %v719, %v779
        %781 = vmatmul.bf16.gmra.mxu0 %v748
        %v782 = vpop.f32.mrf.mxu0
        %v783 = vadd.f32 %v719, %v782
        %v784 = vpop.f32.mrf.mxu0
        %v785 = vadd.f32 %v719, %v784
        %786 = vmatmul.bf16.gmra.mxu0 %v751
        %v787 = vpop.f32.mrf.mxu0
        %v788 = vadd.f32 %v719, %v787
        %v789 = vpop.f32.mrf.mxu0
        %v790 = vadd.f32 %v719, %v789
        %791 = vmatmul.bf16.gmra.mxu0 %v754
        %v792 = vpop.f32.mrf.mxu0
        %v793 = vadd.f32 %v719, %v792
        %v794 = vpop.f32.mrf.mxu0
        %v795 = vadd.f32 %v719, %v794
        %796 = vmatmul.bf16.gmra.mxu0 %v757
        %v797 = vpop.f32.mrf.mxu0
        %v798 = vadd.f32 %v719, %v797
        %v799 = vpop.f32.mrf.mxu0
        %v800 = vadd.f32 %v719, %v799
        %801 = vmatmul.bf16.gmra.mxu0 %v760
        %v802 = vpop.f32.mrf.mxu0
        %v803 = vadd.f32 %v719, %v802
        %v804 = vpop.f32.mrf.mxu0
        %v805 = vadd.f32 %v719, %v804
        %806 = vmatmul.bf16.gmra.mxu0 %v763
        %v807 = vpop.f32.mrf.mxu0
        %v808 = vadd.f32 %v719, %v807
        %v809 = vpop.f32.mrf.mxu0
        %v810 = vadd.f32 %v719, %v809
        %811 = vmatmul.bf16.gmra.mxu0 %v766
        %v812 = vpop.f32.mrf.mxu0
        %v813 = vadd.f32 %v719, %v812
        %v814 = vpop.f32.mrf.mxu0
        %v815 = vadd.f32 %v719, %v814
        %816 = vdwg.mxu0
        %817 = vmatpush.bf16.msra.mxu0 0
        %818 = vmatpush.bf16.msra.mxu0 0
        %819 = vmatpush.bf16.msra.mxu0 0
        %820 = vmatpush.bf16.msra.mxu0 0
        %821 = vmatpush.bf16.msra.mxu0 0
        %822 = vmatpush.bf16.msra.mxu0 0
        %823 = vmatpush.bf16.msra.mxu0 %v738
        %824 = vmatpush.bf16.msra.mxu0 %v736
        %825 = vmatmul.bf16.gmra.mxu0 %v745
        %v826 = vpop.f32.mrf.mxu0
        %v827 = vadd.f32 %v720, %v826
        %v828 = vpop.f32.mrf.mxu0
        %v829 = vadd.f32 %v720, %v828
        %830 = vmatmul.bf16.gmra.mxu0 %v748
        %v831 = vpop.f32.mrf.mxu0
        %v832 = vadd.f32 %v720, %v831
        %v833 = vpop.f32.mrf.mxu0
        %v834 = vadd.f32 %v720, %v833
        %835 = vmatmul.bf16.gmra.mxu0 %v751
        %v836 = vpop.f32.mrf.mxu0
        %v837 = vadd.f32 %v720, %v836
        %v838 = vpop.f32.mrf.mxu0
        %v839 = vadd.f32 %v720, %v838
        %840 = vmatmul.bf16.gmra.mxu0 %v754
        %v841 = vpop.f32.mrf.mxu0
        %v842 = vadd.f32 %v720, %v841
        %v843 = vpop.f32.mrf.mxu0
        %v844 = vadd.f32 %v720, %v843
        %845 = vmatmul.bf16.gmra.mxu0 %v757
        %v846 = vpop.f32.mrf.mxu0
        %v847 = vadd.f32 %v720, %v846
        %v848 = vpop.f32.mrf.mxu0
        %v849 = vadd.f32 %v720, %v848
        %850 = vmatmul.bf16.gmra.mxu0 %v760
        %v851 = vpop.f32.mrf.mxu0
        %v852 = vadd.f32 %v720, %v851
        %v853 = vpop.f32.mrf.mxu0
        %v854 = vadd.f32 %v720, %v853
        %855 = vmatmul.bf16.gmra.mxu0 %v763
        %v856 = vpop.f32.mrf.mxu0
        %v857 = vadd.f32 %v720, %v856
        %v858 = vpop.f32.mrf.mxu0
        %v859 = vadd.f32 %v720, %v858
        %860 = vmatmul.bf16.gmra.mxu0 %v766
        %v861 = vpop.f32.mrf.mxu0
        %v862 = vadd.f32 %v720, %v861
        %v863 = vpop.f32.mrf.mxu0
        %v864 = vadd.f32 %v720, %v863
        %865 = vdwg.mxu0
        %v866 = vmax.f32 %v778, %v783
        %v867 = vmax.f32 %v780, %v785
        %v868 = vmax.f32 %v866, %v788
        %v869 = vmax.f32 %v867, %v790
        %v870 = vmax.f32 %v868, %v793
        %v871 = vmax.f32 %v869, %v795
        %v872 = vmax.f32 %v870, %v798
        %v873 = vmax.f32 %v871, %v800
        %v874 = vmax.f32 %v872, %v803
        %v875 = vmax.f32 %v873, %v805
        %v876 = vmax.f32 %v874, %v808
        %v877 = vmax.f32 %v875, %v810
        %v878 = vmax.f32 %v876, %v813
        %v879 = vmax.f32 %v877, %v815
        %v880 = vmax.f32 %v878, %v879
        %v881 = vrot.slane %v880, 4
        %v882 = vmax.f32 %v880, %v881
        %v883 = vrot.slane %v882, 2
        %v884 = vmax.f32 %v882, %v883
        %v885 = vrot.slane %v884, 1
        %v886 = vmax.f32 %v884, %v885
        %v887 = vmax.f32 %v827, %v832
        %v888 = vmax.f32 %v829, %v834
        %v889 = vmax.f32 %v887, %v837
        %v890 = vmax.f32 %v888, %v839
        %v891 = vmax.f32 %v889, %v842
        %v892 = vmax.f32 %v890, %v844
        %v893 = vmax.f32 %v891, %v847
        %v894 = vmax.f32 %v892, %v849
        %v895 = vmax.f32 %v893, %v852
        %v896 = vmax.f32 %v894, %v854
        %v897 = vmax.f32 %v895, %v857
        %v898 = vmax.f32 %v896, %v859
        %v899 = vmax.f32 %v897, %v862
        %v900 = vmax.f32 %v898, %v864
        %v901 = vmax.f32 %v899, %v900
        %v902 = vrot.slane %v901, 4
        %v903 = vmax.f32 %v901, %v902
        %v904 = vrot.slane %v903, 2
        %v905 = vmax.f32 %v903, %v904
        %v906 = vrot.slane %v905, 1
        %v907 = vmax.f32 %v905, %v906
        %p908 = scmp.eq.s32.totalorder %s26, 0
        // Predicated region
        $region57: #{get_model_forward.8} parent=43 // pred_check
          %p909 = pneg %p908
        $region58: #{get_model_forward.8} parent=43 // pred_check_branch
          %911 = sbr.rel (%p909) target = $region60
        $region59: #{get_model_forward.8} parent=43 // pred_region
          %v914 = vrot.slane %v907, 7
          %vm915 = vcmask 1040384
          %v916 = vsel %vm915, %v886, %v914
          %v918 = vlaneseq
          %vm919 = vcmp.ge.s32.totalorder %v918, 0
          %vm920 = vcmp.lt.s32.totalorder %v918, 256
          %vm921 = vmand %vm919, %vm920
          %922 = vst.msk [vmem:[%s396] sm:$0x3] %vm921, %v916
        $region60: #{get_model_forward.8} parent=43 // pred_fallthru
          _
        %p923 = scmp.gt.s32.totalorder %s26, 0
        // Predicated region
        $region61: #{get_model_forward.8} parent=43 // pred_check
          %p924 = pneg %p923
        $region62: #{get_model_forward.8} parent=43 // pred_check_branch
          %926 = sbr.rel (%p924) target = $region64
        $region63: #{get_model_forward.8} parent=43 // pred_region
          %v927 = vld [vmem:[%s396] sm:$0x3]
          %v930 = vrot.slane %v907, 7
          %vm931 = vcmask 1040384
          %v932 = vsel %vm931, %v886, %v930
          %v934 = vmax.f32 %v927, %v932
          %v935 = vlaneseq
          %vm936 = vcmp.ge.s32.totalorder %v935, 0
          %vm937 = vcmp.lt.s32.totalorder %v935, 256
          %vm938 = vmand %vm936, %vm937
          %939 = vst.msk [vmem:[%s396] sm:$0x3] %vm938, %v934
        $region64: #{get_model_forward.8} parent=43 // pred_fallthru
          _
        %s940 = smul.u32 16, %s26
        %p941 = scmp.lt.s32.totalorder %s25, 1
        %s942 = scalar_select %p941, %s25, 1
        %p943 = scmp.lt.s32.totalorder %s940, 15
        %s944 = scalar_select %p943, %s940, 15
        %s945 = smul.addr %s942, 16
        %s946 = sadd.s32 %s944, %s945
        %s947 = smul.addr %s946, 4
        %s948 = scalar_lea.vmem %s6, %s947
        %p949 = scmp.lt.s32.totalorder %s25, 1
        %s950 = scalar_select %p949, %s25, 1
        %s951 = smul.addr %s950, 2
        %s952 = scalar_lea.vmem %s7, %s951
        // Predicated region
        $region65: #{get_model_forward.8} parent=43 // pred_check
          %p953 = pneg %p191
        $region66: #{get_model_forward.8} parent=43 // pred_check_branch
          %955 = sbr.rel (%p953) target = $region68
        $region67: #{get_model_forward.8} parent=43 // pred_region
          %s956 = smul.u32 16, %s26
        $region68: #{get_model_forward.8} parent=43 // pred_fallthru
          _
        // Predicated region
        $region69: #{get_model_forward.8} parent=43 // pred_check
          %p957 = pneg %p217
        $region70: #{get_model_forward.8} parent=43 // pred_check_branch
          %959 = sbr.rel (%p957) target = $region72
        $region71: #{get_model_forward.8} parent=43 // pred_region
          _
        $region72: #{get_model_forward.8} parent=43 // pred_fallthru
          _
      $region44: #{get_model_forward.8} parent=5 // pred_fallthru
        _
      %p960 = scmp.le.s32.totalorder 2, %s16
      // Predicated region
      $region73: #{get_model_forward.8} parent=5 // pred_check
        %p961 = pneg %p960
      $region74: #{get_model_forward.8} parent=5 // pred_check_branch
        %963 = sbr.rel (%p961) target = $region76
      $region75: #{get_model_forward.8} parent=5 // pred_region
        %s964 = ssub.s32 %s16, 2
        // Predicated region
        $region77: #{get_model_forward.8} parent=75 // pred_check
          %p965 = pneg %p197
        $region78: #{get_model_forward.8} parent=75 // pred_check_branch
          %967 = sbr.rel (%p965) target = $region80
        $region79: #{get_model_forward.8} parent=75 // pred_region
          %s968 = smul.u32 16, %s28
          %p969 = scmp.lt.s32.totalorder %s27, 1
          %s970 = scalar_select %p969, %s27, 1
          %p971 = scmp.lt.s32.totalorder %s968, 15
          %s972 = scalar_select %p971, %s968, 15
          %s973 = smul.addr %s970, 16
          %s974 = sadd.s32 %s972, %s973
          %s975 = smul.addr %s974, 4
          %s976 = scalar_lea.vmem %s6, %s975
        $region80: #{get_model_forward.8} parent=75 // pred_fallthru
          _
        // Predicated region
        $region81: #{get_model_forward.8} parent=75 // pred_check
          %p977 = pneg %p223
        $region82: #{get_model_forward.8} parent=75 // pred_check_branch
          %979 = sbr.rel (%p977) target = $region84
        $region83: #{get_model_forward.8} parent=75 // pred_region
          %p980 = scmp.lt.s32.totalorder %s27, 1
          %s981 = scalar_select %p980, %s27, 1
          %s982 = smul.addr %s981, 2
          %s983 = scalar_lea.vmem %s7, %s982
        $region84: #{get_model_forward.8} parent=75 // pred_fallthru
          _
      $region76: #{get_model_forward.8} parent=5 // pred_fallthru
        _
    $region6: #{get_model_forward.8} parent=1 // loop_footer
      %s20 = sadd.s32 1, %s16
    $region7: #{get_model_forward.8} parent=1 // loop_footer_branch
      %15 = sbr.rel target = $region3
    $region8: #{get_model_forward.8} parent=1 // loop_exit
      _
    %984 = vsyncpa [#allocation3], 1
    %s985 = scalar_lea.sflag [#allocation3], 1
    %986 = vsyncpa %s985, 1
    %987 = vsyncpa [#allocation5], 1

// kernel: get_model_forward.5
$region0: #{get_model_forward.5}
  #allocation0 [shape = 'u32[]', space=smem, size = 0x4, offset = 0x4, fixed_abs, tag = 'smem constant byte address 0x4 - core index']
  #allocation1 [shape = 'u32[72,128]{1,0:T(1,128)}', space=vmem, size = 0x9000, scoped, tag = 'internal scratch']
  #allocation2 [shape = 'f32[1,256]{1,0:T(1,128)}', space=vmem, size = 0x400, scoped, tag = 'scratch operand']
  %s0 = inlined_call_operand.vmem [shape: f32[2,128,9], index: 0, kind: input, shape index: {}]
  %s1 = inlined_call_operand.hbm [shape: bf16[9,16], index: 1, kind: input, shape index: {}]
  %s2 = inlined_call_operand.vmem [shape: f32[1,16], index: 2, kind: input, shape index: {}]
  %s3 = inlined_call_operand.hbm [shape: bf16[16,32], index: 3, kind: input, shape index: {}]
  %s4 = inlined_call_operand.vmem [shape: f32[1,32], index: 4, kind: input, shape index: {}]
  %s5 = inlined_call_operand.vmem [shape: bf16[32,256], index: 5, kind: input, shape index: {}]
  %s6 = inlined_call_operand.vmem [shape: f32[1,256], index: 6, kind: input, shape index: {}]
  %s7 = inlined_call_operand.vmem [shape: bf16[256,128], index: 7, kind: input, shape index: {}]
  %s8 = inlined_call_operand.hbm [shape: f32[1,128], index: 8, kind: input, shape index: {}]
  %s9 = inlined_call_operand.vmem [shape: bf16[128,64], index: 9, kind: input, shape index: {}]
  %s10 = inlined_call_operand.hbm [shape: f32[1,64], index: 10, kind: input, shape index: {}]
  %s11 = inlined_call_operand.vmem [shape: bf16[64,9], index: 11, kind: input, shape index: {}]
  %s12 = inlined_call_operand.hbm [shape: f32[1,9], index: 12, kind: input, shape index: {}]
  %s13 = inlined_call_operand.vmem [shape: f32[2,1,9], index: 13, kind: output, shape index: {}]
  %s14 = sld [smem:[#allocation0]]
  $region117: #{get_model_forward.5} parent=0
    _
  %s16 = ssub.s32 1, %s14
  %s17 = scalar_select 0, %s16, %s14
  $region1: #{get_model_forward.5} parent=0
    #allocation3 [shape = 'u8[4096]{0}', space=vmem, size = 0x1000, scoped, tag = 'input window, operand 1, single buffered']
    #allocation4 [shape = 's32[2]{0}', space=sflag, size = 0x8, scoped, tag = 'scoped memory for get_model_forward.5']
    #allocation5 [shape = 'u8[4096]{0}', space=vmem, size = 0x1000, scoped, tag = 'input window, operand 3, single buffered']
    #allocation6 [shape = 's32[1]{0}', space=sflag, size = 0x4, scoped, tag = 'scoped memory for get_model_forward.5']
    #allocation7 [shape = 'u8[512]{0}', space=vmem, size = 0x400, scoped, tag = 'input window, operand 8, single buffered']
    #allocation8 [shape = 'u8[512]{0}', space=vmem, size = 0x400, scoped, tag = 'input window, operand 10, single buffered']
    #allocation9 [shape = 's32[1]{0}', space=sflag, size = 0x4, scoped, tag = 'scoped memory for get_model_forward.5']
    #allocation10 [shape = 'u8[512]{0}', space=vmem, size = 0x400, scoped, tag = 'input window, operand 12, single buffered']
    %18 = vsyncpa [#allocation4], 0
    %19 = vsyncpa [#allocation6], 0
    %20 = vsyncpa [#allocation9], 0
    loop: start=0, step=1, limit=4
    $region2: #{get_model_forward.5} parent=1 // loop_pre_header
      _
    $region3: #{get_model_forward.5} parent=1 // loop_header
      %s22 = sphi 0, %s26
      %p23 = scmp.ge.s32.totalorder %s22, 4
      %s29 = sphi 0, %s41
      %s30 = sphi 0, %s37
      %s31 = sphi 0, %s29
      %s32 = sphi 0, %s30
      %s33 = sphi 0, %s31
      %s34 = sphi 0, %s32
      %s46 = sphi 0, %s48
      %s49 = sphi 0, %s46
      %s50 = sphi 0, %s49
      %s66 = sphi 0, %s50
      %s70 = sphi 0, %s70
      %s72 = sphi 0, %s70
      %s73 = sphi 0, %s72
      %s87 = sphi 0, %s73
      %s91 = sphi 0, %s91
      %s93 = sphi 0, %s91
      %s94 = sphi 0, %s93
      %s108 = sphi 0, %s94
      %s112 = sphi 0, %s112
      %s114 = sphi 0, %s112
      %s115 = sphi 0, %s114
      %s129 = sphi 0, %s115
      %s133 = sphi 0, %s133
      %s135 = sphi 0, %s133
      %s136 = sphi 0, %s135
      %s150 = sphi 0, %s136
      %s154 = sphi 0, %s154
      %s156 = sphi 0, %s154
      %s157 = sphi 0, %s156
      %s171 = sphi 0, %s157
      %s175 = sphi 0, %s175
      %s177 = sphi 0, %s175
      %s178 = sphi 0, %s177
      %s192 = sphi 0, %s178
      %s196 = sphi 0, %s196
      %s198 = sphi 0, %s196
      %s199 = sphi 0, %s198
      %s213 = sphi 0, %s199
      %s217 = sphi 0, %s217
      %s219 = sphi 0, %s217
      %s220 = sphi 0, %s219
      %s234 = sphi 0, %s220
      %s238 = sphi 0, %s238
      %s240 = sphi 0, %s238
      %s241 = sphi 0, %s240
      %s255 = sphi 0, %s241
      %s259 = sphi 0, %s259
      %s261 = sphi 0, %s259
      %s262 = sphi 0, %s261
      %s276 = sphi 0, %s262
      %s280 = sphi 0, %s280
      %s282 = sphi 0, %s280
      %s283 = sphi 0, %s282
      %s297 = sphi 0, %s283
      %s301 = sphi 0, %s301
      %s303 = sphi 0, %s301
      %s304 = sphi 0, %s303
      %s318 = sphi 0, %s304
      %s324 = sphi 0, %s326
      %s327 = sphi 0, %s324
      %s328 = sphi 0, %s327
      %s344 = sphi 0, %s328
    $region4: #{get_model_forward.5} parent=1 // loop_header_branch
      %25 = sbr.rel (%p23) target = $region8
    $region5: #{get_model_forward.5} parent=1 // loop_body
      %s27 = ssub.s32 %s22, 1
      %s28 = ssub.s32 %s22, 2
      %s35 = sadd.s32 1, %s30
      %p36 = scmp.ge.s32.totalorder %s35, 1
      %s37 = scalar_select %p36, 0, %s35
      %s38 = sadd.s32 1, %s29
      %s39 = scalar_select %p36, %s38, %s29
      %p40 = scmp.ge.s32.totalorder %s39, 2
      %s41 = scalar_select %p40, 0, %s39
      %s42 = ssub.s32 %s29, %s41
      %s43 = ssub.s32 %s30, %s37
      %s44 = sor.u32 %s42, %s43
      %p45 = scmp.eq.s32.totalorder %s44, 0
      %s47 = sadd.s32 %s46, 1
      %s48 = scalar_select %p45, %s46, %s47
      %p51 = pneg %p45
      %p52 = scmp.eq.s32.totalorder %s22, 1
      %p53 = por %p51, %p52
      %p54 = scmp.ne.s32.totalorder %s46, %s49
      %p55 = scmp.eq.s32.totalorder %s22, 0
      %p56 = por %p54, %p55
      %p57 = scmp.ne.s32.totalorder %s46, %s49
      %p58 = scmp.eq.s32.totalorder %s27, 1
      %p59 = por %p57, %p58
      %p60 = scmp.ne.s32.totalorder %s49, %s50
      %p61 = scmp.eq.s32.totalorder %s27, 0
      %p62 = por %p60, %p61
      %p63 = scmp.ne.s32.totalorder %s49, %s50
      %p64 = scmp.eq.s32.totalorder %s28, 1
      %p65 = por %p63, %p64
      %p67 = scmp.ne.s32.totalorder %s50, %s66
      %p68 = scmp.eq.s32.totalorder %s28, 0
      %p69 = por %p67, %p68
      %s71 = sadd.s32 %s70, 1
      %p74 = scmp.eq.s32.totalorder %s22, 1
      %p75 = scmp.ne.s32.totalorder %s70, %s72
      %p76 = scmp.eq.s32.totalorder %s22, 0
      %p77 = por %p75, %p76
      %p78 = scmp.ne.s32.totalorder %s70, %s72
      %p79 = scmp.eq.s32.totalorder %s27, 1
      %p80 = por %p78, %p79
      %p81 = scmp.ne.s32.totalorder %s72, %s73
      %p82 = scmp.eq.s32.totalorder %s27, 0
      %p83 = por %p81, %p82
      %p84 = scmp.ne.s32.totalorder %s72, %s73
      %p85 = scmp.eq.s32.totalorder %s28, 1
      %p86 = por %p84, %p85
      %p88 = scmp.ne.s32.totalorder %s73, %s87
      %p89 = scmp.eq.s32.totalorder %s28, 0
      %p90 = por %p88, %p89
      %s92 = sadd.s32 %s91, 1
      %p95 = scmp.eq.s32.totalorder %s22, 1
      %p96 = scmp.ne.s32.totalorder %s91, %s93
      %p97 = scmp.eq.s32.totalorder %s22, 0
      %p98 = por %p96, %p97
      %p99 = scmp.ne.s32.totalorder %s91, %s93
      %p100 = scmp.eq.s32.totalorder %s27, 1
      %p101 = por %p99, %p100
      %p102 = scmp.ne.s32.totalorder %s93, %s94
      %p103 = scmp.eq.s32.totalorder %s27, 0
      %p104 = por %p102, %p103
      %p105 = scmp.ne.s32.totalorder %s93, %s94
      %p106 = scmp.eq.s32.totalorder %s28, 1
      %p107 = por %p105, %p106
      %p109 = scmp.ne.s32.totalorder %s94, %s108
      %p110 = scmp.eq.s32.totalorder %s28, 0
      %p111 = por %p109, %p110
      %s113 = sadd.s32 %s112, 1
      %p116 = scmp.eq.s32.totalorder %s22, 1
      %p117 = scmp.ne.s32.totalorder %s112, %s114
      %p118 = scmp.eq.s32.totalorder %s22, 0
      %p119 = por %p117, %p118
      %p120 = scmp.ne.s32.totalorder %s112, %s114
      %p121 = scmp.eq.s32.totalorder %s27, 1
      %p122 = por %p120, %p121
      %p123 = scmp.ne.s32.totalorder %s114, %s115
      %p124 = scmp.eq.s32.totalorder %s27, 0
      %p125 = por %p123, %p124
      %p126 = scmp.ne.s32.totalorder %s114, %s115
      %p127 = scmp.eq.s32.totalorder %s28, 1
      %p128 = por %p126, %p127
      %p130 = scmp.ne.s32.totalorder %s115, %s129
      %p131 = scmp.eq.s32.totalorder %s28, 0
      %p132 = por %p130, %p131
      %s134 = sadd.s32 %s133, 1
      %p137 = scmp.eq.s32.totalorder %s22, 1
      %p138 = scmp.ne.s32.totalorder %s133, %s135
      %p139 = scmp.eq.s32.totalorder %s22, 0
      %p140 = por %p138, %p139
      %p141 = scmp.ne.s32.totalorder %s133, %s135
      %p142 = scmp.eq.s32.totalorder %s27, 1
      %p143 = por %p141, %p142
      %p144 = scmp.ne.s32.totalorder %s135, %s136
      %p145 = scmp.eq.s32.totalorder %s27, 0
      %p146 = por %p144, %p145
      %p147 = scmp.ne.s32.totalorder %s135, %s136
      %p148 = scmp.eq.s32.totalorder %s28, 1
      %p149 = por %p147, %p148
      %p151 = scmp.ne.s32.totalorder %s136, %s150
      %p152 = scmp.eq.s32.totalorder %s28, 0
      %p153 = por %p151, %p152
      %s155 = sadd.s32 %s154, 1
      %p158 = scmp.eq.s32.totalorder %s22, 1
      %p159 = scmp.ne.s32.totalorder %s154, %s156
      %p160 = scmp.eq.s32.totalorder %s22, 0
      %p161 = por %p159, %p160
      %p162 = scmp.ne.s32.totalorder %s154, %s156
      %p163 = scmp.eq.s32.totalorder %s27, 1
      %p164 = por %p162, %p163
      %p165 = scmp.ne.s32.totalorder %s156, %s157
      %p166 = scmp.eq.s32.totalorder %s27, 0
      %p167 = por %p165, %p166
      %p168 = scmp.ne.s32.totalorder %s156, %s157
      %p169 = scmp.eq.s32.totalorder %s28, 1
      %p170 = por %p168, %p169
      %p172 = scmp.ne.s32.totalorder %s157, %s171
      %p173 = scmp.eq.s32.totalorder %s28, 0
      %p174 = por %p172, %p173
      %s176 = sadd.s32 %s175, 1
      %p179 = scmp.eq.s32.totalorder %s22, 1
      %p180 = scmp.ne.s32.totalorder %s175, %s177
      %p181 = scmp.eq.s32.totalorder %s22, 0
      %p182 = por %p180, %p181
      %p183 = scmp.ne.s32.totalorder %s175, %s177
      %p184 = scmp.eq.s32.totalorder %s27, 1
      %p185 = por %p183, %p184
      %p186 = scmp.ne.s32.totalorder %s177, %s178
      %p187 = scmp.eq.s32.totalorder %s27, 0
      %p188 = por %p186, %p187
      %p189 = scmp.ne.s32.totalorder %s177, %s178
      %p190 = scmp.eq.s32.totalorder %s28, 1
      %p191 = por %p189, %p190
      %p193 = scmp.ne.s32.totalorder %s178, %s192
      %p194 = scmp.eq.s32.totalorder %s28, 0
      %p195 = por %p193, %p194
      %s197 = sadd.s32 %s196, 1
      %p200 = scmp.eq.s32.totalorder %s22, 1
      %p201 = scmp.ne.s32.totalorder %s196, %s198
      %p202 = scmp.eq.s32.totalorder %s22, 0
      %p203 = por %p201, %p202
      %p204 = scmp.ne.s32.totalorder %s196, %s198
      %p205 = scmp.eq.s32.totalorder %s27, 1
      %p206 = por %p204, %p205
      %p207 = scmp.ne.s32.totalorder %s198, %s199
      %p208 = scmp.eq.s32.totalorder %s27, 0
      %p209 = por %p207, %p208
      %p210 = scmp.ne.s32.totalorder %s198, %s199
      %p211 = scmp.eq.s32.totalorder %s28, 1
      %p212 = por %p210, %p211
      %p214 = scmp.ne.s32.totalorder %s199, %s213
      %p215 = scmp.eq.s32.totalorder %s28, 0
      %p216 = por %p214, %p215
      %s218 = sadd.s32 %s217, 1
      %p221 = scmp.eq.s32.totalorder %s22, 1
      %p222 = scmp.ne.s32.totalorder %s217, %s219
      %p223 = scmp.eq.s32.totalorder %s22, 0
      %p224 = por %p222, %p223
      %p225 = scmp.ne.s32.totalorder %s217, %s219
      %p226 = scmp.eq.s32.totalorder %s27, 1
      %p227 = por %p225, %p226
      %p228 = scmp.ne.s32.totalorder %s219, %s220
      %p229 = scmp.eq.s32.totalorder %s27, 0
      %p230 = por %p228, %p229
      %p231 = scmp.ne.s32.totalorder %s219, %s220
      %p232 = scmp.eq.s32.totalorder %s28, 1
      %p233 = por %p231, %p232
      %p235 = scmp.ne.s32.totalorder %s220, %s234
      %p236 = scmp.eq.s32.totalorder %s28, 0
      %p237 = por %p235, %p236
      %s239 = sadd.s32 %s238, 1
      %p242 = scmp.eq.s32.totalorder %s22, 1
      %p243 = scmp.ne.s32.totalorder %s238, %s240
      %p244 = scmp.eq.s32.totalorder %s22, 0
      %p245 = por %p243, %p244
      %p246 = scmp.ne.s32.totalorder %s238, %s240
      %p247 = scmp.eq.s32.totalorder %s27, 1
      %p248 = por %p246, %p247
      %p249 = scmp.ne.s32.totalorder %s240, %s241
      %p250 = scmp.eq.s32.totalorder %s27, 0
      %p251 = por %p249, %p250
      %p252 = scmp.ne.s32.totalorder %s240, %s241
      %p253 = scmp.eq.s32.totalorder %s28, 1
      %p254 = por %p252, %p253
      %p256 = scmp.ne.s32.totalorder %s241, %s255
      %p257 = scmp.eq.s32.totalorder %s28, 0
      %p258 = por %p256, %p257
      %s260 = sadd.s32 %s259, 1
      %p263 = scmp.eq.s32.totalorder %s22, 1
      %p264 = scmp.ne.s32.totalorder %s259, %s261
      %p265 = scmp.eq.s32.totalorder %s22, 0
      %p266 = por %p264, %p265
      %p267 = scmp.ne.s32.totalorder %s259, %s261
      %p268 = scmp.eq.s32.totalorder %s27, 1
      %p269 = por %p267, %p268
      %p270 = scmp.ne.s32.totalorder %s261, %s262
      %p271 = scmp.eq.s32.totalorder %s27, 0
      %p272 = por %p270, %p271
      %p273 = scmp.ne.s32.totalorder %s261, %s262
      %p274 = scmp.eq.s32.totalorder %s28, 1
      %p275 = por %p273, %p274
      %p277 = scmp.ne.s32.totalorder %s262, %s276
      %p278 = scmp.eq.s32.totalorder %s28, 0
      %p279 = por %p277, %p278
      %s281 = sadd.s32 %s280, 1
      %p284 = scmp.eq.s32.totalorder %s22, 1
      %p285 = scmp.ne.s32.totalorder %s280, %s282
      %p286 = scmp.eq.s32.totalorder %s22, 0
      %p287 = por %p285, %p286
      %p288 = scmp.ne.s32.totalorder %s280, %s282
      %p289 = scmp.eq.s32.totalorder %s27, 1
      %p290 = por %p288, %p289
      %p291 = scmp.ne.s32.totalorder %s282, %s283
      %p292 = scmp.eq.s32.totalorder %s27, 0
      %p293 = por %p291, %p292
      %p294 = scmp.ne.s32.totalorder %s282, %s283
      %p295 = scmp.eq.s32.totalorder %s28, 1
      %p296 = por %p294, %p295
      %p298 = scmp.ne.s32.totalorder %s283, %s297
      %p299 = scmp.eq.s32.totalorder %s28, 0
      %p300 = por %p298, %p299
      %s302 = sadd.s32 %s301, 1
      %p305 = scmp.eq.s32.totalorder %s22, 1
      %p306 = scmp.ne.s32.totalorder %s301, %s303
      %p307 = scmp.eq.s32.totalorder %s22, 0
      %p308 = por %p306, %p307
      %p309 = scmp.ne.s32.totalorder %s301, %s303
      %p310 = scmp.eq.s32.totalorder %s27, 1
      %p311 = por %p309, %p310
      %p312 = scmp.ne.s32.totalorder %s303, %s304
      %p313 = scmp.eq.s32.totalorder %s27, 0
      %p314 = por %p312, %p313
      %p315 = scmp.ne.s32.totalorder %s303, %s304
      %p316 = scmp.eq.s32.totalorder %s28, 1
      %p317 = por %p315, %p316
      %p319 = scmp.ne.s32.totalorder %s304, %s318
      %p320 = scmp.eq.s32.totalorder %s28, 0
      %p321 = por %p319, %p320
      %s322 = ssub.s32 %s29, %s41
      %p323 = scmp.eq.s32.totalorder %s322, 0
      %s325 = sadd.s32 %s324, 1
      %s326 = scalar_select %p323, %s324, %s325
      %p329 = pneg %p323
      %p330 = scmp.eq.s32.totalorder %s22, 1
      %p331 = por %p329, %p330
      %p332 = scmp.ne.s32.totalorder %s324, %s327
      %p333 = scmp.eq.s32.totalorder %s22, 0
      %p334 = por %p332, %p333
      %p335 = scmp.ne.s32.totalorder %s324, %s327
      %p336 = scmp.eq.s32.totalorder %s27, 1
      %p337 = por %p335, %p336
      %p338 = scmp.ne.s32.totalorder %s327, %s328
      %p339 = scmp.eq.s32.totalorder %s27, 0
      %p340 = por %p338, %p339
      %p341 = scmp.ne.s32.totalorder %s327, %s328
      %p342 = scmp.eq.s32.totalorder %s28, 1
      %p343 = por %p341, %p342
      %p345 = scmp.ne.s32.totalorder %s328, %s344
      %p346 = scmp.eq.s32.totalorder %s28, 0
      %p347 = por %p345, %p346
      %p348 = scmp.le.s32.totalorder 1, %s22
      %p349 = scmp.lt.s32.totalorder %s22, 3
      %p350 = pnand %p348, %p349
      %p351 = pneg %p350
      // Predicated region
      $region9: #{get_model_forward.5} parent=5 // pred_check
        _
      $region10: #{get_model_forward.5} parent=5 // pred_check_branch
        %353 = sbr.rel (%p350) target = $region12
      $region11: #{get_model_forward.5} parent=5 // pred_region
        %s354 = ssub.s32 %s22, 1
        // Predicated region
        $region13: #{get_model_forward.5} parent=11 // pred_check
          %p355 = pneg %p83
        $region14: #{get_model_forward.5} parent=11 // pred_check_branch
          %357 = sbr.rel (%p355) target = $region16
        $region15: #{get_model_forward.5} parent=11 // pred_region
          %359 = vsyncadd [#allocation4], 0
          %s360 = sshll.u32 %s1, 4
          %s361 = int_to_ptr.hbm [resolvable:$true] %s360
          %s362 = sshll.u32 [#allocation3], 4
          %s363 = int_to_ptr.vmem [resolvable:$true] %s362
          %368 = dma.hbm_to_vmem [thread:$0]  %s361, 128, %s363, [#allocation4], 64, 64, 4
        $region16: #{get_model_forward.5} parent=11 // pred_fallthru
          _
        // Predicated region
        $region17: #{get_model_forward.5} parent=11 // pred_check
          %p369 = pneg %p104
        $region18: #{get_model_forward.5} parent=11 // pred_check_branch
          %371 = sbr.rel (%p369) target = $region20
        $region19: #{get_model_forward.5} parent=11 // pred_region
          _
        $region20: #{get_model_forward.5} parent=11 // pred_fallthru
          _
        // Predicated region
        $region21: #{get_model_forward.5} parent=11 // pred_check
          %p372 = pneg %p125
        $region22: #{get_model_forward.5} parent=11 // pred_check_branch
          %374 = sbr.rel (%p372) target = $region24
        $region23: #{get_model_forward.5} parent=11 // pred_region
          %376 = vsyncadd [#allocation6], 0
          %s377 = sshll.u32 %s3, 4
          %s378 = int_to_ptr.hbm [resolvable:$true] %s377
          %s379 = sshll.u32 [#allocation5], 4
          %s380 = int_to_ptr.vmem [resolvable:$true] %s379
          %385 = dma.hbm_to_vmem [thread:$0]  %s378, 128, %s380, [#allocation6], 64, 64, 4
        $region24: #{get_model_forward.5} parent=11 // pred_fallthru
          _
        // Predicated region
        $region25: #{get_model_forward.5} parent=11 // pred_check
          %p386 = pneg %p146
        $region26: #{get_model_forward.5} parent=11 // pred_check_branch
          %388 = sbr.rel (%p386) target = $region28
        $region27: #{get_model_forward.5} parent=11 // pred_region
          _
        $region28: #{get_model_forward.5} parent=11 // pred_fallthru
          _
        // Predicated region
        $region29: #{get_model_forward.5} parent=11 // pred_check
          %p389 = pneg %p167
        $region30: #{get_model_forward.5} parent=11 // pred_check_branch
          %391 = sbr.rel (%p389) target = $region32
        $region31: #{get_model_forward.5} parent=11 // pred_region
          _
        $region32: #{get_model_forward.5} parent=11 // pred_fallthru
          _
        // Predicated region
        $region33: #{get_model_forward.5} parent=11 // pred_check
          %p392 = pneg %p188
        $region34: #{get_model_forward.5} parent=11 // pred_check_branch
          %394 = sbr.rel (%p392) target = $region36
        $region35: #{get_model_forward.5} parent=11 // pred_region
          _
        $region36: #{get_model_forward.5} parent=11 // pred_fallthru
          _
        // Predicated region
        $region37: #{get_model_forward.5} parent=11 // pred_check
          %p395 = pneg %p209
        $region38: #{get_model_forward.5} parent=11 // pred_check_branch
          %397 = sbr.rel (%p395) target = $region40
        $region39: #{get_model_forward.5} parent=11 // pred_region
          _
        $region40: #{get_model_forward.5} parent=11 // pred_fallthru
          _
        // Predicated region
        $region41: #{get_model_forward.5} parent=11 // pred_check
          %p398 = pneg %p230
        $region42: #{get_model_forward.5} parent=11 // pred_check_branch
          %400 = sbr.rel (%p398) target = $region44
        $region43: #{get_model_forward.5} parent=11 // pred_region
          %402 = vsyncadd [#allocation6], 0
          %s404 = sshll.u32 %s8, 4
          %s405 = int_to_ptr.hbm [resolvable:$true] %s404
          %s406 = sshll.u32 [#allocation7], 4
          %s407 = int_to_ptr.vmem [resolvable:$true] %s406
          %409 = dma.hbm_to_vmem [thread:$0]  %s405, 16, %s407, [#allocation6]
        $region44: #{get_model_forward.5} parent=11 // pred_fallthru
          _
        // Predicated region
        $region45: #{get_model_forward.5} parent=11 // pred_check
          %p410 = pneg %p251
        $region46: #{get_model_forward.5} parent=11 // pred_check_branch
          %412 = sbr.rel (%p410) target = $region48
        $region47: #{get_model_forward.5} parent=11 // pred_region
          _
        $region48: #{get_model_forward.5} parent=11 // pred_fallthru
          _
        // Predicated region
        $region49: #{get_model_forward.5} parent=11 // pred_check
          %p413 = pneg %p272
        $region50: #{get_model_forward.5} parent=11 // pred_check_branch
          %415 = sbr.rel (%p413) target = $region52
        $region51: #{get_model_forward.5} parent=11 // pred_region
          %417 = vsyncadd [#allocation9], 0
          %s419 = sshll.u32 %s10, 4
          %s420 = int_to_ptr.hbm [resolvable:$true] %s419
          %s421 = sshll.u32 [#allocation8], 4
          %s422 = int_to_ptr.vmem [resolvable:$true] %s421
          %424 = dma.hbm_to_vmem [thread:$0]  %s420, 16, %s422, [#allocation9]
        $region52: #{get_model_forward.5} parent=11 // pred_fallthru
          _
        // Predicated region
        $region53: #{get_model_forward.5} parent=11 // pred_check
          %p425 = pneg %p293
        $region54: #{get_model_forward.5} parent=11 // pred_check_branch
          %427 = sbr.rel (%p425) target = $region56
        $region55: #{get_model_forward.5} parent=11 // pred_region
          _
        $region56: #{get_model_forward.5} parent=11 // pred_fallthru
          _
        // Predicated region
        $region57: #{get_model_forward.5} parent=11 // pred_check
          %p428 = pneg %p314
        $region58: #{get_model_forward.5} parent=11 // pred_check_branch
          %430 = sbr.rel (%p428) target = $region60
        $region59: #{get_model_forward.5} parent=11 // pred_region
          %432 = vsyncadd [#allocation9], 0
          %s434 = sshll.u32 %s12, 4
          %s435 = int_to_ptr.hbm [resolvable:$true] %s434
          %s436 = sshll.u32 [#allocation10], 4
          %s437 = int_to_ptr.vmem [resolvable:$true] %s436
          %439 = dma.hbm_to_vmem [thread:$0]  %s435, 16, %s437, [#allocation9]
        $region60: #{get_model_forward.5} parent=11 // pred_fallthru
          _
      $region12: #{get_model_forward.5} parent=5 // pred_fallthru
        _
      %p440 = scmp.lt.s32.totalorder %s22, 2
      // Predicated region
      $region61: #{get_model_forward.5} parent=5 // pred_check
        %p441 = pneg %p440
      $region62: #{get_model_forward.5} parent=5 // pred_check_branch
        %443 = sbr.rel (%p441) target = $region64
      $region63: #{get_model_forward.5} parent=5 // pred_region
        // Predicated region
        $region65: #{get_model_forward.5} parent=63 // pred_check
          %p444 = pneg %p56
        $region66: #{get_model_forward.5} parent=63 // pred_check_branch
          %446 = sbr.rel (%p444) target = $region68
        $region67: #{get_model_forward.5} parent=63 // pred_region
          %s447 = smul.u32 16, %s30
          %p448 = scmp.lt.s32.totalorder %s29, 1
          %s449 = scalar_select %p448, %s29, 1
          %p450 = scmp.lt.s32.totalorder %s447, 15
          %s451 = scalar_select %p450, %s447, 15
          %s452 = smul.addr %s449, 16
          %s453 = sadd.s32 %s451, %s452
          %s454 = smul.addr %s453, 8
          %s455 = scalar_lea.vmem %s0, %s454
          %s456 = smul.u32 16, %s30
        $region68: #{get_model_forward.5} parent=63 // pred_fallthru
          _
      $region64: #{get_model_forward.5} parent=5 // pred_fallthru
        _
      %p457 = scmp.le.s32.totalorder 1, %s22
      %p458 = scmp.lt.s32.totalorder %s22, 3
      %p459 = pnand %p457, %p458
      %p460 = pneg %p459
      // Predicated region
      $region69: #{get_model_forward.5} parent=5 // pred_check
        _
      $region70: #{get_model_forward.5} parent=5 // pred_check_branch
        %462 = sbr.rel (%p459) target = $region72
      $region71: #{get_model_forward.5} parent=5 // pred_region
        %s463 = ssub.s32 %s22, 1
        // Predicated region
        $region73: #{get_model_forward.5} parent=71 // pred_check
          %p464 = pneg %p83
        $region74: #{get_model_forward.5} parent=71 // pred_check_branch
          %466 = sbr.rel (%p464) target = $region76
        $region75: #{get_model_forward.5} parent=71 // pred_region
          %468 = dma.done [#allocation4], 128
        $region76: #{get_model_forward.5} parent=71 // pred_fallthru
          _
        // Predicated region
        $region77: #{get_model_forward.5} parent=71 // pred_check
          %p469 = pneg %p125
        $region78: #{get_model_forward.5} parent=71 // pred_check_branch
          %471 = sbr.rel (%p469) target = $region80
        $region79: #{get_model_forward.5} parent=71 // pred_region
          %473 = dma.done [#allocation6], 128
        $region80: #{get_model_forward.5} parent=71 // pred_fallthru
          _
        // Predicated region
        $region81: #{get_model_forward.5} parent=71 // pred_check
          %p474 = pneg %p230
        $region82: #{get_model_forward.5} parent=71 // pred_check_branch
          %476 = sbr.rel (%p474) target = $region84
        $region83: #{get_model_forward.5} parent=71 // pred_region
          %478 = dma.done [#allocation6], 16
        $region84: #{get_model_forward.5} parent=71 // pred_fallthru
          _
        // Predicated region
        $region85: #{get_model_forward.5} parent=71 // pred_check
          %p479 = pneg %p272
        $region86: #{get_model_forward.5} parent=71 // pred_check_branch
          %481 = sbr.rel (%p479) target = $region88
        $region87: #{get_model_forward.5} parent=71 // pred_region
          %483 = dma.done [#allocation9], 16
        $region88: #{get_model_forward.5} parent=71 // pred_fallthru
          _
        // Predicated region
        $region89: #{get_model_forward.5} parent=71 // pred_check
          %p484 = pneg %p314
        $region90: #{get_model_forward.5} parent=71 // pred_check_branch
          %486 = sbr.rel (%p484) target = $region92
        $region91: #{get_model_forward.5} parent=71 // pred_region
          %488 = dma.done [#allocation9], 16
        $region92: #{get_model_forward.5} parent=71 // pred_fallthru
          _
        %s489 = smul.u32 16, %s32
        %p490 = scmp.lt.s32.totalorder %s31, 1
        %s491 = scalar_select %p490, %s31, 1
        %p492 = scmp.lt.s32.totalorder %s489, 15
        %s493 = scalar_select %p492, %s489, 15
        %s494 = smul.addr %s491, 16
        %s495 = sadd.s32 %s493, %s494
        %s496 = smul.addr %s495, 8
        %s497 = scalar_lea.vmem %s0, %s496
        %p498 = pneg %p62
        %p499 = pneg %p59
        %p500 = pneg %p83
        %p501 = pneg %p80
        %p502 = pneg %p104
        %p503 = pneg %p101
        %p504 = pneg %p125
        %p505 = pneg %p122
        %p506 = pneg %p146
        %p507 = pneg %p143
        %p508 = pneg %p167
        %p509 = pneg %p164
        %p510 = pneg %p188
        %p511 = pneg %p185
        %p512 = pneg %p209
        %p513 = pneg %p206
        %p514 = pneg %p230
        %p515 = pneg %p227
        %p516 = pneg %p251
        %p517 = pneg %p248
        %p518 = pneg %p272
        %p519 = pneg %p269
        %p520 = pneg %p293
        %p521 = pneg %p290
        %p522 = pneg %p314
        %p523 = pneg %p311
        %p524 = pneg %p340
        %p525 = pneg %p337
        %p526 = scmp.lt.s32.totalorder %s31, 1
        %s527 = scalar_select %p526, %s31, 1
        %s528 = scalar_lea.vmem %s13, %s527
        %s529 = smul.u32 16, %s32
        %p530 = scmp.lt.s32.totalorder %s31, 1
        %s531 = scalar_select %p530, %s31, 1
        %p532 = scmp.lt.s32.totalorder %s529, 15
        %s533 = scalar_select %p532, %s529, 15
        %s534 = smul.addr %s531, 16
        %s535 = sadd.s32 %s533, %s534
        %s536 = smul.addr %s535, 8
        %s537 = scalar_lea.vmem %s0, %s536
        %s538 = smul.u32 16, %s32
        %p539 = scmp.lt.s32.totalorder %s31, 1
        %s540 = scalar_select %p539, %s31, 1
        %s541 = scalar_lea.vmem %s13, %s540
        %v543 = vld [vmem:[%s537] sm:$0xff]
        %v544 = vld [vmem:[%s537 + $0x8] sm:$0xff]
        %v545 = vld [vmem:[%s537 + $0x10] sm:$0xff]
        %v546 = vld [vmem:[%s537 + $0x18] sm:$0xff]
        %v547 = vld [vmem:[%s537 + $0x20] sm:$0xff]
        %v548 = vld [vmem:[%s537 + $0x28] sm:$0xff]
        %v549 = vld [vmem:[%s537 + $0x30] sm:$0xff]
        %v550 = vld [vmem:[%s537 + $0x38] sm:$0xff]
        %v551 = vld [vmem:[%s537 + $0x40] sm:$0xff]
        %v552 = vld [vmem:[%s537 + $0x48] sm:$0xff]
        %v553 = vld [vmem:[%s537 + $0x50] sm:$0xff]
        %v554 = vld [vmem:[%s537 + $0x58] sm:$0xff]
        %v555 = vld [vmem:[%s537 + $0x60] sm:$0xff]
        %v556 = vld [vmem:[%s537 + $0x68] sm:$0xff]
        %v557 = vld [vmem:[%s537 + $0x70] sm:$0xff]
        %v558 = vld [vmem:[%s537 + $0x78] sm:$0xff]
        %v559 = vld [vmem:[#allocation3] sm:$0xf]
        %v560 = vld [vmem:[#allocation3 + $0x4] sm:$0x1]
        %v561 = vpack.c.bf16 %v544, %v543
        %v562 = vpack.c.bf16 %v546, %v545
        %v563 = vpack.c.bf16 %v548, %v547
        %v564 = vpack.c.bf16 %v550, %v549
        %v565 = vpack.c.bf16 %v552, %v551
        %v566 = vpack.c.bf16 %v554, %v553
        %v567 = vpack.c.bf16 %v556, %v555
        %v568 = vpack.c.bf16 %v558, %v557
        %v569 = vld [vmem:[%s2] sm:$0x1]
        %v571 = vperm.slane %v569, 0
        %v575 = vunpack.c.l.b16 %v559
        %v576 = vunpack.c.l.b16 %v560
        %v577 = vpack.c.b16 %v576, %v575
        %vm578 = vcmask 72704
        %v580 = vsel %vm578, %v561, 0
        %v583 = vsel %vm578, %v562, 0
        %v586 = vsel %vm578, %v563, 0
        %v589 = vsel %vm578, %v564, 0
        %v592 = vsel %vm578, %v565, 0
        %v595 = vsel %vm578, %v566, 0
        %v598 = vsel %vm578, %v567, 0
        %v601 = vsel %vm578, %v568, 0
        %vm603 = vcmask 1043456
        %vm604 = vcmask 1044480
        %v605 = vsel %vm603, 4294967295, 65535
        %v606 = vsel %vm604, %v605, 0
        %v608 = vand.u32 %v577, %v606
        %610 = vmatpush.bf16.msra.mxu0 0
        %611 = vmatpush.bf16.msra.mxu0 0
        %612 = vmatpush.bf16.msra.mxu0 0
        %613 = vmatpush.bf16.msra.mxu0 0
        %614 = vmatpush.bf16.msra.mxu0 0
        %615 = vmatpush.bf16.msra.mxu0 0
        %616 = vmatpush.bf16.msra.mxu0 0
        %617 = vmatpush.bf16.msra.mxu0 %v608
        %618 = vmatmul.bf16.gmra.mxu0 %v580
        %v619 = vpop.f32.mrf.mxu0
        %v620 = vadd.f32 %v571, %v619
        %v621 = vpop.f32.mrf.mxu0
        %v622 = vadd.f32 %v571, %v621
        %623 = vmatmul.bf16.gmra.mxu0 %v583
        %v624 = vpop.f32.mrf.mxu0
        %v625 = vadd.f32 %v571, %v624
        %v626 = vpop.f32.mrf.mxu0
        %v627 = vadd.f32 %v571, %v626
        %628 = vmatmul.bf16.gmra.mxu0 %v586
        %v629 = vpop.f32.mrf.mxu0
        %v630 = vadd.f32 %v571, %v629
        %v631 = vpop.f32.mrf.mxu0
        %v632 = vadd.f32 %v571, %v631
        %633 = vmatmul.bf16.gmra.mxu0 %v589
        %v634 = vpop.f32.mrf.mxu0
        %v635 = vadd.f32 %v571, %v634
        %v636 = vpop.f32.mrf.mxu0
        %v637 = vadd.f32 %v571, %v636
        %638 = vmatmul.bf16.gmra.mxu0 %v592
        %v639 = vpop.f32.mrf.mxu0
        %v640 = vadd.f32 %v571, %v639
        %v641 = vpop.f32.mrf.mxu0
        %v642 = vadd.f32 %v571, %v641
        %643 = vmatmul.bf16.gmra.mxu0 %v595
        %v644 = vpop.f32.mrf.mxu0
        %v645 = vadd.f32 %v571, %v644
        %v646 = vpop.f32.mrf.mxu0
        %v647 = vadd.f32 %v571, %v646
        %648 = vmatmul.bf16.gmra.mxu0 %v598
        %v649 = vpop.f32.mrf.mxu0
        %v650 = vadd.f32 %v571, %v649
        %v651 = vpop.f32.mrf.mxu0
        %v652 = vadd.f32 %v571, %v651
        %653 = vmatmul.bf16.gmra.mxu0 %v601
        %v654 = vpop.f32.mrf.mxu0
        %v655 = vadd.f32 %v571, %v654
        %v656 = vpop.f32.mrf.mxu0
        %v657 = vadd.f32 %v571, %v656
        %658 = vdwg.mxu0
        %v659 = vmax.f32 %v620, 0.0
        %v660 = vmax.f32 %v622, 0.0
        %v661 = vmax.f32 %v625, 0.0
        %v662 = vmax.f32 %v627, 0.0
        %v663 = vmax.f32 %v630, 0.0
        %v664 = vmax.f32 %v632, 0.0
        %v665 = vmax.f32 %v635, 0.0
        %v666 = vmax.f32 %v637, 0.0
        %v667 = vmax.f32 %v640, 0.0
        %v668 = vmax.f32 %v642, 0.0
        %v669 = vmax.f32 %v645, 0.0
        %v670 = vmax.f32 %v647, 0.0
        %v671 = vmax.f32 %v650, 0.0
        %v672 = vmax.f32 %v652, 0.0
        %v673 = vmax.f32 %v655, 0.0
        %v674 = vmax.f32 %v657, 0.0
        %v675 = vld [vmem:[#allocation5] sm:$0xf]
        %v676 = vld [vmem:[#allocation5 + $0x4] sm:$0xf]
        %v677 = vpack.c.bf16 %v660, %v659
        %v678 = vpack.c.bf16 %v662, %v661
        %v679 = vpack.c.bf16 %v664, %v663
        %v680 = vpack.c.bf16 %v666, %v665
        %v681 = vpack.c.bf16 %v668, %v667
        %v682 = vpack.c.bf16 %v670, %v669
        %v683 = vpack.c.bf16 %v672, %v671
        %v684 = vpack.c.bf16 %v674, %v673
        %v685 = vld [vmem:[%s4] sm:$0x1]
        %v687 = vperm.slane %v685, 0
        %v691 = vunpack.c.l.b16 %v675
        %v692 = vunpack.c.l.b16 %v676
        %v693 = vpack.c.b16 %v692, %v691
        %vm695 = vcmask 130048
        %v697 = vsel %vm695, %v677, 0
        %v700 = vsel %vm695, %v678, 0
        %v703 = vsel %vm695, %v679, 0
        %v706 = vsel %vm695, %v680, 0
        %v709 = vsel %vm695, %v681, 0
        %v712 = vsel %vm695, %v682, 0
        %v715 = vsel %vm695, %v683, 0
        %v718 = vsel %vm695, %v684, 0
        %720 = vmatpush.bf16.msra.mxu0 0
        %721 = vmatpush.bf16.msra.mxu0 0
        %722 = vmatpush.bf16.msra.mxu0 0
        %723 = vmatpush.bf16.msra.mxu0 0
        %724 = vmatpush.bf16.msra.mxu0 0
        %725 = vmatpush.bf16.msra.mxu0 0
        %726 = vmatpush.bf16.msra.mxu0 0
        %727 = vmatpush.bf16.msra.mxu0 %v693
        %728 = vmatmul.bf16.gmra.mxu0 %v697
        %v729 = vpop.f32.mrf.mxu0
        %v730 = vadd.f32 %v687, %v729
        %v731 = vpop.f32.mrf.mxu0
        %v732 = vadd.f32 %v687, %v731
        %733 = vmatmul.bf16.gmra.mxu0 %v700
        %v734 = vpop.f32.mrf.mxu0
        %v735 = vadd.f32 %v687, %v734
        %v736 = vpop.f32.mrf.mxu0
        %v737 = vadd.f32 %v687, %v736
        %738 = vmatmul.bf16.gmra.mxu0 %v703
        %v739 = vpop.f32.mrf.mxu0
        %v740 = vadd.f32 %v687, %v739
        %v741 = vpop.f32.mrf.mxu0
        %v742 = vadd.f32 %v687, %v741
        %743 = vmatmul.bf16.gmra.mxu0 %v706
        %v744 = vpop.f32.mrf.mxu0
        %v745 = vadd.f32 %v687, %v744
        %v746 = vpop.f32.mrf.mxu0
        %v747 = vadd.f32 %v687, %v746
        %748 = vmatmul.bf16.gmra.mxu0 %v709
        %v749 = vpop.f32.mrf.mxu0
        %v750 = vadd.f32 %v687, %v749
        %v751 = vpop.f32.mrf.mxu0
        %v752 = vadd.f32 %v687, %v751
        %753 = vmatmul.bf16.gmra.mxu0 %v712
        %v754 = vpop.f32.mrf.mxu0
        %v755 = vadd.f32 %v687, %v754
        %v756 = vpop.f32.mrf.mxu0
        %v757 = vadd.f32 %v687, %v756
        %758 = vmatmul.bf16.gmra.mxu0 %v715
        %v759 = vpop.f32.mrf.mxu0
        %v760 = vadd.f32 %v687, %v759
        %v761 = vpop.f32.mrf.mxu0
        %v762 = vadd.f32 %v687, %v761
        %763 = vmatmul.bf16.gmra.mxu0 %v718
        %v764 = vpop.f32.mrf.mxu0
        %v765 = vadd.f32 %v687, %v764
        %v766 = vpop.f32.mrf.mxu0
        %v767 = vadd.f32 %v687, %v766
        %768 = vdwg.mxu0
        %v769 = vmax.f32 %v730, 0.0
        %v770 = vmax.f32 %v732, 0.0
        %v771 = vmax.f32 %v735, 0.0
        %v772 = vmax.f32 %v737, 0.0
        %v773 = vmax.f32 %v740, 0.0
        %v774 = vmax.f32 %v742, 0.0
        %v775 = vmax.f32 %v745, 0.0
        %v776 = vmax.f32 %v747, 0.0
        %v777 = vmax.f32 %v750, 0.0
        %v778 = vmax.f32 %v752, 0.0
        %v779 = vmax.f32 %v755, 0.0
        %v780 = vmax.f32 %v757, 0.0
        %v781 = vmax.f32 %v760, 0.0
        %v782 = vmax.f32 %v762, 0.0
        %v783 = vmax.f32 %v765, 0.0
        %v784 = vmax.f32 %v767, 0.0
        %v785 = vld [vmem:[%s5] sm:$0xff]
        %v786 = vld [vmem:[%s5 + $0x8] sm:$0xff]
        %v787 = vld [vmem:[%s5 + $0x10] sm:$0xff]
        %v788 = vld [vmem:[%s5 + $0x18] sm:$0xff]
        %v789 = vpack.c.bf16 %v770, %v769
        %v790 = vpack.c.bf16 %v772, %v771
        %v791 = vpack.c.bf16 %v774, %v773
        %v792 = vpack.c.bf16 %v776, %v775
        %v793 = vpack.c.bf16 %v778, %v777
        %v794 = vpack.c.bf16 %v780, %v779
        %v795 = vpack.c.bf16 %v782, %v781
        %v796 = vpack.c.bf16 %v784, %v783
        %v797 = vld [vmem:[%s6] sm:$0x3]
        %v799 = vperm.slane %v797, 0
        %v800 = vperm.slane %v797, 1
        %v807 = vunpack.c.l.b16 %v785
        %v808 = vunpack.c.h.b16 %v785
        %v809 = vunpack.c.l.b16 %v786
        %v810 = vunpack.c.h.b16 %v786
        %v811 = vunpack.c.l.b16 %v787
        %v812 = vunpack.c.h.b16 %v787
        %v813 = vunpack.c.l.b16 %v788
        %v814 = vunpack.c.h.b16 %v788
        %v815 = vpack.c.b16 %v809, %v807
        %v816 = vpack.c.b16 %v810, %v808
        %v817 = vpack.c.b16 %v813, %v811
        %v818 = vpack.c.b16 %v814, %v812
        %vm823 = vcmask 261120
        %v825 = vsel %vm823, %v789, 0
        %v828 = vsel %vm823, %v790, 0
        %v831 = vsel %vm823, %v791, 0
        %v834 = vsel %vm823, %v792, 0
        %v837 = vsel %vm823, %v793, 0
        %v840 = vsel %vm823, %v794, 0
        %v843 = vsel %vm823, %v795, 0
        %v846 = vsel %vm823, %v796, 0
        %848 = vmatpush.bf16.msra.mxu0 0
        %849 = vmatpush.bf16.msra.mxu0 0
        %850 = vmatpush.bf16.msra.mxu0 0
        %851 = vmatpush.bf16.msra.mxu0 0
        %852 = vmatpush.bf16.msra.mxu0 0
        %853 = vmatpush.bf16.msra.mxu0 0
        %854 = vmatpush.bf16.msra.mxu0 %v817
        %855 = vmatpush.bf16.msra.mxu0 %v815
        %856 = vmatmul.bf16.gmra.mxu0 %v825
        %v857 = vpop.f32.mrf.mxu0
        %v858 = vadd.f32 %v799, %v857
        %v859 = vpop.f32.mrf.mxu0
        %v860 = vadd.f32 %v799, %v859
        %861 = vmatmul.bf16.gmra.mxu0 %v828
        %v862 = vpop.f32.mrf.mxu0
        %v863 = vadd.f32 %v799, %v862
        %v864 = vpop.f32.mrf.mxu0
        %v865 = vadd.f32 %v799, %v864
        %866 = vmatmul.bf16.gmra.mxu0 %v831
        %v867 = vpop.f32.mrf.mxu0
        %v868 = vadd.f32 %v799, %v867
        %v869 = vpop.f32.mrf.mxu0
        %v870 = vadd.f32 %v799, %v869
        %871 = vmatmul.bf16.gmra.mxu0 %v834
        %v872 = vpop.f32.mrf.mxu0
        %v873 = vadd.f32 %v799, %v872
        %v874 = vpop.f32.mrf.mxu0
        %v875 = vadd.f32 %v799, %v874
        %876 = vmatmul.bf16.gmra.mxu0 %v837
        %v877 = vpop.f32.mrf.mxu0
        %v878 = vadd.f32 %v799, %v877
        %v879 = vpop.f32.mrf.mxu0
        %v880 = vadd.f32 %v799, %v879
        %881 = vmatmul.bf16.gmra.mxu0 %v840
        %v882 = vpop.f32.mrf.mxu0
        %v883 = vadd.f32 %v799, %v882
        %v884 = vpop.f32.mrf.mxu0
        %v885 = vadd.f32 %v799, %v884
        %886 = vmatmul.bf16.gmra.mxu0 %v843
        %v887 = vpop.f32.mrf.mxu0
        %v888 = vadd.f32 %v799, %v887
        %v889 = vpop.f32.mrf.mxu0
        %v890 = vadd.f32 %v799, %v889
        %891 = vmatmul.bf16.gmra.mxu0 %v846
        %v892 = vpop.f32.mrf.mxu0
        %v893 = vadd.f32 %v799, %v892
        %v894 = vpop.f32.mrf.mxu0
        %v895 = vadd.f32 %v799, %v894
        %896 = vdwg.mxu0
        %897 = vmatpush.bf16.msra.mxu0 0
        %898 = vmatpush.bf16.msra.mxu0 0
        %899 = vmatpush.bf16.msra.mxu0 0
        %900 = vmatpush.bf16.msra.mxu0 0
        %901 = vmatpush.bf16.msra.mxu0 0
        %902 = vmatpush.bf16.msra.mxu0 0
        %903 = vmatpush.bf16.msra.mxu0 %v818
        %904 = vmatpush.bf16.msra.mxu0 %v816
        %905 = vmatmul.bf16.gmra.mxu0 %v825
        %v906 = vpop.f32.mrf.mxu0
        %v907 = vadd.f32 %v800, %v906
        %v908 = vpop.f32.mrf.mxu0
        %v909 = vadd.f32 %v800, %v908
        %910 = vmatmul.bf16.gmra.mxu0 %v828
        %v911 = vpop.f32.mrf.mxu0
        %v912 = vadd.f32 %v800, %v911
        %v913 = vpop.f32.mrf.mxu0
        %v914 = vadd.f32 %v800, %v913
        %915 = vmatmul.bf16.gmra.mxu0 %v831
        %v916 = vpop.f32.mrf.mxu0
        %v917 = vadd.f32 %v800, %v916
        %v918 = vpop.f32.mrf.mxu0
        %v919 = vadd.f32 %v800, %v918
        %920 = vmatmul.bf16.gmra.mxu0 %v834
        %v921 = vpop.f32.mrf.mxu0
        %v922 = vadd.f32 %v800, %v921
        %v923 = vpop.f32.mrf.mxu0
        %v924 = vadd.f32 %v800, %v923
        %925 = vmatmul.bf16.gmra.mxu0 %v837
        %v926 = vpop.f32.mrf.mxu0
        %v927 = vadd.f32 %v800, %v926
        %v928 = vpop.f32.mrf.mxu0
        %v929 = vadd.f32 %v800, %v928
        %930 = vmatmul.bf16.gmra.mxu0 %v840
        %v931 = vpop.f32.mrf.mxu0
        %v932 = vadd.f32 %v800, %v931
        %v933 = vpop.f32.mrf.mxu0
        %v934 = vadd.f32 %v800, %v933
        %935 = vmatmul.bf16.gmra.mxu0 %v843
        %v936 = vpop.f32.mrf.mxu0
        %v937 = vadd.f32 %v800, %v936
        %v938 = vpop.f32.mrf.mxu0
        %v939 = vadd.f32 %v800, %v938
        %940 = vmatmul.bf16.gmra.mxu0 %v846
        %v941 = vpop.f32.mrf.mxu0
        %v942 = vadd.f32 %v800, %v941
        %v943 = vpop.f32.mrf.mxu0
        %v944 = vadd.f32 %v800, %v943
        %945 = vdwg.mxu0
        %v946 = vmax.f32 %v858, 0.0
        %v947 = vmax.f32 %v907, 0.0
        %v948 = vmax.f32 %v860, 0.0
        %v949 = vmax.f32 %v909, 0.0
        %v950 = vmax.f32 %v863, 0.0
        %v951 = vmax.f32 %v912, 0.0
        %v952 = vmax.f32 %v865, 0.0
        %v953 = vmax.f32 %v914, 0.0
        %v954 = vmax.f32 %v868, 0.0
        %v955 = vmax.f32 %v917, 0.0
        %v956 = vmax.f32 %v870, 0.0
        %v957 = vmax.f32 %v919, 0.0
        %v958 = vmax.f32 %v873, 0.0
        %v959 = vmax.f32 %v922, 0.0
        %v960 = vmax.f32 %v875, 0.0
        %v961 = vmax.f32 %v924, 0.0
        %v962 = vmax.f32 %v878, 0.0
        %v963 = vmax.f32 %v927, 0.0
        %v964 = vmax.f32 %v880, 0.0
        %v965 = vmax.f32 %v929, 0.0
        %v966 = vmax.f32 %v883, 0.0
        %v967 = vmax.f32 %v932, 0.0
        %v968 = vmax.f32 %v885, 0.0
        %v969 = vmax.f32 %v934, 0.0
        %v970 = vmax.f32 %v888, 0.0
        %v971 = vmax.f32 %v937, 0.0
        %v972 = vmax.f32 %v890, 0.0
        %v973 = vmax.f32 %v939, 0.0
        %v974 = vmax.f32 %v893, 0.0
        %v975 = vmax.f32 %v942, 0.0
        %v976 = vmax.f32 %v895, 0.0
        %v977 = vmax.f32 %v944, 0.0
        %v978 = vmax.f32 %v946, %v950
        %v979 = vmax.f32 %v948, %v952
        %v980 = vmax.f32 %v978, %v954
        %v981 = vmax.f32 %v979, %v956
        %v982 = vmax.f32 %v980, %v958
        %v983 = vmax.f32 %v981, %v960
        %v984 = vmax.f32 %v982, %v962
        %v985 = vmax.f32 %v983, %v964
        %v986 = vmax.f32 %v984, %v966
        %v987 = vmax.f32 %v985, %v968
        %v988 = vmax.f32 %v986, %v970
        %v989 = vmax.f32 %v987, %v972
        %v990 = vmax.f32 %v988, %v974
        %v991 = vmax.f32 %v989, %v976
        %v992 = vmax.f32 %v990, %v991
        %v993 = vrot.slane %v992, 4
        %v994 = vmax.f32 %v992, %v993
        %v995 = vrot.slane %v994, 2
        %v996 = vmax.f32 %v994, %v995
        %v997 = vrot.slane %v996, 1
        %v998 = vmax.f32 %v996, %v997
        %v999 = vmax.f32 %v947, %v951
        %v1000 = vmax.f32 %v949, %v953
        %v1001 = vmax.f32 %v999, %v955
        %v1002 = vmax.f32 %v1000, %v957
        %v1003 = vmax.f32 %v1001, %v959
        %v1004 = vmax.f32 %v1002, %v961
        %v1005 = vmax.f32 %v1003, %v963
        %v1006 = vmax.f32 %v1004, %v965
        %v1007 = vmax.f32 %v1005, %v967
        %v1008 = vmax.f32 %v1006, %v969
        %v1009 = vmax.f32 %v1007, %v971
        %v1010 = vmax.f32 %v1008, %v973
        %v1011 = vmax.f32 %v1009, %v975
        %v1012 = vmax.f32 %v1010, %v977
        %v1013 = vmax.f32 %v1011, %v1012
        %v1014 = vrot.slane %v1013, 4
        %v1015 = vmax.f32 %v1013, %v1014
        %v1016 = vrot.slane %v1015, 2
        %v1017 = vmax.f32 %v1015, %v1016
        %v1018 = vrot.slane %v1017, 1
        %v1019 = vmax.f32 %v1017, %v1018
        %p1020 = scmp.eq.s32.totalorder %s32, 0
        // Predicated region
        $region93: #{get_model_forward.5} parent=71 // pred_check
          %p1021 = pneg %p1020
        $region94: #{get_model_forward.5} parent=71 // pred_check_branch
          %1023 = sbr.rel (%p1021) target = $region96
        $region95: #{get_model_forward.5} parent=71 // pred_region
          %v1026 = vrot.slane %v1019, 7
          %vm1027 = vcmask 1040384
          %v1028 = vsel %vm1027, %v998, %v1026
          %v1030 = vlaneseq
          %vm1031 = vcmp.ge.s32.totalorder %v1030, 0
          %vm1032 = vcmp.lt.s32.totalorder %v1030, 256
          %vm1033 = vmand %vm1031, %vm1032
          %1034 = vst.msk [vmem:[#allocation2] sm:$0x3] %vm1033, %v1028
        $region96: #{get_model_forward.5} parent=71 // pred_fallthru
          _
        %p1035 = scmp.gt.s32.totalorder %s32, 0
        // Predicated region
        $region97: #{get_model_forward.5} parent=71 // pred_check
          %p1036 = pneg %p1035
        $region98: #{get_model_forward.5} parent=71 // pred_check_branch
          %1038 = sbr.rel (%p1036) target = $region100
        $region99: #{get_model_forward.5} parent=71 // pred_region
          %v1039 = vld [vmem:[#allocation2] sm:$0x3]
          %v1042 = vrot.slane %v1019, 7
          %vm1043 = vcmask 1040384
          %v1044 = vsel %vm1043, %v998, %v1042
          %v1046 = vmax.f32 %v1039, %v1044
          %v1047 = vlaneseq
          %vm1048 = vcmp.ge.s32.totalorder %v1047, 0
          %vm1049 = vcmp.lt.s32.totalorder %v1047, 256
          %vm1050 = vmand %vm1048, %vm1049
          %1051 = vst.msk [vmem:[#allocation2] sm:$0x3] %vm1050, %v1046
        $region100: #{get_model_forward.5} parent=71 // pred_fallthru
          _
        // Predicated region
        $region101: #{get_model_forward.5} parent=71 // pred_check
          %p1052 = pneg %p1020
        $region102: #{get_model_forward.5} parent=71 // pred_check_branch
          %1054 = sbr.rel (%p1052) target = $region104
        $region103: #{get_model_forward.5} parent=71 // pred_region
          %v1055 = vld [vmem:[#allocation2] sm:$0x3]
          %v1056 = vld [vmem:[%s7] sm:$0xf]
          %v1057 = vld [vmem:[%s7 + $0x4] sm:$0xf]
          %v1058 = vld [vmem:[%s7 + $0x8] sm:$0xf]
          %v1059 = vld [vmem:[%s7 + $0xc] sm:$0xf]
          %v1060 = vld [vmem:[%s7 + $0x10] sm:$0xf]
          %v1061 = vld [vmem:[%s7 + $0x14] sm:$0xf]
          %v1062 = vld [vmem:[%s7 + $0x18] sm:$0xf]
          %v1063 = vld [vmem:[%s7 + $0x1c] sm:$0xf]
          %v1064 = vld [vmem:[%s7 + $0x20] sm:$0xf]
          %v1065 = vld [vmem:[%s7 + $0x24] sm:$0xf]
          %v1066 = vld [vmem:[%s7 + $0x28] sm:$0xf]
          %v1067 = vld [vmem:[%s7 + $0x2c] sm:$0xf]
          %v1068 = vld [vmem:[%s7 + $0x30] sm:$0xf]
          %v1069 = vld [vmem:[%s7 + $0x34] sm:$0xf]
          %v1070 = vld [vmem:[%s7 + $0x38] sm:$0xf]
          %v1071 = vld [vmem:[%s7 + $0x3c] sm:$0xf]
          %v1072 = vld [vmem:[%s7 + $0x40] sm:$0xf]
          %v1073 = vld [vmem:[%s7 + $0x44] sm:$0xf]
          %v1074 = vld [vmem:[%s7 + $0x48] sm:$0xf]
          %v1075 = vld [vmem:[%s7 + $0x4c] sm:$0xf]
          %v1076 = vld [vmem:[%s7 + $0x50] sm:$0xf]
          %v1077 = vld [vmem:[%s7 + $0x54] sm:$0xf]
          %v1078 = vld [vmem:[%s7 + $0x58] sm:$0xf]
          %v1079 = vld [vmem:[%s7 + $0x5c] sm:$0xf]
          %v1080 = vld [vmem:[%s7 + $0x60] sm:$0xf]
          %v1081 = vld [vmem:[%s7 + $0x64] sm:$0xf]
          %v1082 = vld [vmem:[%s7 + $0x68] sm:$0xf]
          %v1083 = vld [vmem:[%s7 + $0x6c] sm:$0xf]
          %v1084 = vld [vmem:[%s7 + $0x70] sm:$0xf]
          %v1085 = vld [vmem:[%s7 + $0x74] sm:$0xf]
          %v1086 = vld [vmem:[%s7 + $0x78] sm:$0xf]
          %v1087 = vld [vmem:[%s7 + $0x7c] sm:$0xf]
          %v1089 = vperm.slane %v1055, 0
          %v1090 = vperm.slane %v1055, 1
          %v1093 = vpack.c.bf16 %v1089, %v1089
          %v1094 = vpack.c.bf16 %v1090, %v1090
          %v1095 = vld [vmem:[#allocation7] sm:$0x1]
          %v1128 = vunpack.c.l.b16 %v1056
          %v1129 = vunpack.c.l.b16 %v1057
          %v1130 = vunpack.c.l.b16 %v1058
          %v1131 = vunpack.c.l.b16 %v1059
          %v1132 = vunpack.c.l.b16 %v1060
          %v1133 = vunpack.c.l.b16 %v1061
          %v1134 = vunpack.c.l.b16 %v1062
          %v1135 = vunpack.c.l.b16 %v1063
          %v1136 = vunpack.c.l.b16 %v1064
          %v1137 = vunpack.c.l.b16 %v1065
          %v1138 = vunpack.c.l.b16 %v1066
          %v1139 = vunpack.c.l.b16 %v1067
          %v1140 = vunpack.c.l.b16 %v1068
          %v1141 = vunpack.c.l.b16 %v1069
          %v1142 = vunpack.c.l.b16 %v1070
          %v1143 = vunpack.c.l.b16 %v1071
          %v1144 = vunpack.c.l.b16 %v1072
          %v1145 = vunpack.c.l.b16 %v1073
          %v1146 = vunpack.c.l.b16 %v1074
          %v1147 = vunpack.c.l.b16 %v1075
          %v1148 = vunpack.c.l.b16 %v1076
          %v1149 = vunpack.c.l.b16 %v1077
          %v1150 = vunpack.c.l.b16 %v1078
          %v1151 = vunpack.c.l.b16 %v1079
          %v1152 = vunpack.c.l.b16 %v1080
          %v1153 = vunpack.c.l.b16 %v1081
          %v1154 = vunpack.c.l.b16 %v1082
          %v1155 = vunpack.c.l.b16 %v1083
          %v1156 = vunpack.c.l.b16 %v1084
          %v1157 = vunpack.c.l.b16 %v1085
          %v1158 = vunpack.c.l.b16 %v1086
          %v1159 = vunpack.c.l.b16 %v1087
          %v1160 = vpack.c.b16 %v1129, %v1128
          %v1161 = vpack.c.b16 %v1131, %v1130
          %v1162 = vpack.c.b16 %v1133, %v1132
          %v1163 = vpack.c.b16 %v1135, %v1134
          %v1164 = vpack.c.b16 %v1137, %v1136
          %v1165 = vpack.c.b16 %v1139, %v1138
          %v1166 = vpack.c.b16 %v1141, %v1140
          %v1167 = vpack.c.b16 %v1143, %v1142
          %v1168 = vpack.c.b16 %v1145, %v1144
          %v1169 = vpack.c.b16 %v1147, %v1146
          %v1170 = vpack.c.b16 %v1149, %v1148
          %v1171 = vpack.c.b16 %v1151, %v1150
          %v1172 = vpack.c.b16 %v1153, %v1152
          %v1173 = vpack.c.b16 %v1155, %v1154
          %v1174 = vpack.c.b16 %v1157, %v1156
          %v1175 = vpack.c.b16 %v1159, %v1158
          %1192 = vmatpush.bf16.msra.mxu0 %v1167
          %1193 = vmatpush.bf16.msra.mxu0 %v1166
          %1194 = vmatpush.bf16.msra.mxu0 %v1165
          %1195 = vmatpush.bf16.msra.mxu0 %v1164
          %1196 = vmatpush.bf16.msra.mxu0 %v1163
          %1197 = vmatpush.bf16.msra.mxu0 %v1162
          %1198 = vmatpush.bf16.msra.mxu0 %v1161
          %1199 = vmatpush.bf16.msra.mxu0 %v1160
          %1200 = vmatmul.bf16.gmra.mxu0 %v1093
          %v1201 = vpop.f32.mrf.mxu0
          %v1202 = vadd.f32 %v1095, %v1201
          %v1203 = vpop.f32.mrf.mxu0
          %1204 = vdwg.mxu0
          %1205 = vmatpush.bf16.msra.mxu0 %v1175
          %1206 = vmatpush.bf16.msra.mxu0 %v1174
          %1207 = vmatpush.bf16.msra.mxu0 %v1173
          %1208 = vmatpush.bf16.msra.mxu0 %v1172
          %1209 = vmatpush.bf16.msra.mxu0 %v1171
          %1210 = vmatpush.bf16.msra.mxu0 %v1170
          %1211 = vmatpush.bf16.msra.mxu0 %v1169
          %1212 = vmatpush.bf16.msra.mxu0 %v1168
          %1213 = vmatmul.bf16.gmra.mxu0 %v1094
          %v1214 = vpop.f32.mrf.mxu0
          %v1215 = vadd.f32 %v1202, %v1214
          %v1216 = vpop.f32.mrf.mxu0
          %1217 = vdwg.mxu0
          %v1218 = vmax.f32 %v1215, 0.0
          %v1219 = vld [vmem:[%s9] sm:$0xf]
          %v1220 = vld [vmem:[%s9 + $0x4] sm:$0xf]
          %v1221 = vld [vmem:[%s9 + $0x8] sm:$0xf]
          %v1222 = vld [vmem:[%s9 + $0xc] sm:$0xf]
          %v1223 = vld [vmem:[%s9 + $0x10] sm:$0xf]
          %v1224 = vld [vmem:[%s9 + $0x14] sm:$0xf]
          %v1225 = vld [vmem:[%s9 + $0x18] sm:$0xf]
          %v1226 = vld [vmem:[%s9 + $0x1c] sm:$0xf]
          %v1227 = vld [vmem:[%s9 + $0x20] sm:$0xf]
          %v1228 = vld [vmem:[%s9 + $0x24] sm:$0xf]
          %v1229 = vld [vmem:[%s9 + $0x28] sm:$0xf]
          %v1230 = vld [vmem:[%s9 + $0x2c] sm:$0xf]
          %v1231 = vld [vmem:[%s9 + $0x30] sm:$0xf]
          %v1232 = vld [vmem:[%s9 + $0x34] sm:$0xf]
          %v1233 = vld [vmem:[%s9 + $0x38] sm:$0xf]
          %v1234 = vld [vmem:[%s9 + $0x3c] sm:$0xf]
          %v1235 = vpack.c.bf16 %v1218, %v1218
          %v1236 = vld [vmem:[#allocation8] sm:$0x1]
          %v1253 = vunpack.c.l.b16 %v1219
          %v1254 = vunpack.c.l.b16 %v1220
          %v1255 = vunpack.c.l.b16 %v1221
          %v1256 = vunpack.c.l.b16 %v1222
          %v1257 = vunpack.c.l.b16 %v1223
          %v1258 = vunpack.c.l.b16 %v1224
          %v1259 = vunpack.c.l.b16 %v1225
          %v1260 = vunpack.c.l.b16 %v1226
          %v1261 = vunpack.c.l.b16 %v1227
          %v1262 = vunpack.c.l.b16 %v1228
          %v1263 = vunpack.c.l.b16 %v1229
          %v1264 = vunpack.c.l.b16 %v1230
          %v1265 = vunpack.c.l.b16 %v1231
          %v1266 = vunpack.c.l.b16 %v1232
          %v1267 = vunpack.c.l.b16 %v1233
          %v1268 = vunpack.c.l.b16 %v1234
          %v1269 = vpack.c.b16 %v1254, %v1253
          %v1270 = vpack.c.b16 %v1256, %v1255
          %v1271 = vpack.c.b16 %v1258, %v1257
          %v1272 = vpack.c.b16 %v1260, %v1259
          %v1273 = vpack.c.b16 %v1262, %v1261
          %v1274 = vpack.c.b16 %v1264, %v1263
          %v1275 = vpack.c.b16 %v1266, %v1265
          %v1276 = vpack.c.b16 %v1268, %v1267
          %1285 = vmatpush.bf16.msra.mxu0 %v1276
          %1286 = vmatpush.bf16.msra.mxu0 %v1275
          %1287 = vmatpush.bf16.msra.mxu0 %v1274
          %1288 = vmatpush.bf16.msra.mxu0 %v1273
          %1289 = vmatpush.bf16.msra.mxu0 %v1272
          %1290 = vmatpush.bf16.msra.mxu0 %v1271
          %1291 = vmatpush.bf16.msra.mxu0 %v1270
          %1292 = vmatpush.bf16.msra.mxu0 %v1269
          %1293 = vmatmul.bf16.gmra.mxu0 %v1235
          %v1294 = vpop.f32.mrf.mxu0
          %v1295 = vadd.f32 %v1236, %v1294
          %v1296 = vpop.f32.mrf.mxu0
          %1297 = vdwg.mxu0
          %v1298 = vmax.f32 %v1295, 0.0
          %v1299 = vld [vmem:[%s11] sm:$0xf]
          %v1300 = vld [vmem:[%s11 + $0x4] sm:$0xf]
          %v1301 = vld [vmem:[%s11 + $0x8] sm:$0xf]
          %v1302 = vld [vmem:[%s11 + $0xc] sm:$0xf]
          %v1303 = vld [vmem:[%s11 + $0x10] sm:$0xf]
          %v1304 = vld [vmem:[%s11 + $0x14] sm:$0xf]
          %v1305 = vld [vmem:[%s11 + $0x18] sm:$0xf]
          %v1306 = vld [vmem:[%s11 + $0x1c] sm:$0xf]
          %v1307 = vpack.c.bf16 %v1298, %v1298
          %v1308 = vld [vmem:[#allocation10] sm:$0x1]
          %v1317 = vunpack.c.l.b16 %v1299
          %v1318 = vunpack.c.l.b16 %v1300
          %v1319 = vunpack.c.l.b16 %v1301
          %v1320 = vunpack.c.l.b16 %v1302
          %v1321 = vunpack.c.l.b16 %v1303
          %v1322 = vunpack.c.l.b16 %v1304
          %v1323 = vunpack.c.l.b16 %v1305
          %v1324 = vunpack.c.l.b16 %v1306
          %v1325 = vpack.c.b16 %v1318, %v1317
          %v1326 = vpack.c.b16 %v1320, %v1319
          %v1327 = vpack.c.b16 %v1322, %v1321
          %v1328 = vpack.c.b16 %v1324, %v1323
          %vm1333 = vcmask 523264
          %v1335 = vsel %vm1333, %v1307, 0
          %1337 = vmatpush.bf16.msra.mxu0 0
          %1338 = vmatpush.bf16.msra.mxu0 0
          %1339 = vmatpush.bf16.msra.mxu0 0
          %1340 = vmatpush.bf16.msra.mxu0 0
          %1341 = vmatpush.bf16.msra.mxu0 %v1328
          %1342 = vmatpush.bf16.msra.mxu0 %v1327
          %1343 = vmatpush.bf16.msra.mxu0 %v1326
          %1344 = vmatpush.bf16.msra.mxu0 %v1325
          %1345 = vmatmul.bf16.gmra.mxu0 %v1335
          %v1346 = vpop.f32.mrf.mxu0
          %v1347 = vadd.f32 %v1308, %v1346
          %v1348 = vpop.f32.mrf.mxu0
          %1349 = vdwg.mxu0
          %vm1350 = vcmask 65536
          %1351 = vst.msk [vmem:[%s541] sm:$0x1] %vm1350, %v1347
        $region104: #{get_model_forward.5} parent=71 // pred_fallthru
          _
        %p1352 = scmp.lt.s32.totalorder %s31, 1
        %s1353 = scalar_select %p1352, %s31, 1
        %s1354 = scalar_lea.vmem %s13, %s1353
        // Predicated region
        $region105: #{get_model_forward.5} parent=71 // pred_check
          %p1355 = pneg %p337
        $region106: #{get_model_forward.5} parent=71 // pred_check_branch
          %1357 = sbr.rel (%p1355) target = $region108
        $region107: #{get_model_forward.5} parent=71 // pred_region
          _
        $region108: #{get_model_forward.5} parent=71 // pred_fallthru
          _
      $region72: #{get_model_forward.5} parent=5 // pred_fallthru
        _
      %p1358 = scmp.le.s32.totalorder 2, %s22
      // Predicated region
      $region109: #{get_model_forward.5} parent=5 // pred_check
        %p1359 = pneg %p1358
      $region110: #{get_model_forward.5} parent=5 // pred_check_branch
        %1361 = sbr.rel (%p1359) target = $region112
      $region111: #{get_model_forward.5} parent=5 // pred_region
        %s1362 = ssub.s32 %s22, 2
        // Predicated region
        $region113: #{get_model_forward.5} parent=111 // pred_check
          %p1363 = pneg %p343
        $region114: #{get_model_forward.5} parent=111 // pred_check_branch
          %1365 = sbr.rel (%p1363) target = $region116
        $region115: #{get_model_forward.5} parent=111 // pred_region
          %p1366 = scmp.lt.s32.totalorder %s33, 1
          %s1367 = scalar_select %p1366, %s33, 1
          %s1368 = scalar_lea.vmem %s13, %s1367
        $region116: #{get_model_forward.5} parent=111 // pred_fallthru
          _
      $region112: #{get_model_forward.5} parent=5 // pred_fallthru
        _
    $region6: #{get_model_forward.5} parent=1 // loop_footer
      %s26 = sadd.s32 1, %s22
    $region7: #{get_model_forward.5} parent=1 // loop_footer_branch
      %21 = sbr.rel target = $region3
    $region8: #{get_model_forward.5} parent=1 // loop_exit
      _
    %1369 = vsyncpa [#allocation4], 1
    %s1370 = scalar_lea.sflag [#allocation4], 1
    %1371 = vsyncpa %s1370, 1
    %1372 = vsyncpa [#allocation6], 1
    %1373 = vsyncpa [#allocation9], 1

// kernel: get_model_forward.7
$region0: #{get_model_forward.7}
  #allocation0 [shape = 'u32[]', space=smem, size = 0x4, offset = 0x4, fixed_abs, tag = 'smem constant byte address 0x4 - core index']
  #allocation1 [shape = 'u32[72,128]{1,0:T(1,128)}', space=vmem, size = 0x9000, scoped, tag = 'internal scratch']
  #allocation2 [shape = 'f32[1,256]{1,0:T(1,128)}', space=vmem, size = 0x400, scoped, tag = 'scratch operand']
  %s0 = inlined_call_operand.vmem [shape: bf16[2,128,16], index: 0, kind: input, shape index: {}]
  %s1 = inlined_call_operand.vmem [shape: bf16[16,16], index: 1, kind: input, shape index: {}]
  %s2 = inlined_call_operand.hbm [shape: f32[1,16], index: 2, kind: input, shape index: {}]
  %s3 = inlined_call_operand.hbm [shape: bf16[16,32], index: 3, kind: input, shape index: {}]
  %s4 = inlined_call_operand.hbm [shape: f32[1,32], index: 4, kind: input, shape index: {}]
  %s5 = inlined_call_operand.vmem [shape: bf16[32,256], index: 5, kind: input, shape index: {}]
  %s6 = inlined_call_operand.vmem [shape: f32[1,256], index: 6, kind: input, shape index: {}]
  %s7 = inlined_call_operand.vmem [shape: bf16[256,128], index: 7, kind: input, shape index: {}]
  %s8 = inlined_call_operand.hbm [shape: f32[1,128], index: 8, kind: input, shape index: {}]
  %s9 = inlined_call_operand.vmem [shape: bf16[128,64], index: 9, kind: input, shape index: {}]
  %s10 = inlined_call_operand.hbm [shape: f32[1,64], index: 10, kind: input, shape index: {}]
  %s11 = inlined_call_operand.vmem [shape: bf16[64,256], index: 11, kind: input, shape index: {}]
  %s12 = inlined_call_operand.vmem [shape: f32[1,256], index: 12, kind: input, shape index: {}]
  %s13 = inlined_call_operand.vmem [shape: f32[2,1,256], index: 13, kind: output, shape index: {}]
  %s14 = sld [smem:[#allocation0]]
  $region117: #{get_model_forward.7} parent=0
    _
  %s16 = ssub.s32 1, %s14
  %s17 = scalar_select 0, %s16, %s14
  $region1: #{get_model_forward.7} parent=0
    #allocation3 [shape = 'u8[512]{0}', space=vmem, size = 0x400, scoped, tag = 'input window, operand 2, single buffered']
    #allocation4 [shape = 's32[2]{0}', space=sflag, size = 0x8, scoped, tag = 'scoped memory for get_model_forward.7']
    #allocation5 [shape = 'u8[4096]{0}', space=vmem, size = 0x1000, scoped, tag = 'input window, operand 3, single buffered']
    #allocation6 [shape = 's32[1]{0}', space=sflag, size = 0x4, scoped, tag = 'scoped memory for get_model_forward.7']
    #allocation7 [shape = 'u8[512]{0}', space=vmem, size = 0x400, scoped, tag = 'input window, operand 4, single buffered']
    #allocation8 [shape = 'u8[512]{0}', space=vmem, size = 0x400, scoped, tag = 'input window, operand 8, single buffered']
    #allocation9 [shape = 's32[1]{0}', space=sflag, size = 0x4, scoped, tag = 'scoped memory for get_model_forward.7']
    #allocation10 [shape = 'u8[512]{0}', space=vmem, size = 0x400, scoped, tag = 'input window, operand 10, single buffered']
    %18 = vsyncpa [#allocation4], 0
    %19 = vsyncpa [#allocation6], 0
    %20 = vsyncpa [#allocation9], 0
    loop: start=0, step=1, limit=4
    $region2: #{get_model_forward.7} parent=1 // loop_pre_header
      _
    $region3: #{get_model_forward.7} parent=1 // loop_header
      %s22 = sphi 0, %s26
      %p23 = scmp.ge.s32.totalorder %s22, 4
      %s29 = sphi 0, %s41
      %s30 = sphi 0, %s37
      %s31 = sphi 0, %s29
      %s32 = sphi 0, %s30
      %s33 = sphi 0, %s31
      %s34 = sphi 0, %s32
      %s46 = sphi 0, %s48
      %s49 = sphi 0, %s46
      %s50 = sphi 0, %s49
      %s66 = sphi 0, %s50
      %s70 = sphi 0, %s70
      %s72 = sphi 0, %s70
      %s73 = sphi 0, %s72
      %s87 = sphi 0, %s73
      %s91 = sphi 0, %s91
      %s93 = sphi 0, %s91
      %s94 = sphi 0, %s93
      %s108 = sphi 0, %s94
      %s112 = sphi 0, %s112
      %s114 = sphi 0, %s112
      %s115 = sphi 0, %s114
      %s129 = sphi 0, %s115
      %s133 = sphi 0, %s133
      %s135 = sphi 0, %s133
      %s136 = sphi 0, %s135
      %s150 = sphi 0, %s136
      %s154 = sphi 0, %s154
      %s156 = sphi 0, %s154
      %s157 = sphi 0, %s156
      %s171 = sphi 0, %s157
      %s175 = sphi 0, %s175
      %s177 = sphi 0, %s175
      %s178 = sphi 0, %s177
      %s192 = sphi 0, %s178
      %s196 = sphi 0, %s196
      %s198 = sphi 0, %s196
      %s199 = sphi 0, %s198
      %s213 = sphi 0, %s199
      %s217 = sphi 0, %s217
      %s219 = sphi 0, %s217
      %s220 = sphi 0, %s219
      %s234 = sphi 0, %s220
      %s238 = sphi 0, %s238
      %s240 = sphi 0, %s238
      %s241 = sphi 0, %s240
      %s255 = sphi 0, %s241
      %s259 = sphi 0, %s259
      %s261 = sphi 0, %s259
      %s262 = sphi 0, %s261
      %s276 = sphi 0, %s262
      %s280 = sphi 0, %s280
      %s282 = sphi 0, %s280
      %s283 = sphi 0, %s282
      %s297 = sphi 0, %s283
      %s301 = sphi 0, %s301
      %s303 = sphi 0, %s301
      %s304 = sphi 0, %s303
      %s318 = sphi 0, %s304
      %s324 = sphi 0, %s326
      %s327 = sphi 0, %s324
      %s328 = sphi 0, %s327
      %s344 = sphi 0, %s328
    $region4: #{get_model_forward.7} parent=1 // loop_header_branch
      %25 = sbr.rel (%p23) target = $region8
    $region5: #{get_model_forward.7} parent=1 // loop_body
      %s27 = ssub.s32 %s22, 1
      %s28 = ssub.s32 %s22, 2
      %s35 = sadd.s32 1, %s30
      %p36 = scmp.ge.s32.totalorder %s35, 1
      %s37 = scalar_select %p36, 0, %s35
      %s38 = sadd.s32 1, %s29
      %s39 = scalar_select %p36, %s38, %s29
      %p40 = scmp.ge.s32.totalorder %s39, 2
      %s41 = scalar_select %p40, 0, %s39
      %s42 = ssub.s32 %s29, %s41
      %s43 = ssub.s32 %s30, %s37
      %s44 = sor.u32 %s42, %s43
      %p45 = scmp.eq.s32.totalorder %s44, 0
      %s47 = sadd.s32 %s46, 1
      %s48 = scalar_select %p45, %s46, %s47
      %p51 = pneg %p45
      %p52 = scmp.eq.s32.totalorder %s22, 1
      %p53 = por %p51, %p52
      %p54 = scmp.ne.s32.totalorder %s46, %s49
      %p55 = scmp.eq.s32.totalorder %s22, 0
      %p56 = por %p54, %p55
      %p57 = scmp.ne.s32.totalorder %s46, %s49
      %p58 = scmp.eq.s32.totalorder %s27, 1
      %p59 = por %p57, %p58
      %p60 = scmp.ne.s32.totalorder %s49, %s50
      %p61 = scmp.eq.s32.totalorder %s27, 0
      %p62 = por %p60, %p61
      %p63 = scmp.ne.s32.totalorder %s49, %s50
      %p64 = scmp.eq.s32.totalorder %s28, 1
      %p65 = por %p63, %p64
      %p67 = scmp.ne.s32.totalorder %s50, %s66
      %p68 = scmp.eq.s32.totalorder %s28, 0
      %p69 = por %p67, %p68
      %s71 = sadd.s32 %s70, 1
      %p74 = scmp.eq.s32.totalorder %s22, 1
      %p75 = scmp.ne.s32.totalorder %s70, %s72
      %p76 = scmp.eq.s32.totalorder %s22, 0
      %p77 = por %p75, %p76
      %p78 = scmp.ne.s32.totalorder %s70, %s72
      %p79 = scmp.eq.s32.totalorder %s27, 1
      %p80 = por %p78, %p79
      %p81 = scmp.ne.s32.totalorder %s72, %s73
      %p82 = scmp.eq.s32.totalorder %s27, 0
      %p83 = por %p81, %p82
      %p84 = scmp.ne.s32.totalorder %s72, %s73
      %p85 = scmp.eq.s32.totalorder %s28, 1
      %p86 = por %p84, %p85
      %p88 = scmp.ne.s32.totalorder %s73, %s87
      %p89 = scmp.eq.s32.totalorder %s28, 0
      %p90 = por %p88, %p89
      %s92 = sadd.s32 %s91, 1
      %p95 = scmp.eq.s32.totalorder %s22, 1
      %p96 = scmp.ne.s32.totalorder %s91, %s93
      %p97 = scmp.eq.s32.totalorder %s22, 0
      %p98 = por %p96, %p97
      %p99 = scmp.ne.s32.totalorder %s91, %s93
      %p100 = scmp.eq.s32.totalorder %s27, 1
      %p101 = por %p99, %p100
      %p102 = scmp.ne.s32.totalorder %s93, %s94
      %p103 = scmp.eq.s32.totalorder %s27, 0
      %p104 = por %p102, %p103
      %p105 = scmp.ne.s32.totalorder %s93, %s94
      %p106 = scmp.eq.s32.totalorder %s28, 1
      %p107 = por %p105, %p106
      %p109 = scmp.ne.s32.totalorder %s94, %s108
      %p110 = scmp.eq.s32.totalorder %s28, 0
      %p111 = por %p109, %p110
      %s113 = sadd.s32 %s112, 1
      %p116 = scmp.eq.s32.totalorder %s22, 1
      %p117 = scmp.ne.s32.totalorder %s112, %s114
      %p118 = scmp.eq.s32.totalorder %s22, 0
      %p119 = por %p117, %p118
      %p120 = scmp.ne.s32.totalorder %s112, %s114
      %p121 = scmp.eq.s32.totalorder %s27, 1
      %p122 = por %p120, %p121
      %p123 = scmp.ne.s32.totalorder %s114, %s115
      %p124 = scmp.eq.s32.totalorder %s27, 0
      %p125 = por %p123, %p124
      %p126 = scmp.ne.s32.totalorder %s114, %s115
      %p127 = scmp.eq.s32.totalorder %s28, 1
      %p128 = por %p126, %p127
      %p130 = scmp.ne.s32.totalorder %s115, %s129
      %p131 = scmp.eq.s32.totalorder %s28, 0
      %p132 = por %p130, %p131
      %s134 = sadd.s32 %s133, 1
      %p137 = scmp.eq.s32.totalorder %s22, 1
      %p138 = scmp.ne.s32.totalorder %s133, %s135
      %p139 = scmp.eq.s32.totalorder %s22, 0
      %p140 = por %p138, %p139
      %p141 = scmp.ne.s32.totalorder %s133, %s135
      %p142 = scmp.eq.s32.totalorder %s27, 1
      %p143 = por %p141, %p142
      %p144 = scmp.ne.s32.totalorder %s135, %s136
      %p145 = scmp.eq.s32.totalorder %s27, 0
      %p146 = por %p144, %p145
      %p147 = scmp.ne.s32.totalorder %s135, %s136
      %p148 = scmp.eq.s32.totalorder %s28, 1
      %p149 = por %p147, %p148
      %p151 = scmp.ne.s32.totalorder %s136, %s150
      %p152 = scmp.eq.s32.totalorder %s28, 0
      %p153 = por %p151, %p152
      %s155 = sadd.s32 %s154, 1
      %p158 = scmp.eq.s32.totalorder %s22, 1
      %p159 = scmp.ne.s32.totalorder %s154, %s156
      %p160 = scmp.eq.s32.totalorder %s22, 0
      %p161 = por %p159, %p160
      %p162 = scmp.ne.s32.totalorder %s154, %s156
      %p163 = scmp.eq.s32.totalorder %s27, 1
      %p164 = por %p162, %p163
      %p165 = scmp.ne.s32.totalorder %s156, %s157
      %p166 = scmp.eq.s32.totalorder %s27, 0
      %p167 = por %p165, %p166
      %p168 = scmp.ne.s32.totalorder %s156, %s157
      %p169 = scmp.eq.s32.totalorder %s28, 1
      %p170 = por %p168, %p169
      %p172 = scmp.ne.s32.totalorder %s157, %s171
      %p173 = scmp.eq.s32.totalorder %s28, 0
      %p174 = por %p172, %p173
      %s176 = sadd.s32 %s175, 1
      %p179 = scmp.eq.s32.totalorder %s22, 1
      %p180 = scmp.ne.s32.totalorder %s175, %s177
      %p181 = scmp.eq.s32.totalorder %s22, 0
      %p182 = por %p180, %p181
      %p183 = scmp.ne.s32.totalorder %s175, %s177
      %p184 = scmp.eq.s32.totalorder %s27, 1
      %p185 = por %p183, %p184
      %p186 = scmp.ne.s32.totalorder %s177, %s178
      %p187 = scmp.eq.s32.totalorder %s27, 0
      %p188 = por %p186, %p187
      %p189 = scmp.ne.s32.totalorder %s177, %s178
      %p190 = scmp.eq.s32.totalorder %s28, 1
      %p191 = por %p189, %p190
      %p193 = scmp.ne.s32.totalorder %s178, %s192
      %p194 = scmp.eq.s32.totalorder %s28, 0
      %p195 = por %p193, %p194
      %s197 = sadd.s32 %s196, 1
      %p200 = scmp.eq.s32.totalorder %s22, 1
      %p201 = scmp.ne.s32.totalorder %s196, %s198
      %p202 = scmp.eq.s32.totalorder %s22, 0
      %p203 = por %p201, %p202
      %p204 = scmp.ne.s32.totalorder %s196, %s198
      %p205 = scmp.eq.s32.totalorder %s27, 1
      %p206 = por %p204, %p205
      %p207 = scmp.ne.s32.totalorder %s198, %s199
      %p208 = scmp.eq.s32.totalorder %s27, 0
      %p209 = por %p207, %p208
      %p210 = scmp.ne.s32.totalorder %s198, %s199
      %p211 = scmp.eq.s32.totalorder %s28, 1
      %p212 = por %p210, %p211
      %p214 = scmp.ne.s32.totalorder %s199, %s213
      %p215 = scmp.eq.s32.totalorder %s28, 0
      %p216 = por %p214, %p215
      %s218 = sadd.s32 %s217, 1
      %p221 = scmp.eq.s32.totalorder %s22, 1
      %p222 = scmp.ne.s32.totalorder %s217, %s219
      %p223 = scmp.eq.s32.totalorder %s22, 0
      %p224 = por %p222, %p223
      %p225 = scmp.ne.s32.totalorder %s217, %s219
      %p226 = scmp.eq.s32.totalorder %s27, 1
      %p227 = por %p225, %p226
      %p228 = scmp.ne.s32.totalorder %s219, %s220
      %p229 = scmp.eq.s32.totalorder %s27, 0
      %p230 = por %p228, %p229
      %p231 = scmp.ne.s32.totalorder %s219, %s220
      %p232 = scmp.eq.s32.totalorder %s28, 1
      %p233 = por %p231, %p232
      %p235 = scmp.ne.s32.totalorder %s220, %s234
      %p236 = scmp.eq.s32.totalorder %s28, 0
      %p237 = por %p235, %p236
      %s239 = sadd.s32 %s238, 1
      %p242 = scmp.eq.s32.totalorder %s22, 1
      %p243 = scmp.ne.s32.totalorder %s238, %s240
      %p244 = scmp.eq.s32.totalorder %s22, 0
      %p245 = por %p243, %p244
      %p246 = scmp.ne.s32.totalorder %s238, %s240
      %p247 = scmp.eq.s32.totalorder %s27, 1
      %p248 = por %p246, %p247
      %p249 = scmp.ne.s32.totalorder %s240, %s241
      %p250 = scmp.eq.s32.totalorder %s27, 0
      %p251 = por %p249, %p250
      %p252 = scmp.ne.s32.totalorder %s240, %s241
      %p253 = scmp.eq.s32.totalorder %s28, 1
      %p254 = por %p252, %p253
      %p256 = scmp.ne.s32.totalorder %s241, %s255
      %p257 = scmp.eq.s32.totalorder %s28, 0
      %p258 = por %p256, %p257
      %s260 = sadd.s32 %s259, 1
      %p263 = scmp.eq.s32.totalorder %s22, 1
      %p264 = scmp.ne.s32.totalorder %s259, %s261
      %p265 = scmp.eq.s32.totalorder %s22, 0
      %p266 = por %p264, %p265
      %p267 = scmp.ne.s32.totalorder %s259, %s261
      %p268 = scmp.eq.s32.totalorder %s27, 1
      %p269 = por %p267, %p268
      %p270 = scmp.ne.s32.totalorder %s261, %s262
      %p271 = scmp.eq.s32.totalorder %s27, 0
      %p272 = por %p270, %p271
      %p273 = scmp.ne.s32.totalorder %s261, %s262
      %p274 = scmp.eq.s32.totalorder %s28, 1
      %p275 = por %p273, %p274
      %p277 = scmp.ne.s32.totalorder %s262, %s276
      %p278 = scmp.eq.s32.totalorder %s28, 0
      %p279 = por %p277, %p278
      %s281 = sadd.s32 %s280, 1
      %p284 = scmp.eq.s32.totalorder %s22, 1
      %p285 = scmp.ne.s32.totalorder %s280, %s282
      %p286 = scmp.eq.s32.totalorder %s22, 0
      %p287 = por %p285, %p286
      %p288 = scmp.ne.s32.totalorder %s280, %s282
      %p289 = scmp.eq.s32.totalorder %s27, 1
      %p290 = por %p288, %p289
      %p291 = scmp.ne.s32.totalorder %s282, %s283
      %p292 = scmp.eq.s32.totalorder %s27, 0
      %p293 = por %p291, %p292
      %p294 = scmp.ne.s32.totalorder %s282, %s283
      %p295 = scmp.eq.s32.totalorder %s28, 1
      %p296 = por %p294, %p295
      %p298 = scmp.ne.s32.totalorder %s283, %s297
      %p299 = scmp.eq.s32.totalorder %s28, 0
      %p300 = por %p298, %p299
      %s302 = sadd.s32 %s301, 1
      %p305 = scmp.eq.s32.totalorder %s22, 1
      %p306 = scmp.ne.s32.totalorder %s301, %s303
      %p307 = scmp.eq.s32.totalorder %s22, 0
      %p308 = por %p306, %p307
      %p309 = scmp.ne.s32.totalorder %s301, %s303
      %p310 = scmp.eq.s32.totalorder %s27, 1
      %p311 = por %p309, %p310
      %p312 = scmp.ne.s32.totalorder %s303, %s304
      %p313 = scmp.eq.s32.totalorder %s27, 0
      %p314 = por %p312, %p313
      %p315 = scmp.ne.s32.totalorder %s303, %s304
      %p316 = scmp.eq.s32.totalorder %s28, 1
      %p317 = por %p315, %p316
      %p319 = scmp.ne.s32.totalorder %s304, %s318
      %p320 = scmp.eq.s32.totalorder %s28, 0
      %p321 = por %p319, %p320
      %s322 = ssub.s32 %s29, %s41
      %p323 = scmp.eq.s32.totalorder %s322, 0
      %s325 = sadd.s32 %s324, 1
      %s326 = scalar_select %p323, %s324, %s325
      %p329 = pneg %p323
      %p330 = scmp.eq.s32.totalorder %s22, 1
      %p331 = por %p329, %p330
      %p332 = scmp.ne.s32.totalorder %s324, %s327
      %p333 = scmp.eq.s32.totalorder %s22, 0
      %p334 = por %p332, %p333
      %p335 = scmp.ne.s32.totalorder %s324, %s327
      %p336 = scmp.eq.s32.totalorder %s27, 1
      %p337 = por %p335, %p336
      %p338 = scmp.ne.s32.totalorder %s327, %s328
      %p339 = scmp.eq.s32.totalorder %s27, 0
      %p340 = por %p338, %p339
      %p341 = scmp.ne.s32.totalorder %s327, %s328
      %p342 = scmp.eq.s32.totalorder %s28, 1
      %p343 = por %p341, %p342
      %p345 = scmp.ne.s32.totalorder %s328, %s344
      %p346 = scmp.eq.s32.totalorder %s28, 0
      %p347 = por %p345, %p346
      %p348 = scmp.le.s32.totalorder 1, %s22
      %p349 = scmp.lt.s32.totalorder %s22, 3
      %p350 = pnand %p348, %p349
      %p351 = pneg %p350
      // Predicated region
      $region9: #{get_model_forward.7} parent=5 // pred_check
        _
      $region10: #{get_model_forward.7} parent=5 // pred_check_branch
        %353 = sbr.rel (%p350) target = $region12
      $region11: #{get_model_forward.7} parent=5 // pred_region
        %s354 = ssub.s32 %s22, 1
        // Predicated region
        $region13: #{get_model_forward.7} parent=11 // pred_check
          %p355 = pneg %p83
        $region14: #{get_model_forward.7} parent=11 // pred_check_branch
          %357 = sbr.rel (%p355) target = $region16
        $region15: #{get_model_forward.7} parent=11 // pred_region
          _
        $region16: #{get_model_forward.7} parent=11 // pred_fallthru
          _
        // Predicated region
        $region17: #{get_model_forward.7} parent=11 // pred_check
          %p358 = pneg %p104
        $region18: #{get_model_forward.7} parent=11 // pred_check_branch
          %360 = sbr.rel (%p358) target = $region20
        $region19: #{get_model_forward.7} parent=11 // pred_region
          %362 = vsyncadd [#allocation4], 0
          %s364 = sshll.u32 %s2, 4
          %s365 = int_to_ptr.hbm [resolvable:$true] %s364
          %s366 = sshll.u32 [#allocation3], 4
          %s367 = int_to_ptr.vmem [resolvable:$true] %s366
          %369 = dma.hbm_to_vmem [thread:$0]  %s365, 16, %s367, [#allocation4]
        $region20: #{get_model_forward.7} parent=11 // pred_fallthru
          _
        // Predicated region
        $region21: #{get_model_forward.7} parent=11 // pred_check
          %p370 = pneg %p125
        $region22: #{get_model_forward.7} parent=11 // pred_check_branch
          %372 = sbr.rel (%p370) target = $region24
        $region23: #{get_model_forward.7} parent=11 // pred_region
          %374 = vsyncadd [#allocation6], 0
          %s375 = sshll.u32 %s3, 4
          %s376 = int_to_ptr.hbm [resolvable:$true] %s375
          %s377 = sshll.u32 [#allocation5], 4
          %s378 = int_to_ptr.vmem [resolvable:$true] %s377
          %383 = dma.hbm_to_vmem [thread:$0]  %s376, 128, %s378, [#allocation6], 64, 64, 4
        $region24: #{get_model_forward.7} parent=11 // pred_fallthru
          _
        // Predicated region
        $region25: #{get_model_forward.7} parent=11 // pred_check
          %p384 = pneg %p146
        $region26: #{get_model_forward.7} parent=11 // pred_check_branch
          %386 = sbr.rel (%p384) target = $region28
        $region27: #{get_model_forward.7} parent=11 // pred_region
          %388 = vsyncadd [#allocation6], 0
          %s390 = sshll.u32 %s4, 4
          %s391 = int_to_ptr.hbm [resolvable:$true] %s390
          %s392 = sshll.u32 [#allocation7], 4
          %s393 = int_to_ptr.vmem [resolvable:$true] %s392
          %395 = dma.hbm_to_vmem [thread:$0]  %s391, 16, %s393, [#allocation6]
        $region28: #{get_model_forward.7} parent=11 // pred_fallthru
          _
        // Predicated region
        $region29: #{get_model_forward.7} parent=11 // pred_check
          %p396 = pneg %p167
        $region30: #{get_model_forward.7} parent=11 // pred_check_branch
          %398 = sbr.rel (%p396) target = $region32
        $region31: #{get_model_forward.7} parent=11 // pred_region
          _
        $region32: #{get_model_forward.7} parent=11 // pred_fallthru
          _
        // Predicated region
        $region33: #{get_model_forward.7} parent=11 // pred_check
          %p399 = pneg %p188
        $region34: #{get_model_forward.7} parent=11 // pred_check_branch
          %401 = sbr.rel (%p399) target = $region36
        $region35: #{get_model_forward.7} parent=11 // pred_region
          _
        $region36: #{get_model_forward.7} parent=11 // pred_fallthru
          _
        // Predicated region
        $region37: #{get_model_forward.7} parent=11 // pred_check
          %p402 = pneg %p209
        $region38: #{get_model_forward.7} parent=11 // pred_check_branch
          %404 = sbr.rel (%p402) target = $region40
        $region39: #{get_model_forward.7} parent=11 // pred_region
          _
        $region40: #{get_model_forward.7} parent=11 // pred_fallthru
          _
        // Predicated region
        $region41: #{get_model_forward.7} parent=11 // pred_check
          %p405 = pneg %p230
        $region42: #{get_model_forward.7} parent=11 // pred_check_branch
          %407 = sbr.rel (%p405) target = $region44
        $region43: #{get_model_forward.7} parent=11 // pred_region
          %409 = vsyncadd [#allocation9], 0
          %s411 = sshll.u32 %s8, 4
          %s412 = int_to_ptr.hbm [resolvable:$true] %s411
          %s413 = sshll.u32 [#allocation8], 4
          %s414 = int_to_ptr.vmem [resolvable:$true] %s413
          %416 = dma.hbm_to_vmem [thread:$0]  %s412, 16, %s414, [#allocation9]
        $region44: #{get_model_forward.7} parent=11 // pred_fallthru
          _
        // Predicated region
        $region45: #{get_model_forward.7} parent=11 // pred_check
          %p417 = pneg %p251
        $region46: #{get_model_forward.7} parent=11 // pred_check_branch
          %419 = sbr.rel (%p417) target = $region48
        $region47: #{get_model_forward.7} parent=11 // pred_region
          _
        $region48: #{get_model_forward.7} parent=11 // pred_fallthru
          _
        // Predicated region
        $region49: #{get_model_forward.7} parent=11 // pred_check
          %p420 = pneg %p272
        $region50: #{get_model_forward.7} parent=11 // pred_check_branch
          %422 = sbr.rel (%p420) target = $region52
        $region51: #{get_model_forward.7} parent=11 // pred_region
          %424 = vsyncadd [#allocation9], 0
          %s426 = sshll.u32 %s10, 4
          %s427 = int_to_ptr.hbm [resolvable:$true] %s426
          %s428 = sshll.u32 [#allocation10], 4
          %s429 = int_to_ptr.vmem [resolvable:$true] %s428
          %431 = dma.hbm_to_vmem [thread:$0]  %s427, 16, %s429, [#allocation9]
        $region52: #{get_model_forward.7} parent=11 // pred_fallthru
          _
        // Predicated region
        $region53: #{get_model_forward.7} parent=11 // pred_check
          %p432 = pneg %p293
        $region54: #{get_model_forward.7} parent=11 // pred_check_branch
          %434 = sbr.rel (%p432) target = $region56
        $region55: #{get_model_forward.7} parent=11 // pred_region
          _
        $region56: #{get_model_forward.7} parent=11 // pred_fallthru
          _
        // Predicated region
        $region57: #{get_model_forward.7} parent=11 // pred_check
          %p435 = pneg %p314
        $region58: #{get_model_forward.7} parent=11 // pred_check_branch
          %437 = sbr.rel (%p435) target = $region60
        $region59: #{get_model_forward.7} parent=11 // pred_region
          _
        $region60: #{get_model_forward.7} parent=11 // pred_fallthru
          _
      $region12: #{get_model_forward.7} parent=5 // pred_fallthru
        _
      %p438 = scmp.lt.s32.totalorder %s22, 2
      // Predicated region
      $region61: #{get_model_forward.7} parent=5 // pred_check
        %p439 = pneg %p438
      $region62: #{get_model_forward.7} parent=5 // pred_check_branch
        %441 = sbr.rel (%p439) target = $region64
      $region63: #{get_model_forward.7} parent=5 // pred_region
        // Predicated region
        $region65: #{get_model_forward.7} parent=63 // pred_check
          %p442 = pneg %p56
        $region66: #{get_model_forward.7} parent=63 // pred_check_branch
          %444 = sbr.rel (%p442) target = $region68
        $region67: #{get_model_forward.7} parent=63 // pred_region
          %s445 = smul.u32 16, %s30
          %p446 = scmp.lt.s32.totalorder %s29, 1
          %s447 = scalar_select %p446, %s29, 1
          %p448 = scmp.lt.s32.totalorder %s445, 15
          %s449 = scalar_select %p448, %s445, 15
          %s450 = smul.addr %s447, 16
          %s451 = sadd.s32 %s449, %s450
          %s452 = smul.addr %s451, 4
          %s453 = scalar_lea.vmem %s0, %s452
          %s454 = smul.u32 16, %s30
        $region68: #{get_model_forward.7} parent=63 // pred_fallthru
          _
      $region64: #{get_model_forward.7} parent=5 // pred_fallthru
        _
      %p455 = scmp.le.s32.totalorder 1, %s22
      %p456 = scmp.lt.s32.totalorder %s22, 3
      %p457 = pnand %p455, %p456
      %p458 = pneg %p457
      // Predicated region
      $region69: #{get_model_forward.7} parent=5 // pred_check
        _
      $region70: #{get_model_forward.7} parent=5 // pred_check_branch
        %460 = sbr.rel (%p457) target = $region72
      $region71: #{get_model_forward.7} parent=5 // pred_region
        %s461 = ssub.s32 %s22, 1
        // Predicated region
        $region73: #{get_model_forward.7} parent=71 // pred_check
          %p462 = pneg %p104
        $region74: #{get_model_forward.7} parent=71 // pred_check_branch
          %464 = sbr.rel (%p462) target = $region76
        $region75: #{get_model_forward.7} parent=71 // pred_region
          %466 = dma.done [#allocation4], 16
        $region76: #{get_model_forward.7} parent=71 // pred_fallthru
          _
        // Predicated region
        $region77: #{get_model_forward.7} parent=71 // pred_check
          %p467 = pneg %p125
        $region78: #{get_model_forward.7} parent=71 // pred_check_branch
          %469 = sbr.rel (%p467) target = $region80
        $region79: #{get_model_forward.7} parent=71 // pred_region
          %471 = dma.done [#allocation6], 128
        $region80: #{get_model_forward.7} parent=71 // pred_fallthru
          _
        // Predicated region
        $region81: #{get_model_forward.7} parent=71 // pred_check
          %p472 = pneg %p146
        $region82: #{get_model_forward.7} parent=71 // pred_check_branch
          %474 = sbr.rel (%p472) target = $region84
        $region83: #{get_model_forward.7} parent=71 // pred_region
          %476 = dma.done [#allocation6], 16
        $region84: #{get_model_forward.7} parent=71 // pred_fallthru
          _
        // Predicated region
        $region85: #{get_model_forward.7} parent=71 // pred_check
          %p477 = pneg %p230
        $region86: #{get_model_forward.7} parent=71 // pred_check_branch
          %479 = sbr.rel (%p477) target = $region88
        $region87: #{get_model_forward.7} parent=71 // pred_region
          %481 = dma.done [#allocation9], 16
        $region88: #{get_model_forward.7} parent=71 // pred_fallthru
          _
        // Predicated region
        $region89: #{get_model_forward.7} parent=71 // pred_check
          %p482 = pneg %p272
        $region90: #{get_model_forward.7} parent=71 // pred_check_branch
          %484 = sbr.rel (%p482) target = $region92
        $region91: #{get_model_forward.7} parent=71 // pred_region
          %486 = dma.done [#allocation9], 16
        $region92: #{get_model_forward.7} parent=71 // pred_fallthru
          _
        %s487 = smul.u32 16, %s32
        %p488 = scmp.lt.s32.totalorder %s31, 1
        %s489 = scalar_select %p488, %s31, 1
        %p490 = scmp.lt.s32.totalorder %s487, 15
        %s491 = scalar_select %p490, %s487, 15
        %s492 = smul.addr %s489, 16
        %s493 = sadd.s32 %s491, %s492
        %s494 = smul.addr %s493, 4
        %s495 = scalar_lea.vmem %s0, %s494
        %p496 = pneg %p62
        %p497 = pneg %p59
        %p498 = pneg %p83
        %p499 = pneg %p80
        %p500 = pneg %p104
        %p501 = pneg %p101
        %p502 = pneg %p125
        %p503 = pneg %p122
        %p504 = pneg %p146
        %p505 = pneg %p143
        %p506 = pneg %p167
        %p507 = pneg %p164
        %p508 = pneg %p188
        %p509 = pneg %p185
        %p510 = pneg %p209
        %p511 = pneg %p206
        %p512 = pneg %p230
        %p513 = pneg %p227
        %p514 = pneg %p251
        %p515 = pneg %p248
        %p516 = pneg %p272
        %p517 = pneg %p269
        %p518 = pneg %p293
        %p519 = pneg %p290
        %p520 = pneg %p314
        %p521 = pneg %p311
        %p522 = pneg %p340
        %p523 = pneg %p337
        %p524 = scmp.lt.s32.totalorder %s31, 1
        %s525 = scalar_select %p524, %s31, 1
        %s526 = smul.addr %s525, 2
        %s527 = scalar_lea.vmem %s13, %s526
        %s528 = smul.u32 16, %s32
        %p529 = scmp.lt.s32.totalorder %s31, 1
        %s530 = scalar_select %p529, %s31, 1
        %p531 = scmp.lt.s32.totalorder %s528, 15
        %s532 = scalar_select %p531, %s528, 15
        %s533 = smul.addr %s530, 16
        %s534 = sadd.s32 %s532, %s533
        %s535 = smul.addr %s534, 4
        %s536 = scalar_lea.vmem %s0, %s535
        %s537 = smul.u32 16, %s32
        %p538 = scmp.lt.s32.totalorder %s31, 1
        %s539 = scalar_select %p538, %s31, 1
        %s540 = smul.addr %s539, 2
        %s541 = scalar_lea.vmem %s13, %s540
        %v543 = vld [vmem:[%s536] sm:$0xf]
        %v544 = vld [vmem:[%s536 + $0x4] sm:$0xf]
        %v545 = vld [vmem:[%s536 + $0x8] sm:$0xf]
        %v546 = vld [vmem:[%s536 + $0xc] sm:$0xf]
        %v547 = vld [vmem:[%s536 + $0x10] sm:$0xf]
        %v548 = vld [vmem:[%s536 + $0x14] sm:$0xf]
        %v549 = vld [vmem:[%s536 + $0x18] sm:$0xf]
        %v550 = vld [vmem:[%s536 + $0x1c] sm:$0xf]
        %v551 = vld [vmem:[%s536 + $0x20] sm:$0xf]
        %v552 = vld [vmem:[%s536 + $0x24] sm:$0xf]
        %v553 = vld [vmem:[%s536 + $0x28] sm:$0xf]
        %v554 = vld [vmem:[%s536 + $0x2c] sm:$0xf]
        %v555 = vld [vmem:[%s536 + $0x30] sm:$0xf]
        %v556 = vld [vmem:[%s536 + $0x34] sm:$0xf]
        %v557 = vld [vmem:[%s536 + $0x38] sm:$0xf]
        %v558 = vld [vmem:[%s536 + $0x3c] sm:$0xf]
        %v559 = vld [vmem:[%s1] sm:$0xf]
        %v560 = vld [vmem:[%s1 + $0x4] sm:$0xf]
        %v561 = vld [vmem:[#allocation3] sm:$0x1]
        %v563 = vperm.slane %v561, 0
        %v581 = vunpack.c.l.b16 %v543
        %v582 = vunpack.c.l.b16 %v544
        %v583 = vunpack.c.l.b16 %v545
        %v584 = vunpack.c.l.b16 %v546
        %v585 = vunpack.c.l.b16 %v547
        %v586 = vunpack.c.l.b16 %v548
        %v587 = vunpack.c.l.b16 %v549
        %v588 = vunpack.c.l.b16 %v550
        %v589 = vunpack.c.l.b16 %v551
        %v590 = vunpack.c.l.b16 %v552
        %v591 = vunpack.c.l.b16 %v553
        %v592 = vunpack.c.l.b16 %v554
        %v593 = vunpack.c.l.b16 %v555
        %v594 = vunpack.c.l.b16 %v556
        %v595 = vunpack.c.l.b16 %v557
        %v596 = vunpack.c.l.b16 %v558
        %v597 = vpack.c.b16 %v582, %v581
        %v598 = vpack.c.b16 %v584, %v583
        %v599 = vpack.c.b16 %v586, %v585
        %v600 = vpack.c.b16 %v588, %v587
        %v601 = vpack.c.b16 %v590, %v589
        %v602 = vpack.c.b16 %v592, %v591
        %v603 = vpack.c.b16 %v594, %v593
        %v604 = vpack.c.b16 %v596, %v595
        %v607 = vunpack.c.l.b16 %v559
        %v608 = vunpack.c.l.b16 %v560
        %v609 = vpack.c.b16 %v608, %v607
        %vm611 = vcmask 130048
        %v613 = vsel %vm611, %v597, 0
        %v616 = vsel %vm611, %v598, 0
        %v619 = vsel %vm611, %v599, 0
        %v622 = vsel %vm611, %v600, 0
        %v625 = vsel %vm611, %v601, 0
        %v628 = vsel %vm611, %v602, 0
        %v631 = vsel %vm611, %v603, 0
        %v634 = vsel %vm611, %v604, 0
        %636 = vmatpush.bf16.msra.mxu0 0
        %637 = vmatpush.bf16.msra.mxu0 0
        %638 = vmatpush.bf16.msra.mxu0 0
        %639 = vmatpush.bf16.msra.mxu0 0
        %640 = vmatpush.bf16.msra.mxu0 0
        %641 = vmatpush.bf16.msra.mxu0 0
        %642 = vmatpush.bf16.msra.mxu0 0
        %643 = vmatpush.bf16.msra.mxu0 %v609
        %644 = vmatmul.bf16.gmra.mxu0 %v613
        %v645 = vpop.f32.mrf.mxu0
        %v646 = vadd.f32 %v563, %v645
        %v647 = vpop.f32.mrf.mxu0
        %v648 = vadd.f32 %v563, %v647
        %649 = vmatmul.bf16.gmra.mxu0 %v616
        %v650 = vpop.f32.mrf.mxu0
        %v651 = vadd.f32 %v563, %v650
        %v652 = vpop.f32.mrf.mxu0
        %v653 = vadd.f32 %v563, %v652
        %654 = vmatmul.bf16.gmra.mxu0 %v619
        %v655 = vpop.f32.mrf.mxu0
        %v656 = vadd.f32 %v563, %v655
        %v657 = vpop.f32.mrf.mxu0
        %v658 = vadd.f32 %v563, %v657
        %659 = vmatmul.bf16.gmra.mxu0 %v622
        %v660 = vpop.f32.mrf.mxu0
        %v661 = vadd.f32 %v563, %v660
        %v662 = vpop.f32.mrf.mxu0
        %v663 = vadd.f32 %v563, %v662
        %664 = vmatmul.bf16.gmra.mxu0 %v625
        %v665 = vpop.f32.mrf.mxu0
        %v666 = vadd.f32 %v563, %v665
        %v667 = vpop.f32.mrf.mxu0
        %v668 = vadd.f32 %v563, %v667
        %669 = vmatmul.bf16.gmra.mxu0 %v628
        %v670 = vpop.f32.mrf.mxu0
        %v671 = vadd.f32 %v563, %v670
        %v672 = vpop.f32.mrf.mxu0
        %v673 = vadd.f32 %v563, %v672
        %674 = vmatmul.bf16.gmra.mxu0 %v631
        %v675 = vpop.f32.mrf.mxu0
        %v676 = vadd.f32 %v563, %v675
        %v677 = vpop.f32.mrf.mxu0
        %v678 = vadd.f32 %v563, %v677
        %679 = vmatmul.bf16.gmra.mxu0 %v634
        %v680 = vpop.f32.mrf.mxu0
        %v681 = vadd.f32 %v563, %v680
        %v682 = vpop.f32.mrf.mxu0
        %v683 = vadd.f32 %v563, %v682
        %684 = vdwg.mxu0
        %v685 = vmax.f32 %v646, 0.0
        %v686 = vmax.f32 %v648, 0.0
        %v687 = vmax.f32 %v651, 0.0
        %v688 = vmax.f32 %v653, 0.0
        %v689 = vmax.f32 %v656, 0.0
        %v690 = vmax.f32 %v658, 0.0
        %v691 = vmax.f32 %v661, 0.0
        %v692 = vmax.f32 %v663, 0.0
        %v693 = vmax.f32 %v666, 0.0
        %v694 = vmax.f32 %v668, 0.0
        %v695 = vmax.f32 %v671, 0.0
        %v696 = vmax.f32 %v673, 0.0
        %v697 = vmax.f32 %v676, 0.0
        %v698 = vmax.f32 %v678, 0.0
        %v699 = vmax.f32 %v681, 0.0
        %v700 = vmax.f32 %v683, 0.0
        %v701 = vld [vmem:[#allocation5] sm:$0xf]
        %v702 = vld [vmem:[#allocation5 + $0x4] sm:$0xf]
        %v703 = vpack.c.bf16 %v686, %v685
        %v704 = vpack.c.bf16 %v688, %v687
        %v705 = vpack.c.bf16 %v690, %v689
        %v706 = vpack.c.bf16 %v692, %v691
        %v707 = vpack.c.bf16 %v694, %v693
        %v708 = vpack.c.bf16 %v696, %v695
        %v709 = vpack.c.bf16 %v698, %v697
        %v710 = vpack.c.bf16 %v700, %v699
        %v711 = vld [vmem:[#allocation7] sm:$0x1]
        %v713 = vperm.slane %v711, 0
        %v717 = vunpack.c.l.b16 %v701
        %v718 = vunpack.c.l.b16 %v702
        %v719 = vpack.c.b16 %v718, %v717
        %v722 = vsel %vm611, %v703, 0
        %v725 = vsel %vm611, %v704, 0
        %v728 = vsel %vm611, %v705, 0
        %v731 = vsel %vm611, %v706, 0
        %v734 = vsel %vm611, %v707, 0
        %v737 = vsel %vm611, %v708, 0
        %v740 = vsel %vm611, %v709, 0
        %v743 = vsel %vm611, %v710, 0
        %745 = vmatpush.bf16.msra.mxu0 0
        %746 = vmatpush.bf16.msra.mxu0 0
        %747 = vmatpush.bf16.msra.mxu0 0
        %748 = vmatpush.bf16.msra.mxu0 0
        %749 = vmatpush.bf16.msra.mxu0 0
        %750 = vmatpush.bf16.msra.mxu0 0
        %751 = vmatpush.bf16.msra.mxu0 0
        %752 = vmatpush.bf16.msra.mxu0 %v719
        %753 = vmatmul.bf16.gmra.mxu0 %v722
        %v754 = vpop.f32.mrf.mxu0
        %v755 = vadd.f32 %v713, %v754
        %v756 = vpop.f32.mrf.mxu0
        %v757 = vadd.f32 %v713, %v756
        %758 = vmatmul.bf16.gmra.mxu0 %v725
        %v759 = vpop.f32.mrf.mxu0
        %v760 = vadd.f32 %v713, %v759
        %v761 = vpop.f32.mrf.mxu0
        %v762 = vadd.f32 %v713, %v761
        %763 = vmatmul.bf16.gmra.mxu0 %v728
        %v764 = vpop.f32.mrf.mxu0
        %v765 = vadd.f32 %v713, %v764
        %v766 = vpop.f32.mrf.mxu0
        %v767 = vadd.f32 %v713, %v766
        %768 = vmatmul.bf16.gmra.mxu0 %v731
        %v769 = vpop.f32.mrf.mxu0
        %v770 = vadd.f32 %v713, %v769
        %v771 = vpop.f32.mrf.mxu0
        %v772 = vadd.f32 %v713, %v771
        %773 = vmatmul.bf16.gmra.mxu0 %v734
        %v774 = vpop.f32.mrf.mxu0
        %v775 = vadd.f32 %v713, %v774
        %v776 = vpop.f32.mrf.mxu0
        %v777 = vadd.f32 %v713, %v776
        %778 = vmatmul.bf16.gmra.mxu0 %v737
        %v779 = vpop.f32.mrf.mxu0
        %v780 = vadd.f32 %v713, %v779
        %v781 = vpop.f32.mrf.mxu0
        %v782 = vadd.f32 %v713, %v781
        %783 = vmatmul.bf16.gmra.mxu0 %v740
        %v784 = vpop.f32.mrf.mxu0
        %v785 = vadd.f32 %v713, %v784
        %v786 = vpop.f32.mrf.mxu0
        %v787 = vadd.f32 %v713, %v786
        %788 = vmatmul.bf16.gmra.mxu0 %v743
        %v789 = vpop.f32.mrf.mxu0
        %v790 = vadd.f32 %v713, %v789
        %v791 = vpop.f32.mrf.mxu0
        %v792 = vadd.f32 %v713, %v791
        %793 = vdwg.mxu0
        %v794 = vmax.f32 %v755, 0.0
        %v795 = vmax.f32 %v757, 0.0
        %v796 = vmax.f32 %v760, 0.0
        %v797 = vmax.f32 %v762, 0.0
        %v798 = vmax.f32 %v765, 0.0
        %v799 = vmax.f32 %v767, 0.0
        %v800 = vmax.f32 %v770, 0.0
        %v801 = vmax.f32 %v772, 0.0
        %v802 = vmax.f32 %v775, 0.0
        %v803 = vmax.f32 %v777, 0.0
        %v804 = vmax.f32 %v780, 0.0
        %v805 = vmax.f32 %v782, 0.0
        %v806 = vmax.f32 %v785, 0.0
        %v807 = vmax.f32 %v787, 0.0
        %v808 = vmax.f32 %v790, 0.0
        %v809 = vmax.f32 %v792, 0.0
        %v810 = vld [vmem:[%s5] sm:$0xff]
        %v811 = vld [vmem:[%s5 + $0x8] sm:$0xff]
        %v812 = vld [vmem:[%s5 + $0x10] sm:$0xff]
        %v813 = vld [vmem:[%s5 + $0x18] sm:$0xff]
        %v814 = vpack.c.bf16 %v795, %v794
        %v815 = vpack.c.bf16 %v797, %v796
        %v816 = vpack.c.bf16 %v799, %v798
        %v817 = vpack.c.bf16 %v801, %v800
        %v818 = vpack.c.bf16 %v803, %v802
        %v819 = vpack.c.bf16 %v805, %v804
        %v820 = vpack.c.bf16 %v807, %v806
        %v821 = vpack.c.bf16 %v809, %v808
        %v822 = vld [vmem:[%s6] sm:$0x3]
        %v824 = vperm.slane %v822, 0
        %v825 = vperm.slane %v822, 1
        %v832 = vunpack.c.l.b16 %v810
        %v833 = vunpack.c.h.b16 %v810
        %v834 = vunpack.c.l.b16 %v811
        %v835 = vunpack.c.h.b16 %v811
        %v836 = vunpack.c.l.b16 %v812
        %v837 = vunpack.c.h.b16 %v812
        %v838 = vunpack.c.l.b16 %v813
        %v839 = vunpack.c.h.b16 %v813
        %v840 = vpack.c.b16 %v834, %v832
        %v841 = vpack.c.b16 %v835, %v833
        %v842 = vpack.c.b16 %v838, %v836
        %v843 = vpack.c.b16 %v839, %v837
        %vm848 = vcmask 261120
        %v850 = vsel %vm848, %v814, 0
        %v853 = vsel %vm848, %v815, 0
        %v856 = vsel %vm848, %v816, 0
        %v859 = vsel %vm848, %v817, 0
        %v862 = vsel %vm848, %v818, 0
        %v865 = vsel %vm848, %v819, 0
        %v868 = vsel %vm848, %v820, 0
        %v871 = vsel %vm848, %v821, 0
        %873 = vmatpush.bf16.msra.mxu0 0
        %874 = vmatpush.bf16.msra.mxu0 0
        %875 = vmatpush.bf16.msra.mxu0 0
        %876 = vmatpush.bf16.msra.mxu0 0
        %877 = vmatpush.bf16.msra.mxu0 0
        %878 = vmatpush.bf16.msra.mxu0 0
        %879 = vmatpush.bf16.msra.mxu0 %v842
        %880 = vmatpush.bf16.msra.mxu0 %v840
        %881 = vmatmul.bf16.gmra.mxu0 %v850
        %v882 = vpop.f32.mrf.mxu0
        %v883 = vadd.f32 %v824, %v882
        %v884 = vpop.f32.mrf.mxu0
        %v885 = vadd.f32 %v824, %v884
        %886 = vmatmul.bf16.gmra.mxu0 %v853
        %v887 = vpop.f32.mrf.mxu0
        %v888 = vadd.f32 %v824, %v887
        %v889 = vpop.f32.mrf.mxu0
        %v890 = vadd.f32 %v824, %v889
        %891 = vmatmul.bf16.gmra.mxu0 %v856
        %v892 = vpop.f32.mrf.mxu0
        %v893 = vadd.f32 %v824, %v892
        %v894 = vpop.f32.mrf.mxu0
        %v895 = vadd.f32 %v824, %v894
        %896 = vmatmul.bf16.gmra.mxu0 %v859
        %v897 = vpop.f32.mrf.mxu0
        %v898 = vadd.f32 %v824, %v897
        %v899 = vpop.f32.mrf.mxu0
        %v900 = vadd.f32 %v824, %v899
        %901 = vmatmul.bf16.gmra.mxu0 %v862
        %v902 = vpop.f32.mrf.mxu0
        %v903 = vadd.f32 %v824, %v902
        %v904 = vpop.f32.mrf.mxu0
        %v905 = vadd.f32 %v824, %v904
        %906 = vmatmul.bf16.gmra.mxu0 %v865
        %v907 = vpop.f32.mrf.mxu0
        %v908 = vadd.f32 %v824, %v907
        %v909 = vpop.f32.mrf.mxu0
        %v910 = vadd.f32 %v824, %v909
        %911 = vmatmul.bf16.gmra.mxu0 %v868
        %v912 = vpop.f32.mrf.mxu0
        %v913 = vadd.f32 %v824, %v912
        %v914 = vpop.f32.mrf.mxu0
        %v915 = vadd.f32 %v824, %v914
        %916 = vmatmul.bf16.gmra.mxu0 %v871
        %v917 = vpop.f32.mrf.mxu0
        %v918 = vadd.f32 %v824, %v917
        %v919 = vpop.f32.mrf.mxu0
        %v920 = vadd.f32 %v824, %v919
        %921 = vdwg.mxu0
        %922 = vmatpush.bf16.msra.mxu0 0
        %923 = vmatpush.bf16.msra.mxu0 0
        %924 = vmatpush.bf16.msra.mxu0 0
        %925 = vmatpush.bf16.msra.mxu0 0
        %926 = vmatpush.bf16.msra.mxu0 0
        %927 = vmatpush.bf16.msra.mxu0 0
        %928 = vmatpush.bf16.msra.mxu0 %v843
        %929 = vmatpush.bf16.msra.mxu0 %v841
        %930 = vmatmul.bf16.gmra.mxu0 %v850
        %v931 = vpop.f32.mrf.mxu0
        %v932 = vadd.f32 %v825, %v931
        %v933 = vpop.f32.mrf.mxu0
        %v934 = vadd.f32 %v825, %v933
        %935 = vmatmul.bf16.gmra.mxu0 %v853
        %v936 = vpop.f32.mrf.mxu0
        %v937 = vadd.f32 %v825, %v936
        %v938 = vpop.f32.mrf.mxu0
        %v939 = vadd.f32 %v825, %v938
        %940 = vmatmul.bf16.gmra.mxu0 %v856
        %v941 = vpop.f32.mrf.mxu0
        %v942 = vadd.f32 %v825, %v941
        %v943 = vpop.f32.mrf.mxu0
        %v944 = vadd.f32 %v825, %v943
        %945 = vmatmul.bf16.gmra.mxu0 %v859
        %v946 = vpop.f32.mrf.mxu0
        %v947 = vadd.f32 %v825, %v946
        %v948 = vpop.f32.mrf.mxu0
        %v949 = vadd.f32 %v825, %v948
        %950 = vmatmul.bf16.gmra.mxu0 %v862
        %v951 = vpop.f32.mrf.mxu0
        %v952 = vadd.f32 %v825, %v951
        %v953 = vpop.f32.mrf.mxu0
        %v954 = vadd.f32 %v825, %v953
        %955 = vmatmul.bf16.gmra.mxu0 %v865
        %v956 = vpop.f32.mrf.mxu0
        %v957 = vadd.f32 %v825, %v956
        %v958 = vpop.f32.mrf.mxu0
        %v959 = vadd.f32 %v825, %v958
        %960 = vmatmul.bf16.gmra.mxu0 %v868
        %v961 = vpop.f32.mrf.mxu0
        %v962 = vadd.f32 %v825, %v961
        %v963 = vpop.f32.mrf.mxu0
        %v964 = vadd.f32 %v825, %v963
        %965 = vmatmul.bf16.gmra.mxu0 %v871
        %v966 = vpop.f32.mrf.mxu0
        %v967 = vadd.f32 %v825, %v966
        %v968 = vpop.f32.mrf.mxu0
        %v969 = vadd.f32 %v825, %v968
        %970 = vdwg.mxu0
        %v971 = vmax.f32 %v883, 0.0
        %v972 = vmax.f32 %v932, 0.0
        %v973 = vmax.f32 %v885, 0.0
        %v974 = vmax.f32 %v934, 0.0
        %v975 = vmax.f32 %v888, 0.0
        %v976 = vmax.f32 %v937, 0.0
        %v977 = vmax.f32 %v890, 0.0
        %v978 = vmax.f32 %v939, 0.0
        %v979 = vmax.f32 %v893, 0.0
        %v980 = vmax.f32 %v942, 0.0
        %v981 = vmax.f32 %v895, 0.0
        %v982 = vmax.f32 %v944, 0.0
        %v983 = vmax.f32 %v898, 0.0
        %v984 = vmax.f32 %v947, 0.0
        %v985 = vmax.f32 %v900, 0.0
        %v986 = vmax.f32 %v949, 0.0
        %v987 = vmax.f32 %v903, 0.0
        %v988 = vmax.f32 %v952, 0.0
        %v989 = vmax.f32 %v905, 0.0
        %v990 = vmax.f32 %v954, 0.0
        %v991 = vmax.f32 %v908, 0.0
        %v992 = vmax.f32 %v957, 0.0
        %v993 = vmax.f32 %v910, 0.0
        %v994 = vmax.f32 %v959, 0.0
        %v995 = vmax.f32 %v913, 0.0
        %v996 = vmax.f32 %v962, 0.0
        %v997 = vmax.f32 %v915, 0.0
        %v998 = vmax.f32 %v964, 0.0
        %v999 = vmax.f32 %v918, 0.0
        %v1000 = vmax.f32 %v967, 0.0
        %v1001 = vmax.f32 %v920, 0.0
        %v1002 = vmax.f32 %v969, 0.0
        %v1003 = vmax.f32 %v971, %v975
        %v1004 = vmax.f32 %v973, %v977
        %v1005 = vmax.f32 %v1003, %v979
        %v1006 = vmax.f32 %v1004, %v981
        %v1007 = vmax.f32 %v1005, %v983
        %v1008 = vmax.f32 %v1006, %v985
        %v1009 = vmax.f32 %v1007, %v987
        %v1010 = vmax.f32 %v1008, %v989
        %v1011 = vmax.f32 %v1009, %v991
        %v1012 = vmax.f32 %v1010, %v993
        %v1013 = vmax.f32 %v1011, %v995
        %v1014 = vmax.f32 %v1012, %v997
        %v1015 = vmax.f32 %v1013, %v999
        %v1016 = vmax.f32 %v1014, %v1001
        %v1017 = vmax.f32 %v1015, %v1016
        %v1018 = vrot.slane %v1017, 4
        %v1019 = vmax.f32 %v1017, %v1018
        %v1020 = vrot.slane %v1019, 2
        %v1021 = vmax.f32 %v1019, %v1020
        %v1022 = vrot.slane %v1021, 1
        %v1023 = vmax.f32 %v1021, %v1022
        %v1024 = vmax.f32 %v972, %v976
        %v1025 = vmax.f32 %v974, %v978
        %v1026 = vmax.f32 %v1024, %v980
        %v1027 = vmax.f32 %v1025, %v982
        %v1028 = vmax.f32 %v1026, %v984
        %v1029 = vmax.f32 %v1027, %v986
        %v1030 = vmax.f32 %v1028, %v988
        %v1031 = vmax.f32 %v1029, %v990
        %v1032 = vmax.f32 %v1030, %v992
        %v1033 = vmax.f32 %v1031, %v994
        %v1034 = vmax.f32 %v1032, %v996
        %v1035 = vmax.f32 %v1033, %v998
        %v1036 = vmax.f32 %v1034, %v1000
        %v1037 = vmax.f32 %v1035, %v1002
        %v1038 = vmax.f32 %v1036, %v1037
        %v1039 = vrot.slane %v1038, 4
        %v1040 = vmax.f32 %v1038, %v1039
        %v1041 = vrot.slane %v1040, 2
        %v1042 = vmax.f32 %v1040, %v1041
        %v1043 = vrot.slane %v1042, 1
        %v1044 = vmax.f32 %v1042, %v1043
        %p1045 = scmp.eq.s32.totalorder %s32, 0
        // Predicated region
        $region93: #{get_model_forward.7} parent=71 // pred_check
          %p1046 = pneg %p1045
        $region94: #{get_model_forward.7} parent=71 // pred_check_branch
          %1048 = sbr.rel (%p1046) target = $region96
        $region95: #{get_model_forward.7} parent=71 // pred_region
          %v1051 = vrot.slane %v1044, 7
          %vm1052 = vcmask 1040384
          %v1053 = vsel %vm1052, %v1023, %v1051
          %v1055 = vlaneseq
          %vm1056 = vcmp.ge.s32.totalorder %v1055, 0
          %vm1057 = vcmp.lt.s32.totalorder %v1055, 256
          %vm1058 = vmand %vm1056, %vm1057
          %1059 = vst.msk [vmem:[#allocation2] sm:$0x3] %vm1058, %v1053
        $region96: #{get_model_forward.7} parent=71 // pred_fallthru
          _
        %p1060 = scmp.gt.s32.totalorder %s32, 0
        // Predicated region
        $region97: #{get_model_forward.7} parent=71 // pred_check
          %p1061 = pneg %p1060
        $region98: #{get_model_forward.7} parent=71 // pred_check_branch
          %1063 = sbr.rel (%p1061) target = $region100
        $region99: #{get_model_forward.7} parent=71 // pred_region
          %v1064 = vld [vmem:[#allocation2] sm:$0x3]
          %v1067 = vrot.slane %v1044, 7
          %vm1068 = vcmask 1040384
          %v1069 = vsel %vm1068, %v1023, %v1067
          %v1071 = vmax.f32 %v1064, %v1069
          %v1072 = vlaneseq
          %vm1073 = vcmp.ge.s32.totalorder %v1072, 0
          %vm1074 = vcmp.lt.s32.totalorder %v1072, 256
          %vm1075 = vmand %vm1073, %vm1074
          %1076 = vst.msk [vmem:[#allocation2] sm:$0x3] %vm1075, %v1071
        $region100: #{get_model_forward.7} parent=71 // pred_fallthru
          _
        // Predicated region
        $region101: #{get_model_forward.7} parent=71 // pred_check
          %p1077 = pneg %p1045
        $region102: #{get_model_forward.7} parent=71 // pred_check_branch
          %1079 = sbr.rel (%p1077) target = $region104
        $region103: #{get_model_forward.7} parent=71 // pred_region
          %v1080 = vld [vmem:[#allocation2] sm:$0x3]
          %v1081 = vld [vmem:[%s7] sm:$0xf]
          %v1082 = vld [vmem:[%s7 + $0x4] sm:$0xf]
          %v1083 = vld [vmem:[%s7 + $0x8] sm:$0xf]
          %v1084 = vld [vmem:[%s7 + $0xc] sm:$0xf]
          %v1085 = vld [vmem:[%s7 + $0x10] sm:$0xf]
          %v1086 = vld [vmem:[%s7 + $0x14] sm:$0xf]
          %v1087 = vld [vmem:[%s7 + $0x18] sm:$0xf]
          %v1088 = vld [vmem:[%s7 + $0x1c] sm:$0xf]
          %v1089 = vld [vmem:[%s7 + $0x20] sm:$0xf]
          %v1090 = vld [vmem:[%s7 + $0x24] sm:$0xf]
          %v1091 = vld [vmem:[%s7 + $0x28] sm:$0xf]
          %v1092 = vld [vmem:[%s7 + $0x2c] sm:$0xf]
          %v1093 = vld [vmem:[%s7 + $0x30] sm:$0xf]
          %v1094 = vld [vmem:[%s7 + $0x34] sm:$0xf]
          %v1095 = vld [vmem:[%s7 + $0x38] sm:$0xf]
          %v1096 = vld [vmem:[%s7 + $0x3c] sm:$0xf]
          %v1097 = vld [vmem:[%s7 + $0x40] sm:$0xf]
          %v1098 = vld [vmem:[%s7 + $0x44] sm:$0xf]
          %v1099 = vld [vmem:[%s7 + $0x48] sm:$0xf]
          %v1100 = vld [vmem:[%s7 + $0x4c] sm:$0xf]
          %v1101 = vld [vmem:[%s7 + $0x50] sm:$0xf]
          %v1102 = vld [vmem:[%s7 + $0x54] sm:$0xf]
          %v1103 = vld [vmem:[%s7 + $0x58] sm:$0xf]
          %v1104 = vld [vmem:[%s7 + $0x5c] sm:$0xf]
          %v1105 = vld [vmem:[%s7 + $0x60] sm:$0xf]
          %v1106 = vld [vmem:[%s7 + $0x64] sm:$0xf]
          %v1107 = vld [vmem:[%s7 + $0x68] sm:$0xf]
          %v1108 = vld [vmem:[%s7 + $0x6c] sm:$0xf]
          %v1109 = vld [vmem:[%s7 + $0x70] sm:$0xf]
          %v1110 = vld [vmem:[%s7 + $0x74] sm:$0xf]
          %v1111 = vld [vmem:[%s7 + $0x78] sm:$0xf]
          %v1112 = vld [vmem:[%s7 + $0x7c] sm:$0xf]
          %v1114 = vperm.slane %v1080, 0
          %v1115 = vperm.slane %v1080, 1
          %v1118 = vpack.c.bf16 %v1114, %v1114
          %v1119 = vpack.c.bf16 %v1115, %v1115
          %v1120 = vld [vmem:[#allocation8] sm:$0x1]
          %v1153 = vunpack.c.l.b16 %v1081
          %v1154 = vunpack.c.l.b16 %v1082
          %v1155 = vunpack.c.l.b16 %v1083
          %v1156 = vunpack.c.l.b16 %v1084
          %v1157 = vunpack.c.l.b16 %v1085
          %v1158 = vunpack.c.l.b16 %v1086
          %v1159 = vunpack.c.l.b16 %v1087
          %v1160 = vunpack.c.l.b16 %v1088
          %v1161 = vunpack.c.l.b16 %v1089
          %v1162 = vunpack.c.l.b16 %v1090
          %v1163 = vunpack.c.l.b16 %v1091
          %v1164 = vunpack.c.l.b16 %v1092
          %v1165 = vunpack.c.l.b16 %v1093
          %v1166 = vunpack.c.l.b16 %v1094
          %v1167 = vunpack.c.l.b16 %v1095
          %v1168 = vunpack.c.l.b16 %v1096
          %v1169 = vunpack.c.l.b16 %v1097
          %v1170 = vunpack.c.l.b16 %v1098
          %v1171 = vunpack.c.l.b16 %v1099
          %v1172 = vunpack.c.l.b16 %v1100
          %v1173 = vunpack.c.l.b16 %v1101
          %v1174 = vunpack.c.l.b16 %v1102
          %v1175 = vunpack.c.l.b16 %v1103
          %v1176 = vunpack.c.l.b16 %v1104
          %v1177 = vunpack.c.l.b16 %v1105
          %v1178 = vunpack.c.l.b16 %v1106
          %v1179 = vunpack.c.l.b16 %v1107
          %v1180 = vunpack.c.l.b16 %v1108
          %v1181 = vunpack.c.l.b16 %v1109
          %v1182 = vunpack.c.l.b16 %v1110
          %v1183 = vunpack.c.l.b16 %v1111
          %v1184 = vunpack.c.l.b16 %v1112
          %v1185 = vpack.c.b16 %v1154, %v1153
          %v1186 = vpack.c.b16 %v1156, %v1155
          %v1187 = vpack.c.b16 %v1158, %v1157
          %v1188 = vpack.c.b16 %v1160, %v1159
          %v1189 = vpack.c.b16 %v1162, %v1161
          %v1190 = vpack.c.b16 %v1164, %v1163
          %v1191 = vpack.c.b16 %v1166, %v1165
          %v1192 = vpack.c.b16 %v1168, %v1167
          %v1193 = vpack.c.b16 %v1170, %v1169
          %v1194 = vpack.c.b16 %v1172, %v1171
          %v1195 = vpack.c.b16 %v1174, %v1173
          %v1196 = vpack.c.b16 %v1176, %v1175
          %v1197 = vpack.c.b16 %v1178, %v1177
          %v1198 = vpack.c.b16 %v1180, %v1179
          %v1199 = vpack.c.b16 %v1182, %v1181
          %v1200 = vpack.c.b16 %v1184, %v1183
          %1217 = vmatpush.bf16.msra.mxu0 %v1192
          %1218 = vmatpush.bf16.msra.mxu0 %v1191
          %1219 = vmatpush.bf16.msra.mxu0 %v1190
          %1220 = vmatpush.bf16.msra.mxu0 %v1189
          %1221 = vmatpush.bf16.msra.mxu0 %v1188
          %1222 = vmatpush.bf16.msra.mxu0 %v1187
          %1223 = vmatpush.bf16.msra.mxu0 %v1186
          %1224 = vmatpush.bf16.msra.mxu0 %v1185
          %1225 = vmatmul.bf16.gmra.mxu0 %v1118
          %v1226 = vpop.f32.mrf.mxu0
          %v1227 = vadd.f32 %v1120, %v1226
          %v1228 = vpop.f32.mrf.mxu0
          %1229 = vdwg.mxu0
          %1230 = vmatpush.bf16.msra.mxu0 %v1200
          %1231 = vmatpush.bf16.msra.mxu0 %v1199
          %1232 = vmatpush.bf16.msra.mxu0 %v1198
          %1233 = vmatpush.bf16.msra.mxu0 %v1197
          %1234 = vmatpush.bf16.msra.mxu0 %v1196
          %1235 = vmatpush.bf16.msra.mxu0 %v1195
          %1236 = vmatpush.bf16.msra.mxu0 %v1194
          %1237 = vmatpush.bf16.msra.mxu0 %v1193
          %1238 = vmatmul.bf16.gmra.mxu0 %v1119
          %v1239 = vpop.f32.mrf.mxu0
          %v1240 = vadd.f32 %v1227, %v1239
          %v1241 = vpop.f32.mrf.mxu0
          %1242 = vdwg.mxu0
          %v1243 = vmax.f32 %v1240, 0.0
          %v1244 = vld [vmem:[%s9] sm:$0xf]
          %v1245 = vld [vmem:[%s9 + $0x4] sm:$0xf]
          %v1246 = vld [vmem:[%s9 + $0x8] sm:$0xf]
          %v1247 = vld [vmem:[%s9 + $0xc] sm:$0xf]
          %v1248 = vld [vmem:[%s9 + $0x10] sm:$0xf]
          %v1249 = vld [vmem:[%s9 + $0x14] sm:$0xf]
          %v1250 = vld [vmem:[%s9 + $0x18] sm:$0xf]
          %v1251 = vld [vmem:[%s9 + $0x1c] sm:$0xf]
          %v1252 = vld [vmem:[%s9 + $0x20] sm:$0xf]
          %v1253 = vld [vmem:[%s9 + $0x24] sm:$0xf]
          %v1254 = vld [vmem:[%s9 + $0x28] sm:$0xf]
          %v1255 = vld [vmem:[%s9 + $0x2c] sm:$0xf]
          %v1256 = vld [vmem:[%s9 + $0x30] sm:$0xf]
          %v1257 = vld [vmem:[%s9 + $0x34] sm:$0xf]
          %v1258 = vld [vmem:[%s9 + $0x38] sm:$0xf]
          %v1259 = vld [vmem:[%s9 + $0x3c] sm:$0xf]
          %v1260 = vpack.c.bf16 %v1243, %v1243
          %v1261 = vld [vmem:[#allocation10] sm:$0x1]
          %v1278 = vunpack.c.l.b16 %v1244
          %v1279 = vunpack.c.l.b16 %v1245
          %v1280 = vunpack.c.l.b16 %v1246
          %v1281 = vunpack.c.l.b16 %v1247
          %v1282 = vunpack.c.l.b16 %v1248
          %v1283 = vunpack.c.l.b16 %v1249
          %v1284 = vunpack.c.l.b16 %v1250
          %v1285 = vunpack.c.l.b16 %v1251
          %v1286 = vunpack.c.l.b16 %v1252
          %v1287 = vunpack.c.l.b16 %v1253
          %v1288 = vunpack.c.l.b16 %v1254
          %v1289 = vunpack.c.l.b16 %v1255
          %v1290 = vunpack.c.l.b16 %v1256
          %v1291 = vunpack.c.l.b16 %v1257
          %v1292 = vunpack.c.l.b16 %v1258
          %v1293 = vunpack.c.l.b16 %v1259
          %v1294 = vpack.c.b16 %v1279, %v1278
          %v1295 = vpack.c.b16 %v1281, %v1280
          %v1296 = vpack.c.b16 %v1283, %v1282
          %v1297 = vpack.c.b16 %v1285, %v1284
          %v1298 = vpack.c.b16 %v1287, %v1286
          %v1299 = vpack.c.b16 %v1289, %v1288
          %v1300 = vpack.c.b16 %v1291, %v1290
          %v1301 = vpack.c.b16 %v1293, %v1292
          %1310 = vmatpush.bf16.msra.mxu0 %v1301
          %1311 = vmatpush.bf16.msra.mxu0 %v1300
          %1312 = vmatpush.bf16.msra.mxu0 %v1299
          %1313 = vmatpush.bf16.msra.mxu0 %v1298
          %1314 = vmatpush.bf16.msra.mxu0 %v1297
          %1315 = vmatpush.bf16.msra.mxu0 %v1296
          %1316 = vmatpush.bf16.msra.mxu0 %v1295
          %1317 = vmatpush.bf16.msra.mxu0 %v1294
          %1318 = vmatmul.bf16.gmra.mxu0 %v1260
          %v1319 = vpop.f32.mrf.mxu0
          %v1320 = vadd.f32 %v1261, %v1319
          %v1321 = vpop.f32.mrf.mxu0
          %1322 = vdwg.mxu0
          %v1323 = vmax.f32 %v1320, 0.0
          %v1324 = vld [vmem:[%s11] sm:$0xff]
          %v1325 = vld [vmem:[%s11 + $0x8] sm:$0xff]
          %v1326 = vld [vmem:[%s11 + $0x10] sm:$0xff]
          %v1327 = vld [vmem:[%s11 + $0x18] sm:$0xff]
          %v1328 = vld [vmem:[%s11 + $0x20] sm:$0xff]
          %v1329 = vld [vmem:[%s11 + $0x28] sm:$0xff]
          %v1330 = vld [vmem:[%s11 + $0x30] sm:$0xff]
          %v1331 = vld [vmem:[%s11 + $0x38] sm:$0xff]
          %v1332 = vpack.c.bf16 %v1323, %v1323
          %v1333 = vld [vmem:[%s12] sm:$0x3]
          %v1342 = vunpack.c.l.b16 %v1324
          %v1343 = vunpack.c.h.b16 %v1324
          %v1344 = vunpack.c.l.b16 %v1325
          %v1345 = vunpack.c.h.b16 %v1325
          %v1346 = vunpack.c.l.b16 %v1326
          %v1347 = vunpack.c.h.b16 %v1326
          %v1348 = vunpack.c.l.b16 %v1327
          %v1349 = vunpack.c.h.b16 %v1327
          %v1350 = vunpack.c.l.b16 %v1328
          %v1351 = vunpack.c.h.b16 %v1328
          %v1352 = vunpack.c.l.b16 %v1329
          %v1353 = vunpack.c.h.b16 %v1329
          %v1354 = vunpack.c.l.b16 %v1330
          %v1355 = vunpack.c.h.b16 %v1330
          %v1356 = vunpack.c.l.b16 %v1331
          %v1357 = vunpack.c.h.b16 %v1331
          %v1358 = vpack.c.b16 %v1344, %v1342
          %v1359 = vpack.c.b16 %v1345, %v1343
          %v1360 = vpack.c.b16 %v1348, %v1346
          %v1361 = vpack.c.b16 %v1349, %v1347
          %v1362 = vpack.c.b16 %v1352, %v1350
          %v1363 = vpack.c.b16 %v1353, %v1351
          %v1364 = vpack.c.b16 %v1356, %v1354
          %v1365 = vpack.c.b16 %v1357, %v1355
          %v1375 = vperm.slane %v1333, 0
          %v1376 = vperm.slane %v1333, 1
          %vm1379 = vcmask 523264
          %v1381 = vsel %vm1379, %v1332, 0
          %1383 = vmatpush.bf16.msra.mxu0 0
          %1384 = vmatpush.bf16.msra.mxu0 0
          %1385 = vmatpush.bf16.msra.mxu0 0
          %1386 = vmatpush.bf16.msra.mxu0 0
          %1387 = vmatpush.bf16.msra.mxu0 %v1364
          %1388 = vmatpush.bf16.msra.mxu0 %v1362
          %1389 = vmatpush.bf16.msra.mxu0 %v1360
          %1390 = vmatpush.bf16.msra.mxu0 %v1358
          %1391 = vmatmul.bf16.gmra.mxu0 %v1381
          %v1392 = vpop.f32.mrf.mxu0
          %v1393 = vadd.f32 %v1375, %v1392
          %v1394 = vpop.f32.mrf.mxu0
          %1395 = vdwg.mxu0
          %1396 = vmatpush.bf16.msra.mxu0 0
          %1397 = vmatpush.bf16.msra.mxu0 0
          %1398 = vmatpush.bf16.msra.mxu0 0
          %1399 = vmatpush.bf16.msra.mxu0 0
          %1400 = vmatpush.bf16.msra.mxu0 %v1365
          %1401 = vmatpush.bf16.msra.mxu0 %v1363
          %1402 = vmatpush.bf16.msra.mxu0 %v1361
          %1403 = vmatpush.bf16.msra.mxu0 %v1359
          %1404 = vmatmul.bf16.gmra.mxu0 %v1381
          %v1405 = vpop.f32.mrf.mxu0
          %v1406 = vadd.f32 %v1376, %v1405
          %v1407 = vpop.f32.mrf.mxu0
          %1408 = vdwg.mxu0
          %v1411 = vrot.slane %v1406, 7
          %vm1412 = vcmask 1040384
          %v1413 = vsel %vm1412, %v1393, %v1411
          %v1415 = vlaneseq
          %vm1416 = vcmp.ge.s32.totalorder %v1415, 0
          %vm1417 = vcmp.lt.s32.totalorder %v1415, 256
          %vm1418 = vmand %vm1416, %vm1417
          %1419 = vst.msk [vmem:[%s541] sm:$0x3] %vm1418, %v1413
        $region104: #{get_model_forward.7} parent=71 // pred_fallthru
          _
        %p1420 = scmp.lt.s32.totalorder %s31, 1
        %s1421 = scalar_select %p1420, %s31, 1
        %s1422 = smul.addr %s1421, 2
        %s1423 = scalar_lea.vmem %s13, %s1422
        // Predicated region
        $region105: #{get_model_forward.7} parent=71 // pred_check
          %p1424 = pneg %p337
        $region106: #{get_model_forward.7} parent=71 // pred_check_branch
          %1426 = sbr.rel (%p1424) target = $region108
        $region107: #{get_model_forward.7} parent=71 // pred_region
          _
        $region108: #{get_model_forward.7} parent=71 // pred_fallthru
          _
      $region72: #{get_model_forward.7} parent=5 // pred_fallthru
        _
      %p1427 = scmp.le.s32.totalorder 2, %s22
      // Predicated region
      $region109: #{get_model_forward.7} parent=5 // pred_check
        %p1428 = pneg %p1427
      $region110: #{get_model_forward.7} parent=5 // pred_check_branch
        %1430 = sbr.rel (%p1428) target = $region112
      $region111: #{get_model_forward.7} parent=5 // pred_region
        %s1431 = ssub.s32 %s22, 2
        // Predicated region
        $region113: #{get_model_forward.7} parent=111 // pred_check
          %p1432 = pneg %p343
        $region114: #{get_model_forward.7} parent=111 // pred_check_branch
          %1434 = sbr.rel (%p1432) target = $region116
        $region115: #{get_model_forward.7} parent=111 // pred_region
          %p1435 = scmp.lt.s32.totalorder %s33, 1
          %s1436 = scalar_select %p1435, %s33, 1
          %s1437 = smul.addr %s1436, 2
          %s1438 = scalar_lea.vmem %s13, %s1437
        $region116: #{get_model_forward.7} parent=111 // pred_fallthru
          _
      $region112: #{get_model_forward.7} parent=5 // pred_fallthru
        _
    $region6: #{get_model_forward.7} parent=1 // loop_footer
      %s26 = sadd.s32 1, %s22
    $region7: #{get_model_forward.7} parent=1 // loop_footer_branch
      %21 = sbr.rel target = $region3
    $region8: #{get_model_forward.7} parent=1 // loop_exit
      _
    %1439 = vsyncpa [#allocation4], 1
    %s1440 = scalar_lea.sflag [#allocation4], 1
    %1441 = vsyncpa %s1440, 1
    %1442 = vsyncpa [#allocation6], 1
    %1443 = vsyncpa [#allocation9], 1

// kernel: get_model_forward.9
$region0: #{get_model_forward.9}
  #allocation0 [shape = 'u32[]', space=smem, size = 0x4, offset = 0x4, fixed_abs, tag = 'smem constant byte address 0x4 - core index']
  #allocation1 [shape = 'u32[72,128]{1,0:T(1,128)}', space=vmem, size = 0x9000, scoped, tag = 'internal scratch']
  %s0 = inlined_call_operand.vmem [shape: f32[2,1,256], index: 0, kind: input, shape index: {}]
  %s1 = inlined_call_operand.vmem [shape: bf16[2,128,16], index: 1, kind: input, shape index: {}]
  %s2 = inlined_call_operand.vmem [shape: bf16[256,128], index: 2, kind: input, shape index: {}]
  %s3 = inlined_call_operand.vmem [shape: bf16[16,128], index: 3, kind: input, shape index: {}]
  %s4 = inlined_call_operand.vmem [shape: f32[1,128], index: 4, kind: input, shape index: {}]
  %s5 = inlined_call_operand.vmem [shape: bf16[128,64], index: 5, kind: input, shape index: {}]
  %s6 = inlined_call_operand.vmem [shape: f32[1,64], index: 6, kind: input, shape index: {}]
  %s7 = inlined_call_operand.vmem [shape: bf16[64,32], index: 7, kind: input, shape index: {}]
  %s8 = inlined_call_operand.vmem [shape: f32[1,32], index: 8, kind: input, shape index: {}]
  %s9 = inlined_call_operand.vmem [shape: bf16[32,13], index: 9, kind: input, shape index: {}]
  %s10 = inlined_call_operand.vmem [shape: f32[1,13], index: 10, kind: input, shape index: {}]
  %s11 = inlined_call_operand.vmem [shape: f32[2,128,13], index: 11, kind: output, shape index: {}]
  %s12 = sld [smem:[#allocation0]]
  $region77: #{get_model_forward.9} parent=0
    _
  %s14 = ssub.s32 1, %s12
  %s15 = scalar_select 0, %s14, %s12
  loop: start=0, step=1, limit=4
  $region2: #{get_model_forward.9} parent=0 // loop_pre_header
    _
  $region3: #{get_model_forward.9} parent=0 // loop_header
    %s17 = sphi 0, %s21
    %p18 = scmp.ge.s32.totalorder %s17, 4
    %s24 = sphi 0, %s36
    %s25 = sphi 0, %s32
    %s26 = sphi 0, %s24
    %s27 = sphi 0, %s25
    %s28 = sphi 0, %s26
    %s29 = sphi 0, %s27
    %s39 = sphi 0, %s41
    %s42 = sphi 0, %s39
    %s43 = sphi 0, %s42
    %s59 = sphi 0, %s43
    %s67 = sphi 0, %s69
    %s70 = sphi 0, %s67
    %s71 = sphi 0, %s70
    %s87 = sphi 0, %s71
    %s91 = sphi 0, %s91
    %s93 = sphi 0, %s91
    %s94 = sphi 0, %s93
    %s108 = sphi 0, %s94
    %s112 = sphi 0, %s112
    %s114 = sphi 0, %s112
    %s115 = sphi 0, %s114
    %s129 = sphi 0, %s115
    %s133 = sphi 0, %s133
    %s135 = sphi 0, %s133
    %s136 = sphi 0, %s135
    %s150 = sphi 0, %s136
    %s154 = sphi 0, %s154
    %s156 = sphi 0, %s154
    %s157 = sphi 0, %s156
    %s171 = sphi 0, %s157
    %s175 = sphi 0, %s175
    %s177 = sphi 0, %s175
    %s178 = sphi 0, %s177
    %s192 = sphi 0, %s178
    %s196 = sphi 0, %s196
    %s198 = sphi 0, %s196
    %s199 = sphi 0, %s198
    %s213 = sphi 0, %s199
    %s217 = sphi 0, %s217
    %s219 = sphi 0, %s217
    %s220 = sphi 0, %s219
    %s234 = sphi 0, %s220
    %s238 = sphi 0, %s238
    %s240 = sphi 0, %s238
    %s241 = sphi 0, %s240
    %s255 = sphi 0, %s241
    %s259 = sphi 0, %s259
    %s261 = sphi 0, %s259
    %s262 = sphi 0, %s261
    %s276 = sphi 0, %s262
    %s284 = sphi 0, %s286
    %s287 = sphi 0, %s284
    %s288 = sphi 0, %s287
    %s304 = sphi 0, %s288
  $region4: #{get_model_forward.9} parent=0 // loop_header_branch
    %20 = sbr.rel (%p18) target = $region8
  $region5: #{get_model_forward.9} parent=0 // loop_body
    %s22 = ssub.s32 %s17, 1
    %s23 = ssub.s32 %s17, 2
    %s30 = sadd.s32 1, %s25
    %p31 = scmp.ge.s32.totalorder %s30, 1
    %s32 = scalar_select %p31, 0, %s30
    %s33 = sadd.s32 1, %s24
    %s34 = scalar_select %p31, %s33, %s24
    %p35 = scmp.ge.s32.totalorder %s34, 2
    %s36 = scalar_select %p35, 0, %s34
    %s37 = ssub.s32 %s24, %s36
    %p38 = scmp.eq.s32.totalorder %s37, 0
    %s40 = sadd.s32 %s39, 1
    %s41 = scalar_select %p38, %s39, %s40
    %p44 = pneg %p38
    %p45 = scmp.eq.s32.totalorder %s17, 1
    %p46 = por %p44, %p45
    %p47 = scmp.ne.s32.totalorder %s39, %s42
    %p48 = scmp.eq.s32.totalorder %s17, 0
    %p49 = por %p47, %p48
    %p50 = scmp.ne.s32.totalorder %s39, %s42
    %p51 = scmp.eq.s32.totalorder %s22, 1
    %p52 = por %p50, %p51
    %p53 = scmp.ne.s32.totalorder %s42, %s43
    %p54 = scmp.eq.s32.totalorder %s22, 0
    %p55 = por %p53, %p54
    %p56 = scmp.ne.s32.totalorder %s42, %s43
    %p57 = scmp.eq.s32.totalorder %s23, 1
    %p58 = por %p56, %p57
    %p60 = scmp.ne.s32.totalorder %s43, %s59
    %p61 = scmp.eq.s32.totalorder %s23, 0
    %p62 = por %p60, %p61
    %s63 = ssub.s32 %s24, %s36
    %s64 = ssub.s32 %s25, %s32
    %s65 = sor.u32 %s63, %s64
    %p66 = scmp.eq.s32.totalorder %s65, 0
    %s68 = sadd.s32 %s67, 1
    %s69 = scalar_select %p66, %s67, %s68
    %p72 = pneg %p66
    %p73 = scmp.eq.s32.totalorder %s17, 1
    %p74 = por %p72, %p73
    %p75 = scmp.ne.s32.totalorder %s67, %s70
    %p76 = scmp.eq.s32.totalorder %s17, 0
    %p77 = por %p75, %p76
    %p78 = scmp.ne.s32.totalorder %s67, %s70
    %p79 = scmp.eq.s32.totalorder %s22, 1
    %p80 = por %p78, %p79
    %p81 = scmp.ne.s32.totalorder %s70, %s71
    %p82 = scmp.eq.s32.totalorder %s22, 0
    %p83 = por %p81, %p82
    %p84 = scmp.ne.s32.totalorder %s70, %s71
    %p85 = scmp.eq.s32.totalorder %s23, 1
    %p86 = por %p84, %p85
    %p88 = scmp.ne.s32.totalorder %s71, %s87
    %p89 = scmp.eq.s32.totalorder %s23, 0
    %p90 = por %p88, %p89
    %s92 = sadd.s32 %s91, 1
    %p95 = scmp.eq.s32.totalorder %s17, 1
    %p96 = scmp.ne.s32.totalorder %s91, %s93
    %p97 = scmp.eq.s32.totalorder %s17, 0
    %p98 = por %p96, %p97
    %p99 = scmp.ne.s32.totalorder %s91, %s93
    %p100 = scmp.eq.s32.totalorder %s22, 1
    %p101 = por %p99, %p100
    %p102 = scmp.ne.s32.totalorder %s93, %s94
    %p103 = scmp.eq.s32.totalorder %s22, 0
    %p104 = por %p102, %p103
    %p105 = scmp.ne.s32.totalorder %s93, %s94
    %p106 = scmp.eq.s32.totalorder %s23, 1
    %p107 = por %p105, %p106
    %p109 = scmp.ne.s32.totalorder %s94, %s108
    %p110 = scmp.eq.s32.totalorder %s23, 0
    %p111 = por %p109, %p110
    %s113 = sadd.s32 %s112, 1
    %p116 = scmp.eq.s32.totalorder %s17, 1
    %p117 = scmp.ne.s32.totalorder %s112, %s114
    %p118 = scmp.eq.s32.totalorder %s17, 0
    %p119 = por %p117, %p118
    %p120 = scmp.ne.s32.totalorder %s112, %s114
    %p121 = scmp.eq.s32.totalorder %s22, 1
    %p122 = por %p120, %p121
    %p123 = scmp.ne.s32.totalorder %s114, %s115
    %p124 = scmp.eq.s32.totalorder %s22, 0
    %p125 = por %p123, %p124
    %p126 = scmp.ne.s32.totalorder %s114, %s115
    %p127 = scmp.eq.s32.totalorder %s23, 1
    %p128 = por %p126, %p127
    %p130 = scmp.ne.s32.totalorder %s115, %s129
    %p131 = scmp.eq.s32.totalorder %s23, 0
    %p132 = por %p130, %p131
    %s134 = sadd.s32 %s133, 1
    %p137 = scmp.eq.s32.totalorder %s17, 1
    %p138 = scmp.ne.s32.totalorder %s133, %s135
    %p139 = scmp.eq.s32.totalorder %s17, 0
    %p140 = por %p138, %p139
    %p141 = scmp.ne.s32.totalorder %s133, %s135
    %p142 = scmp.eq.s32.totalorder %s22, 1
    %p143 = por %p141, %p142
    %p144 = scmp.ne.s32.totalorder %s135, %s136
    %p145 = scmp.eq.s32.totalorder %s22, 0
    %p146 = por %p144, %p145
    %p147 = scmp.ne.s32.totalorder %s135, %s136
    %p148 = scmp.eq.s32.totalorder %s23, 1
    %p149 = por %p147, %p148
    %p151 = scmp.ne.s32.totalorder %s136, %s150
    %p152 = scmp.eq.s32.totalorder %s23, 0
    %p153 = por %p151, %p152
    %s155 = sadd.s32 %s154, 1
    %p158 = scmp.eq.s32.totalorder %s17, 1
    %p159 = scmp.ne.s32.totalorder %s154, %s156
    %p160 = scmp.eq.s32.totalorder %s17, 0
    %p161 = por %p159, %p160
    %p162 = scmp.ne.s32.totalorder %s154, %s156
    %p163 = scmp.eq.s32.totalorder %s22, 1
    %p164 = por %p162, %p163
    %p165 = scmp.ne.s32.totalorder %s156, %s157
    %p166 = scmp.eq.s32.totalorder %s22, 0
    %p167 = por %p165, %p166
    %p168 = scmp.ne.s32.totalorder %s156, %s157
    %p169 = scmp.eq.s32.totalorder %s23, 1
    %p170 = por %p168, %p169
    %p172 = scmp.ne.s32.totalorder %s157, %s171
    %p173 = scmp.eq.s32.totalorder %s23, 0
    %p174 = por %p172, %p173
    %s176 = sadd.s32 %s175, 1
    %p179 = scmp.eq.s32.totalorder %s17, 1
    %p180 = scmp.ne.s32.totalorder %s175, %s177
    %p181 = scmp.eq.s32.totalorder %s17, 0
    %p182 = por %p180, %p181
    %p183 = scmp.ne.s32.totalorder %s175, %s177
    %p184 = scmp.eq.s32.totalorder %s22, 1
    %p185 = por %p183, %p184
    %p186 = scmp.ne.s32.totalorder %s177, %s178
    %p187 = scmp.eq.s32.totalorder %s22, 0
    %p188 = por %p186, %p187
    %p189 = scmp.ne.s32.totalorder %s177, %s178
    %p190 = scmp.eq.s32.totalorder %s23, 1
    %p191 = por %p189, %p190
    %p193 = scmp.ne.s32.totalorder %s178, %s192
    %p194 = scmp.eq.s32.totalorder %s23, 0
    %p195 = por %p193, %p194
    %s197 = sadd.s32 %s196, 1
    %p200 = scmp.eq.s32.totalorder %s17, 1
    %p201 = scmp.ne.s32.totalorder %s196, %s198
    %p202 = scmp.eq.s32.totalorder %s17, 0
    %p203 = por %p201, %p202
    %p204 = scmp.ne.s32.totalorder %s196, %s198
    %p205 = scmp.eq.s32.totalorder %s22, 1
    %p206 = por %p204, %p205
    %p207 = scmp.ne.s32.totalorder %s198, %s199
    %p208 = scmp.eq.s32.totalorder %s22, 0
    %p209 = por %p207, %p208
    %p210 = scmp.ne.s32.totalorder %s198, %s199
    %p211 = scmp.eq.s32.totalorder %s23, 1
    %p212 = por %p210, %p211
    %p214 = scmp.ne.s32.totalorder %s199, %s213
    %p215 = scmp.eq.s32.totalorder %s23, 0
    %p216 = por %p214, %p215
    %s218 = sadd.s32 %s217, 1
    %p221 = scmp.eq.s32.totalorder %s17, 1
    %p222 = scmp.ne.s32.totalorder %s217, %s219
    %p223 = scmp.eq.s32.totalorder %s17, 0
    %p224 = por %p222, %p223
    %p225 = scmp.ne.s32.totalorder %s217, %s219
    %p226 = scmp.eq.s32.totalorder %s22, 1
    %p227 = por %p225, %p226
    %p228 = scmp.ne.s32.totalorder %s219, %s220
    %p229 = scmp.eq.s32.totalorder %s22, 0
    %p230 = por %p228, %p229
    %p231 = scmp.ne.s32.totalorder %s219, %s220
    %p232 = scmp.eq.s32.totalorder %s23, 1
    %p233 = por %p231, %p232
    %p235 = scmp.ne.s32.totalorder %s220, %s234
    %p236 = scmp.eq.s32.totalorder %s23, 0
    %p237 = por %p235, %p236
    %s239 = sadd.s32 %s238, 1
    %p242 = scmp.eq.s32.totalorder %s17, 1
    %p243 = scmp.ne.s32.totalorder %s238, %s240
    %p244 = scmp.eq.s32.totalorder %s17, 0
    %p245 = por %p243, %p244
    %p246 = scmp.ne.s32.totalorder %s238, %s240
    %p247 = scmp.eq.s32.totalorder %s22, 1
    %p248 = por %p246, %p247
    %p249 = scmp.ne.s32.totalorder %s240, %s241
    %p250 = scmp.eq.s32.totalorder %s22, 0
    %p251 = por %p249, %p250
    %p252 = scmp.ne.s32.totalorder %s240, %s241
    %p253 = scmp.eq.s32.totalorder %s23, 1
    %p254 = por %p252, %p253
    %p256 = scmp.ne.s32.totalorder %s241, %s255
    %p257 = scmp.eq.s32.totalorder %s23, 0
    %p258 = por %p256, %p257
    %s260 = sadd.s32 %s259, 1
    %p263 = scmp.eq.s32.totalorder %s17, 1
    %p264 = scmp.ne.s32.totalorder %s259, %s261
    %p265 = scmp.eq.s32.totalorder %s17, 0
    %p266 = por %p264, %p265
    %p267 = scmp.ne.s32.totalorder %s259, %s261
    %p268 = scmp.eq.s32.totalorder %s22, 1
    %p269 = por %p267, %p268
    %p270 = scmp.ne.s32.totalorder %s261, %s262
    %p271 = scmp.eq.s32.totalorder %s22, 0
    %p272 = por %p270, %p271
    %p273 = scmp.ne.s32.totalorder %s261, %s262
    %p274 = scmp.eq.s32.totalorder %s23, 1
    %p275 = por %p273, %p274
    %p277 = scmp.ne.s32.totalorder %s262, %s276
    %p278 = scmp.eq.s32.totalorder %s23, 0
    %p279 = por %p277, %p278
    %s280 = ssub.s32 %s24, %s36
    %s281 = ssub.s32 %s25, %s32
    %s282 = sor.u32 %s280, %s281
    %p283 = scmp.eq.s32.totalorder %s282, 0
    %s285 = sadd.s32 %s284, 1
    %s286 = scalar_select %p283, %s284, %s285
    %p289 = pneg %p283
    %p290 = scmp.eq.s32.totalorder %s17, 1
    %p291 = por %p289, %p290
    %p292 = scmp.ne.s32.totalorder %s284, %s287
    %p293 = scmp.eq.s32.totalorder %s17, 0
    %p294 = por %p292, %p293
    %p295 = scmp.ne.s32.totalorder %s284, %s287
    %p296 = scmp.eq.s32.totalorder %s22, 1
    %p297 = por %p295, %p296
    %p298 = scmp.ne.s32.totalorder %s287, %s288
    %p299 = scmp.eq.s32.totalorder %s22, 0
    %p300 = por %p298, %p299
    %p301 = scmp.ne.s32.totalorder %s287, %s288
    %p302 = scmp.eq.s32.totalorder %s23, 1
    %p303 = por %p301, %p302
    %p305 = scmp.ne.s32.totalorder %s288, %s304
    %p306 = scmp.eq.s32.totalorder %s23, 0
    %p307 = por %p305, %p306
    %p308 = scmp.le.s32.totalorder 1, %s17
    %p309 = scmp.lt.s32.totalorder %s17, 3
    %p310 = pnand %p308, %p309
    %p311 = pneg %p310
    // Predicated region
    $region9: #{get_model_forward.9} parent=5 // pred_check
      _
    $region10: #{get_model_forward.9} parent=5 // pred_check_branch
      %313 = sbr.rel (%p310) target = $region12
    $region11: #{get_model_forward.9} parent=5 // pred_region
      %s314 = ssub.s32 %s17, 1
      // Predicated region
      $region13: #{get_model_forward.9} parent=11 // pred_check
        %p315 = pneg %p104
      $region14: #{get_model_forward.9} parent=11 // pred_check_branch
        %317 = sbr.rel (%p315) target = $region16
      $region15: #{get_model_forward.9} parent=11 // pred_region
        _
      $region16: #{get_model_forward.9} parent=11 // pred_fallthru
        _
      // Predicated region
      $region17: #{get_model_forward.9} parent=11 // pred_check
        %p318 = pneg %p125
      $region18: #{get_model_forward.9} parent=11 // pred_check_branch
        %320 = sbr.rel (%p318) target = $region20
      $region19: #{get_model_forward.9} parent=11 // pred_region
        _
      $region20: #{get_model_forward.9} parent=11 // pred_fallthru
        _
      // Predicated region
      $region21: #{get_model_forward.9} parent=11 // pred_check
        %p321 = pneg %p146
      $region22: #{get_model_forward.9} parent=11 // pred_check_branch
        %323 = sbr.rel (%p321) target = $region24
      $region23: #{get_model_forward.9} parent=11 // pred_region
        _
      $region24: #{get_model_forward.9} parent=11 // pred_fallthru
        _
      // Predicated region
      $region25: #{get_model_forward.9} parent=11 // pred_check
        %p324 = pneg %p167
      $region26: #{get_model_forward.9} parent=11 // pred_check_branch
        %326 = sbr.rel (%p324) target = $region28
      $region27: #{get_model_forward.9} parent=11 // pred_region
        _
      $region28: #{get_model_forward.9} parent=11 // pred_fallthru
        _
      // Predicated region
      $region29: #{get_model_forward.9} parent=11 // pred_check
        %p327 = pneg %p188
      $region30: #{get_model_forward.9} parent=11 // pred_check_branch
        %329 = sbr.rel (%p327) target = $region32
      $region31: #{get_model_forward.9} parent=11 // pred_region
        _
      $region32: #{get_model_forward.9} parent=11 // pred_fallthru
        _
      // Predicated region
      $region33: #{get_model_forward.9} parent=11 // pred_check
        %p330 = pneg %p209
      $region34: #{get_model_forward.9} parent=11 // pred_check_branch
        %332 = sbr.rel (%p330) target = $region36
      $region35: #{get_model_forward.9} parent=11 // pred_region
        _
      $region36: #{get_model_forward.9} parent=11 // pred_fallthru
        _
      // Predicated region
      $region37: #{get_model_forward.9} parent=11 // pred_check
        %p333 = pneg %p230
      $region38: #{get_model_forward.9} parent=11 // pred_check_branch
        %335 = sbr.rel (%p333) target = $region40
      $region39: #{get_model_forward.9} parent=11 // pred_region
        _
      $region40: #{get_model_forward.9} parent=11 // pred_fallthru
        _
      // Predicated region
      $region41: #{get_model_forward.9} parent=11 // pred_check
        %p336 = pneg %p251
      $region42: #{get_model_forward.9} parent=11 // pred_check_branch
        %338 = sbr.rel (%p336) target = $region44
      $region43: #{get_model_forward.9} parent=11 // pred_region
        _
      $region44: #{get_model_forward.9} parent=11 // pred_fallthru
        _
      // Predicated region
      $region45: #{get_model_forward.9} parent=11 // pred_check
        %p339 = pneg %p272
      $region46: #{get_model_forward.9} parent=11 // pred_check_branch
        %341 = sbr.rel (%p339) target = $region48
      $region47: #{get_model_forward.9} parent=11 // pred_region
        _
      $region48: #{get_model_forward.9} parent=11 // pred_fallthru
        _
    $region12: #{get_model_forward.9} parent=5 // pred_fallthru
      _
    %p342 = scmp.lt.s32.totalorder %s17, 2
    // Predicated region
    $region49: #{get_model_forward.9} parent=5 // pred_check
      %p343 = pneg %p342
    $region50: #{get_model_forward.9} parent=5 // pred_check_branch
      %345 = sbr.rel (%p343) target = $region52
    $region51: #{get_model_forward.9} parent=5 // pred_region
      // Predicated region
      $region53: #{get_model_forward.9} parent=51 // pred_check
        %p346 = pneg %p49
      $region54: #{get_model_forward.9} parent=51 // pred_check_branch
        %348 = sbr.rel (%p346) target = $region56
      $region55: #{get_model_forward.9} parent=51 // pred_region
        %p349 = scmp.lt.s32.totalorder %s24, 1
        %s350 = scalar_select %p349, %s24, 1
        %s351 = smul.addr %s350, 2
        %s352 = scalar_lea.vmem %s0, %s351
      $region56: #{get_model_forward.9} parent=51 // pred_fallthru
        _
      // Predicated region
      $region57: #{get_model_forward.9} parent=51 // pred_check
        %p353 = pneg %p77
      $region58: #{get_model_forward.9} parent=51 // pred_check_branch
        %355 = sbr.rel (%p353) target = $region60
      $region59: #{get_model_forward.9} parent=51 // pred_region
        %s356 = smul.u32 16, %s25
        %p357 = scmp.lt.s32.totalorder %s24, 1
        %s358 = scalar_select %p357, %s24, 1
        %p359 = scmp.lt.s32.totalorder %s356, 15
        %s360 = scalar_select %p359, %s356, 15
        %s361 = smul.addr %s358, 16
        %s362 = sadd.s32 %s360, %s361
        %s363 = smul.addr %s362, 4
        %s364 = scalar_lea.vmem %s1, %s363
        %s365 = smul.u32 16, %s25
      $region60: #{get_model_forward.9} parent=51 // pred_fallthru
        _
    $region52: #{get_model_forward.9} parent=5 // pred_fallthru
      _
    %p366 = scmp.le.s32.totalorder 1, %s17
    %p367 = scmp.lt.s32.totalorder %s17, 3
    %p368 = pnand %p366, %p367
    %p369 = pneg %p368
    // Predicated region
    $region61: #{get_model_forward.9} parent=5 // pred_check
      _
    $region62: #{get_model_forward.9} parent=5 // pred_check_branch
      %371 = sbr.rel (%p368) target = $region64
    $region63: #{get_model_forward.9} parent=5 // pred_region
      %s372 = ssub.s32 %s17, 1
      %p373 = scmp.lt.s32.totalorder %s26, 1
      %s374 = scalar_select %p373, %s26, 1
      %s375 = smul.addr %s374, 2
      %s376 = scalar_lea.vmem %s0, %s375
      %p377 = pneg %p55
      %p378 = pneg %p52
      %s379 = smul.u32 16, %s27
      %p380 = scmp.lt.s32.totalorder %s26, 1
      %s381 = scalar_select %p380, %s26, 1
      %p382 = scmp.lt.s32.totalorder %s379, 15
      %s383 = scalar_select %p382, %s379, 15
      %s384 = smul.addr %s381, 16
      %s385 = sadd.s32 %s383, %s384
      %s386 = smul.addr %s385, 4
      %s387 = scalar_lea.vmem %s1, %s386
      %p388 = pneg %p83
      %p389 = pneg %p80
      %p390 = pneg %p104
      %p391 = pneg %p101
      %p392 = pneg %p125
      %p393 = pneg %p122
      %p394 = pneg %p146
      %p395 = pneg %p143
      %p396 = pneg %p167
      %p397 = pneg %p164
      %p398 = pneg %p188
      %p399 = pneg %p185
      %p400 = pneg %p209
      %p401 = pneg %p206
      %p402 = pneg %p230
      %p403 = pneg %p227
      %p404 = pneg %p251
      %p405 = pneg %p248
      %p406 = pneg %p272
      %p407 = pneg %p269
      %p408 = pneg %p300
      %p409 = pneg %p297
      %s410 = smul.u32 16, %s27
      %p411 = scmp.lt.s32.totalorder %s26, 1
      %s412 = scalar_select %p411, %s26, 1
      %p413 = scmp.lt.s32.totalorder %s410, 15
      %s414 = scalar_select %p413, %s410, 15
      %s415 = smul.addr %s412, 16
      %s416 = sadd.s32 %s414, %s415
      %s417 = smul.addr %s416, 8
      %s418 = scalar_lea.vmem %s11, %s417
      %p419 = scmp.lt.s32.totalorder %s26, 1
      %s420 = scalar_select %p419, %s26, 1
      %s421 = smul.addr %s420, 2
      %s422 = scalar_lea.vmem %s0, %s421
      %s423 = smul.u32 16, %s27
      %p424 = scmp.lt.s32.totalorder %s26, 1
      %s425 = scalar_select %p424, %s26, 1
      %p426 = scmp.lt.s32.totalorder %s423, 15
      %s427 = scalar_select %p426, %s423, 15
      %s428 = smul.addr %s425, 16
      %s429 = sadd.s32 %s427, %s428
      %s430 = smul.addr %s429, 4
      %s431 = scalar_lea.vmem %s1, %s430
      %s432 = smul.u32 16, %s27
      %s433 = smul.u32 16, %s27
      %p434 = scmp.lt.s32.totalorder %s26, 1
      %s435 = scalar_select %p434, %s26, 1
      %p436 = scmp.lt.s32.totalorder %s433, 15
      %s437 = scalar_select %p436, %s433, 15
      %s438 = smul.addr %s435, 16
      %s439 = sadd.s32 %s437, %s438
      %s440 = smul.addr %s439, 8
      %s441 = scalar_lea.vmem %s11, %s440
      %s442 = smul.u32 16, %s27
      %v444 = vld [vmem:[%s422] sm:$0x3]
      %v446 = vperm.slane %v444, 0
      %v447 = vperm.slane %v444, 1
      %v450 = vpack.c.bf16 %v446, %v446
      %v451 = vpack.c.bf16 %v447, %v447
      %v452 = vld [vmem:[%s2] sm:$0xf]
      %v453 = vld [vmem:[%s2 + $0x4] sm:$0xf]
      %v454 = vld [vmem:[%s2 + $0x8] sm:$0xf]
      %v455 = vld [vmem:[%s2 + $0xc] sm:$0xf]
      %v456 = vld [vmem:[%s2 + $0x10] sm:$0xf]
      %v457 = vld [vmem:[%s2 + $0x14] sm:$0xf]
      %v458 = vld [vmem:[%s2 + $0x18] sm:$0xf]
      %v459 = vld [vmem:[%s2 + $0x1c] sm:$0xf]
      %v460 = vld [vmem:[%s2 + $0x20] sm:$0xf]
      %v461 = vld [vmem:[%s2 + $0x24] sm:$0xf]
      %v462 = vld [vmem:[%s2 + $0x28] sm:$0xf]
      %v463 = vld [vmem:[%s2 + $0x2c] sm:$0xf]
      %v464 = vld [vmem:[%s2 + $0x30] sm:$0xf]
      %v465 = vld [vmem:[%s2 + $0x34] sm:$0xf]
      %v466 = vld [vmem:[%s2 + $0x38] sm:$0xf]
      %v467 = vld [vmem:[%s2 + $0x3c] sm:$0xf]
      %v468 = vld [vmem:[%s2 + $0x40] sm:$0xf]
      %v469 = vld [vmem:[%s2 + $0x44] sm:$0xf]
      %v470 = vld [vmem:[%s2 + $0x48] sm:$0xf]
      %v471 = vld [vmem:[%s2 + $0x4c] sm:$0xf]
      %v472 = vld [vmem:[%s2 + $0x50] sm:$0xf]
      %v473 = vld [vmem:[%s2 + $0x54] sm:$0xf]
      %v474 = vld [vmem:[%s2 + $0x58] sm:$0xf]
      %v475 = vld [vmem:[%s2 + $0x5c] sm:$0xf]
      %v476 = vld [vmem:[%s2 + $0x60] sm:$0xf]
      %v477 = vld [vmem:[%s2 + $0x64] sm:$0xf]
      %v478 = vld [vmem:[%s2 + $0x68] sm:$0xf]
      %v479 = vld [vmem:[%s2 + $0x6c] sm:$0xf]
      %v480 = vld [vmem:[%s2 + $0x70] sm:$0xf]
      %v481 = vld [vmem:[%s2 + $0x74] sm:$0xf]
      %v482 = vld [vmem:[%s2 + $0x78] sm:$0xf]
      %v483 = vld [vmem:[%s2 + $0x7c] sm:$0xf]
      %v516 = vunpack.c.l.b16 %v452
      %v517 = vunpack.c.l.b16 %v453
      %v518 = vunpack.c.l.b16 %v454
      %v519 = vunpack.c.l.b16 %v455
      %v520 = vunpack.c.l.b16 %v456
      %v521 = vunpack.c.l.b16 %v457
      %v522 = vunpack.c.l.b16 %v458
      %v523 = vunpack.c.l.b16 %v459
      %v524 = vunpack.c.l.b16 %v460
      %v525 = vunpack.c.l.b16 %v461
      %v526 = vunpack.c.l.b16 %v462
      %v527 = vunpack.c.l.b16 %v463
      %v528 = vunpack.c.l.b16 %v464
      %v529 = vunpack.c.l.b16 %v465
      %v530 = vunpack.c.l.b16 %v466
      %v531 = vunpack.c.l.b16 %v467
      %v532 = vunpack.c.l.b16 %v468
      %v533 = vunpack.c.l.b16 %v469
      %v534 = vunpack.c.l.b16 %v470
      %v535 = vunpack.c.l.b16 %v471
      %v536 = vunpack.c.l.b16 %v472
      %v537 = vunpack.c.l.b16 %v473
      %v538 = vunpack.c.l.b16 %v474
      %v539 = vunpack.c.l.b16 %v475
      %v540 = vunpack.c.l.b16 %v476
      %v541 = vunpack.c.l.b16 %v477
      %v542 = vunpack.c.l.b16 %v478
      %v543 = vunpack.c.l.b16 %v479
      %v544 = vunpack.c.l.b16 %v480
      %v545 = vunpack.c.l.b16 %v481
      %v546 = vunpack.c.l.b16 %v482
      %v547 = vunpack.c.l.b16 %v483
      %v548 = vpack.c.b16 %v517, %v516
      %v549 = vpack.c.b16 %v519, %v518
      %v550 = vpack.c.b16 %v521, %v520
      %v551 = vpack.c.b16 %v523, %v522
      %v552 = vpack.c.b16 %v525, %v524
      %v553 = vpack.c.b16 %v527, %v526
      %v554 = vpack.c.b16 %v529, %v528
      %v555 = vpack.c.b16 %v531, %v530
      %v556 = vpack.c.b16 %v533, %v532
      %v557 = vpack.c.b16 %v535, %v534
      %v558 = vpack.c.b16 %v537, %v536
      %v559 = vpack.c.b16 %v539, %v538
      %v560 = vpack.c.b16 %v541, %v540
      %v561 = vpack.c.b16 %v543, %v542
      %v562 = vpack.c.b16 %v545, %v544
      %v563 = vpack.c.b16 %v547, %v546
      %580 = vmatpush.bf16.msra.mxu0 %v555
      %581 = vmatpush.bf16.msra.mxu0 %v554
      %582 = vmatpush.bf16.msra.mxu0 %v553
      %583 = vmatpush.bf16.msra.mxu0 %v552
      %584 = vmatpush.bf16.msra.mxu0 %v551
      %585 = vmatpush.bf16.msra.mxu0 %v550
      %586 = vmatpush.bf16.msra.mxu0 %v549
      %587 = vmatpush.bf16.msra.mxu0 %v548
      %588 = vmatmul.bf16.gmra.mxu0 %v450
      %v589 = vpop.f32.mrf.mxu0
      %v590 = vadd.f32 0.0, %v589
      %v591 = vpop.f32.mrf.mxu0
      %592 = vdwg.mxu0
      %593 = vmatpush.bf16.msra.mxu0 %v563
      %594 = vmatpush.bf16.msra.mxu0 %v562
      %595 = vmatpush.bf16.msra.mxu0 %v561
      %596 = vmatpush.bf16.msra.mxu0 %v560
      %597 = vmatpush.bf16.msra.mxu0 %v559
      %598 = vmatpush.bf16.msra.mxu0 %v558
      %599 = vmatpush.bf16.msra.mxu0 %v557
      %600 = vmatpush.bf16.msra.mxu0 %v556
      %601 = vmatmul.bf16.gmra.mxu0 %v451
      %v602 = vpop.f32.mrf.mxu0
      %v603 = vadd.f32 %v590, %v602
      %v604 = vpop.f32.mrf.mxu0
      %605 = vdwg.mxu0
      %v606 = vld [vmem:[%s431] sm:$0xf]
      %v607 = vld [vmem:[%s431 + $0x4] sm:$0xf]
      %v608 = vld [vmem:[%s431 + $0x8] sm:$0xf]
      %v609 = vld [vmem:[%s431 + $0xc] sm:$0xf]
      %v610 = vld [vmem:[%s431 + $0x10] sm:$0xf]
      %v611 = vld [vmem:[%s431 + $0x14] sm:$0xf]
      %v612 = vld [vmem:[%s431 + $0x18] sm:$0xf]
      %v613 = vld [vmem:[%s431 + $0x1c] sm:$0xf]
      %v614 = vld [vmem:[%s431 + $0x20] sm:$0xf]
      %v615 = vld [vmem:[%s431 + $0x24] sm:$0xf]
      %v616 = vld [vmem:[%s431 + $0x28] sm:$0xf]
      %v617 = vld [vmem:[%s431 + $0x2c] sm:$0xf]
      %v618 = vld [vmem:[%s431 + $0x30] sm:$0xf]
      %v619 = vld [vmem:[%s431 + $0x34] sm:$0xf]
      %v620 = vld [vmem:[%s431 + $0x38] sm:$0xf]
      %v621 = vld [vmem:[%s431 + $0x3c] sm:$0xf]
      %v622 = vld [vmem:[%s3] sm:$0xf]
      %v623 = vld [vmem:[%s3 + $0x4] sm:$0xf]
      %v624 = vperm.slane %v603, 0
      %v641 = vunpack.c.l.b16 %v606
      %v642 = vunpack.c.l.b16 %v607
      %v643 = vunpack.c.l.b16 %v608
      %v644 = vunpack.c.l.b16 %v609
      %v645 = vunpack.c.l.b16 %v610
      %v646 = vunpack.c.l.b16 %v611
      %v647 = vunpack.c.l.b16 %v612
      %v648 = vunpack.c.l.b16 %v613
      %v649 = vunpack.c.l.b16 %v614
      %v650 = vunpack.c.l.b16 %v615
      %v651 = vunpack.c.l.b16 %v616
      %v652 = vunpack.c.l.b16 %v617
      %v653 = vunpack.c.l.b16 %v618
      %v654 = vunpack.c.l.b16 %v619
      %v655 = vunpack.c.l.b16 %v620
      %v656 = vunpack.c.l.b16 %v621
      %v657 = vpack.c.b16 %v642, %v641
      %v658 = vpack.c.b16 %v644, %v643
      %v659 = vpack.c.b16 %v646, %v645
      %v660 = vpack.c.b16 %v648, %v647
      %v661 = vpack.c.b16 %v650, %v649
      %v662 = vpack.c.b16 %v652, %v651
      %v663 = vpack.c.b16 %v654, %v653
      %v664 = vpack.c.b16 %v656, %v655
      %v667 = vunpack.c.l.b16 %v622
      %v668 = vunpack.c.l.b16 %v623
      %v669 = vpack.c.b16 %v668, %v667
      %vm671 = vcmask 130048
      %v673 = vsel %vm671, %v657, 0
      %v676 = vsel %vm671, %v658, 0
      %v679 = vsel %vm671, %v659, 0
      %v682 = vsel %vm671, %v660, 0
      %v685 = vsel %vm671, %v661, 0
      %v688 = vsel %vm671, %v662, 0
      %v691 = vsel %vm671, %v663, 0
      %v694 = vsel %vm671, %v664, 0
      %696 = vmatpush.bf16.msra.mxu0 0
      %697 = vmatpush.bf16.msra.mxu0 0
      %698 = vmatpush.bf16.msra.mxu0 0
      %699 = vmatpush.bf16.msra.mxu0 0
      %700 = vmatpush.bf16.msra.mxu0 0
      %701 = vmatpush.bf16.msra.mxu0 0
      %702 = vmatpush.bf16.msra.mxu0 0
      %703 = vmatpush.bf16.msra.mxu0 %v669
      %704 = vmatmul.bf16.gmra.mxu0 %v673
      %v705 = vpop.f32.mrf.mxu0
      %v706 = vadd.f32 %v624, %v705
      %v707 = vpop.f32.mrf.mxu0
      %v708 = vadd.f32 %v624, %v707
      %709 = vmatmul.bf16.gmra.mxu0 %v676
      %v710 = vpop.f32.mrf.mxu0
      %v711 = vadd.f32 %v624, %v710
      %v712 = vpop.f32.mrf.mxu0
      %v713 = vadd.f32 %v624, %v712
      %714 = vmatmul.bf16.gmra.mxu0 %v679
      %v715 = vpop.f32.mrf.mxu0
      %v716 = vadd.f32 %v624, %v715
      %v717 = vpop.f32.mrf.mxu0
      %v718 = vadd.f32 %v624, %v717
      %719 = vmatmul.bf16.gmra.mxu0 %v682
      %v720 = vpop.f32.mrf.mxu0
      %v721 = vadd.f32 %v624, %v720
      %v722 = vpop.f32.mrf.mxu0
      %v723 = vadd.f32 %v624, %v722
      %724 = vmatmul.bf16.gmra.mxu0 %v685
      %v725 = vpop.f32.mrf.mxu0
      %v726 = vadd.f32 %v624, %v725
      %v727 = vpop.f32.mrf.mxu0
      %v728 = vadd.f32 %v624, %v727
      %729 = vmatmul.bf16.gmra.mxu0 %v688
      %v730 = vpop.f32.mrf.mxu0
      %v731 = vadd.f32 %v624, %v730
      %v732 = vpop.f32.mrf.mxu0
      %v733 = vadd.f32 %v624, %v732
      %734 = vmatmul.bf16.gmra.mxu0 %v691
      %v735 = vpop.f32.mrf.mxu0
      %v736 = vadd.f32 %v624, %v735
      %v737 = vpop.f32.mrf.mxu0
      %v738 = vadd.f32 %v624, %v737
      %739 = vmatmul.bf16.gmra.mxu0 %v694
      %v740 = vpop.f32.mrf.mxu0
      %v741 = vadd.f32 %v624, %v740
      %v742 = vpop.f32.mrf.mxu0
      %v743 = vadd.f32 %v624, %v742
      %744 = vdwg.mxu0
      %v745 = vld [vmem:[%s4] sm:$0x1]
      %v747 = vperm.slane %v745, 0
      %v749 = vadd.f32 %v706, %v747
      %v750 = vadd.f32 %v708, %v747
      %v751 = vadd.f32 %v711, %v747
      %v752 = vadd.f32 %v713, %v747
      %v753 = vadd.f32 %v716, %v747
      %v754 = vadd.f32 %v718, %v747
      %v755 = vadd.f32 %v721, %v747
      %v756 = vadd.f32 %v723, %v747
      %v757 = vadd.f32 %v726, %v747
      %v758 = vadd.f32 %v728, %v747
      %v759 = vadd.f32 %v731, %v747
      %v760 = vadd.f32 %v733, %v747
      %v761 = vadd.f32 %v736, %v747
      %v762 = vadd.f32 %v738, %v747
      %v763 = vadd.f32 %v741, %v747
      %v764 = vadd.f32 %v743, %v747
      %v765 = vmax.f32 %v749, 0.0
      %v766 = vmax.f32 %v750, 0.0
      %v767 = vmax.f32 %v751, 0.0
      %v768 = vmax.f32 %v752, 0.0
      %v769 = vmax.f32 %v753, 0.0
      %v770 = vmax.f32 %v754, 0.0
      %v771 = vmax.f32 %v755, 0.0
      %v772 = vmax.f32 %v756, 0.0
      %v773 = vmax.f32 %v757, 0.0
      %v774 = vmax.f32 %v758, 0.0
      %v775 = vmax.f32 %v759, 0.0
      %v776 = vmax.f32 %v760, 0.0
      %v777 = vmax.f32 %v761, 0.0
      %v778 = vmax.f32 %v762, 0.0
      %v779 = vmax.f32 %v763, 0.0
      %v780 = vmax.f32 %v764, 0.0
      %v781 = vld [vmem:[%s5] sm:$0xf]
      %v782 = vld [vmem:[%s5 + $0x4] sm:$0xf]
      %v783 = vld [vmem:[%s5 + $0x8] sm:$0xf]
      %v784 = vld [vmem:[%s5 + $0xc] sm:$0xf]
      %v785 = vld [vmem:[%s5 + $0x10] sm:$0xf]
      %v786 = vld [vmem:[%s5 + $0x14] sm:$0xf]
      %v787 = vld [vmem:[%s5 + $0x18] sm:$0xf]
      %v788 = vld [vmem:[%s5 + $0x1c] sm:$0xf]
      %v789 = vld [vmem:[%s5 + $0x20] sm:$0xf]
      %v790 = vld [vmem:[%s5 + $0x24] sm:$0xf]
      %v791 = vld [vmem:[%s5 + $0x28] sm:$0xf]
      %v792 = vld [vmem:[%s5 + $0x2c] sm:$0xf]
      %v793 = vld [vmem:[%s5 + $0x30] sm:$0xf]
      %v794 = vld [vmem:[%s5 + $0x34] sm:$0xf]
      %v795 = vld [vmem:[%s5 + $0x38] sm:$0xf]
      %v796 = vld [vmem:[%s5 + $0x3c] sm:$0xf]
      %v797 = vpack.c.bf16 %v766, %v765
      %v798 = vpack.c.bf16 %v768, %v767
      %v799 = vpack.c.bf16 %v770, %v769
      %v800 = vpack.c.bf16 %v772, %v771
      %v801 = vpack.c.bf16 %v774, %v773
      %v802 = vpack.c.bf16 %v776, %v775
      %v803 = vpack.c.bf16 %v778, %v777
      %v804 = vpack.c.bf16 %v780, %v779
      %v805 = vld [vmem:[%s6] sm:$0x1]
      %v807 = vperm.slane %v805, 0
      %v825 = vunpack.c.l.b16 %v781
      %v826 = vunpack.c.l.b16 %v782
      %v827 = vunpack.c.l.b16 %v783
      %v828 = vunpack.c.l.b16 %v784
      %v829 = vunpack.c.l.b16 %v785
      %v830 = vunpack.c.l.b16 %v786
      %v831 = vunpack.c.l.b16 %v787
      %v832 = vunpack.c.l.b16 %v788
      %v833 = vunpack.c.l.b16 %v789
      %v834 = vunpack.c.l.b16 %v790
      %v835 = vunpack.c.l.b16 %v791
      %v836 = vunpack.c.l.b16 %v792
      %v837 = vunpack.c.l.b16 %v793
      %v838 = vunpack.c.l.b16 %v794
      %v839 = vunpack.c.l.b16 %v795
      %v840 = vunpack.c.l.b16 %v796
      %v841 = vpack.c.b16 %v826, %v825
      %v842 = vpack.c.b16 %v828, %v827
      %v843 = vpack.c.b16 %v830, %v829
      %v844 = vpack.c.b16 %v832, %v831
      %v845 = vpack.c.b16 %v834, %v833
      %v846 = vpack.c.b16 %v836, %v835
      %v847 = vpack.c.b16 %v838, %v837
      %v848 = vpack.c.b16 %v840, %v839
      %857 = vmatpush.bf16.msra.mxu0 %v848
      %858 = vmatpush.bf16.msra.mxu0 %v847
      %859 = vmatpush.bf16.msra.mxu0 %v846
      %860 = vmatpush.bf16.msra.mxu0 %v845
      %861 = vmatpush.bf16.msra.mxu0 %v844
      %862 = vmatpush.bf16.msra.mxu0 %v843
      %863 = vmatpush.bf16.msra.mxu0 %v842
      %864 = vmatpush.bf16.msra.mxu0 %v841
      %865 = vmatmul.bf16.gmra.mxu0 %v797
      %v866 = vpop.f32.mrf.mxu0
      %v867 = vadd.f32 %v807, %v866
      %v868 = vpop.f32.mrf.mxu0
      %v869 = vadd.f32 %v807, %v868
      %870 = vmatmul.bf16.gmra.mxu0 %v798
      %v871 = vpop.f32.mrf.mxu0
      %v872 = vadd.f32 %v807, %v871
      %v873 = vpop.f32.mrf.mxu0
      %v874 = vadd.f32 %v807, %v873
      %875 = vmatmul.bf16.gmra.mxu0 %v799
      %v876 = vpop.f32.mrf.mxu0
      %v877 = vadd.f32 %v807, %v876
      %v878 = vpop.f32.mrf.mxu0
      %v879 = vadd.f32 %v807, %v878
      %880 = vmatmul.bf16.gmra.mxu0 %v800
      %v881 = vpop.f32.mrf.mxu0
      %v882 = vadd.f32 %v807, %v881
      %v883 = vpop.f32.mrf.mxu0
      %v884 = vadd.f32 %v807, %v883
      %885 = vmatmul.bf16.gmra.mxu0 %v801
      %v886 = vpop.f32.mrf.mxu0
      %v887 = vadd.f32 %v807, %v886
      %v888 = vpop.f32.mrf.mxu0
      %v889 = vadd.f32 %v807, %v888
      %890 = vmatmul.bf16.gmra.mxu0 %v802
      %v891 = vpop.f32.mrf.mxu0
      %v892 = vadd.f32 %v807, %v891
      %v893 = vpop.f32.mrf.mxu0
      %v894 = vadd.f32 %v807, %v893
      %895 = vmatmul.bf16.gmra.mxu0 %v803
      %v896 = vpop.f32.mrf.mxu0
      %v897 = vadd.f32 %v807, %v896
      %v898 = vpop.f32.mrf.mxu0
      %v899 = vadd.f32 %v807, %v898
      %900 = vmatmul.bf16.gmra.mxu0 %v804
      %v901 = vpop.f32.mrf.mxu0
      %v902 = vadd.f32 %v807, %v901
      %v903 = vpop.f32.mrf.mxu0
      %v904 = vadd.f32 %v807, %v903
      %905 = vdwg.mxu0
      %v906 = vmax.f32 %v867, 0.0
      %v907 = vmax.f32 %v869, 0.0
      %v908 = vmax.f32 %v872, 0.0
      %v909 = vmax.f32 %v874, 0.0
      %v910 = vmax.f32 %v877, 0.0
      %v911 = vmax.f32 %v879, 0.0
      %v912 = vmax.f32 %v882, 0.0
      %v913 = vmax.f32 %v884, 0.0
      %v914 = vmax.f32 %v887, 0.0
      %v915 = vmax.f32 %v889, 0.0
      %v916 = vmax.f32 %v892, 0.0
      %v917 = vmax.f32 %v894, 0.0
      %v918 = vmax.f32 %v897, 0.0
      %v919 = vmax.f32 %v899, 0.0
      %v920 = vmax.f32 %v902, 0.0
      %v921 = vmax.f32 %v904, 0.0
      %v922 = vld [vmem:[%s7] sm:$0xf]
      %v923 = vld [vmem:[%s7 + $0x4] sm:$0xf]
      %v924 = vld [vmem:[%s7 + $0x8] sm:$0xf]
      %v925 = vld [vmem:[%s7 + $0xc] sm:$0xf]
      %v926 = vld [vmem:[%s7 + $0x10] sm:$0xf]
      %v927 = vld [vmem:[%s7 + $0x14] sm:$0xf]
      %v928 = vld [vmem:[%s7 + $0x18] sm:$0xf]
      %v929 = vld [vmem:[%s7 + $0x1c] sm:$0xf]
      %v930 = vpack.c.bf16 %v907, %v906
      %v931 = vpack.c.bf16 %v909, %v908
      %v932 = vpack.c.bf16 %v911, %v910
      %v933 = vpack.c.bf16 %v913, %v912
      %v934 = vpack.c.bf16 %v915, %v914
      %v935 = vpack.c.bf16 %v917, %v916
      %v936 = vpack.c.bf16 %v919, %v918
      %v937 = vpack.c.bf16 %v921, %v920
      %v938 = vld [vmem:[%s8] sm:$0x1]
      %v940 = vperm.slane %v938, 0
      %v950 = vunpack.c.l.b16 %v922
      %v951 = vunpack.c.l.b16 %v923
      %v952 = vunpack.c.l.b16 %v924
      %v953 = vunpack.c.l.b16 %v925
      %v954 = vunpack.c.l.b16 %v926
      %v955 = vunpack.c.l.b16 %v927
      %v956 = vunpack.c.l.b16 %v928
      %v957 = vunpack.c.l.b16 %v929
      %v958 = vpack.c.b16 %v951, %v950
      %v959 = vpack.c.b16 %v953, %v952
      %v960 = vpack.c.b16 %v955, %v954
      %v961 = vpack.c.b16 %v957, %v956
      %vm966 = vcmask 523264
      %v968 = vsel %vm966, %v930, 0
      %v971 = vsel %vm966, %v931, 0
      %v974 = vsel %vm966, %v932, 0
      %v977 = vsel %vm966, %v933, 0
      %v980 = vsel %vm966, %v934, 0
      %v983 = vsel %vm966, %v935, 0
      %v986 = vsel %vm966, %v936, 0
      %v989 = vsel %vm966, %v937, 0
      %991 = vmatpush.bf16.msra.mxu0 0
      %992 = vmatpush.bf16.msra.mxu0 0
      %993 = vmatpush.bf16.msra.mxu0 0
      %994 = vmatpush.bf16.msra.mxu0 0
      %995 = vmatpush.bf16.msra.mxu0 %v961
      %996 = vmatpush.bf16.msra.mxu0 %v960
      %997 = vmatpush.bf16.msra.mxu0 %v959
      %998 = vmatpush.bf16.msra.mxu0 %v958
      %999 = vmatmul.bf16.gmra.mxu0 %v968
      %v1000 = vpop.f32.mrf.mxu0
      %v1001 = vadd.f32 %v940, %v1000
      %v1002 = vpop.f32.mrf.mxu0
      %v1003 = vadd.f32 %v940, %v1002
      %1004 = vmatmul.bf16.gmra.mxu0 %v971
      %v1005 = vpop.f32.mrf.mxu0
      %v1006 = vadd.f32 %v940, %v1005
      %v1007 = vpop.f32.mrf.mxu0
      %v1008 = vadd.f32 %v940, %v1007
      %1009 = vmatmul.bf16.gmra.mxu0 %v974
      %v1010 = vpop.f32.mrf.mxu0
      %v1011 = vadd.f32 %v940, %v1010
      %v1012 = vpop.f32.mrf.mxu0
      %v1013 = vadd.f32 %v940, %v1012
      %1014 = vmatmul.bf16.gmra.mxu0 %v977
      %v1015 = vpop.f32.mrf.mxu0
      %v1016 = vadd.f32 %v940, %v1015
      %v1017 = vpop.f32.mrf.mxu0
      %v1018 = vadd.f32 %v940, %v1017
      %1019 = vmatmul.bf16.gmra.mxu0 %v980
      %v1020 = vpop.f32.mrf.mxu0
      %v1021 = vadd.f32 %v940, %v1020
      %v1022 = vpop.f32.mrf.mxu0
      %v1023 = vadd.f32 %v940, %v1022
      %1024 = vmatmul.bf16.gmra.mxu0 %v983
      %v1025 = vpop.f32.mrf.mxu0
      %v1026 = vadd.f32 %v940, %v1025
      %v1027 = vpop.f32.mrf.mxu0
      %v1028 = vadd.f32 %v940, %v1027
      %1029 = vmatmul.bf16.gmra.mxu0 %v986
      %v1030 = vpop.f32.mrf.mxu0
      %v1031 = vadd.f32 %v940, %v1030
      %v1032 = vpop.f32.mrf.mxu0
      %v1033 = vadd.f32 %v940, %v1032
      %1034 = vmatmul.bf16.gmra.mxu0 %v989
      %v1035 = vpop.f32.mrf.mxu0
      %v1036 = vadd.f32 %v940, %v1035
      %v1037 = vpop.f32.mrf.mxu0
      %v1038 = vadd.f32 %v940, %v1037
      %1039 = vdwg.mxu0
      %v1040 = vmax.f32 %v1001, 0.0
      %v1041 = vmax.f32 %v1003, 0.0
      %v1042 = vmax.f32 %v1006, 0.0
      %v1043 = vmax.f32 %v1008, 0.0
      %v1044 = vmax.f32 %v1011, 0.0
      %v1045 = vmax.f32 %v1013, 0.0
      %v1046 = vmax.f32 %v1016, 0.0
      %v1047 = vmax.f32 %v1018, 0.0
      %v1048 = vmax.f32 %v1021, 0.0
      %v1049 = vmax.f32 %v1023, 0.0
      %v1050 = vmax.f32 %v1026, 0.0
      %v1051 = vmax.f32 %v1028, 0.0
      %v1052 = vmax.f32 %v1031, 0.0
      %v1053 = vmax.f32 %v1033, 0.0
      %v1054 = vmax.f32 %v1036, 0.0
      %v1055 = vmax.f32 %v1038, 0.0
      %v1056 = vld [vmem:[%s9] sm:$0xf]
      %v1057 = vld [vmem:[%s9 + $0x4] sm:$0xf]
      %v1058 = vld [vmem:[%s9 + $0x8] sm:$0xf]
      %v1059 = vld [vmem:[%s9 + $0xc] sm:$0xf]
      %v1060 = vpack.c.bf16 %v1041, %v1040
      %v1061 = vpack.c.bf16 %v1043, %v1042
      %v1062 = vpack.c.bf16 %v1045, %v1044
      %v1063 = vpack.c.bf16 %v1047, %v1046
      %v1064 = vpack.c.bf16 %v1049, %v1048
      %v1065 = vpack.c.bf16 %v1051, %v1050
      %v1066 = vpack.c.bf16 %v1053, %v1052
      %v1067 = vpack.c.bf16 %v1055, %v1054
      %v1068 = vld [vmem:[%s10] sm:$0x1]
      %v1070 = vperm.slane %v1068, 0
      %v1076 = vunpack.c.l.b16 %v1056
      %v1077 = vunpack.c.l.b16 %v1057
      %v1078 = vunpack.c.l.b16 %v1058
      %v1079 = vunpack.c.l.b16 %v1059
      %v1080 = vpack.c.b16 %v1077, %v1076
      %v1081 = vpack.c.b16 %v1079, %v1078
      %vm1084 = vcmask 261120
      %v1086 = vsel %vm1084, %v1060, 0
      %v1089 = vsel %vm1084, %v1061, 0
      %v1092 = vsel %vm1084, %v1062, 0
      %v1095 = vsel %vm1084, %v1063, 0
      %v1098 = vsel %vm1084, %v1064, 0
      %v1101 = vsel %vm1084, %v1065, 0
      %v1104 = vsel %vm1084, %v1066, 0
      %v1107 = vsel %vm1084, %v1067, 0
      %1109 = vmatpush.bf16.msra.mxu0 0
      %1110 = vmatpush.bf16.msra.mxu0 0
      %1111 = vmatpush.bf16.msra.mxu0 0
      %1112 = vmatpush.bf16.msra.mxu0 0
      %1113 = vmatpush.bf16.msra.mxu0 0
      %1114 = vmatpush.bf16.msra.mxu0 0
      %1115 = vmatpush.bf16.msra.mxu0 %v1081
      %1116 = vmatpush.bf16.msra.mxu0 %v1080
      %1117 = vmatmul.bf16.gmra.mxu0 %v1086
      %v1118 = vpop.f32.mrf.mxu0
      %v1119 = vadd.f32 %v1070, %v1118
      %v1120 = vpop.f32.mrf.mxu0
      %v1121 = vadd.f32 %v1070, %v1120
      %1122 = vmatmul.bf16.gmra.mxu0 %v1089
      %v1123 = vpop.f32.mrf.mxu0
      %v1124 = vadd.f32 %v1070, %v1123
      %v1125 = vpop.f32.mrf.mxu0
      %v1126 = vadd.f32 %v1070, %v1125
      %1127 = vmatmul.bf16.gmra.mxu0 %v1092
      %v1128 = vpop.f32.mrf.mxu0
      %v1129 = vadd.f32 %v1070, %v1128
      %v1130 = vpop.f32.mrf.mxu0
      %v1131 = vadd.f32 %v1070, %v1130
      %1132 = vmatmul.bf16.gmra.mxu0 %v1095
      %v1133 = vpop.f32.mrf.mxu0
      %v1134 = vadd.f32 %v1070, %v1133
      %v1135 = vpop.f32.mrf.mxu0
      %v1136 = vadd.f32 %v1070, %v1135
      %1137 = vmatmul.bf16.gmra.mxu0 %v1098
      %v1138 = vpop.f32.mrf.mxu0
      %v1139 = vadd.f32 %v1070, %v1138
      %v1140 = vpop.f32.mrf.mxu0
      %v1141 = vadd.f32 %v1070, %v1140
      %1142 = vmatmul.bf16.gmra.mxu0 %v1101
      %v1143 = vpop.f32.mrf.mxu0
      %v1144 = vadd.f32 %v1070, %v1143
      %v1145 = vpop.f32.mrf.mxu0
      %v1146 = vadd.f32 %v1070, %v1145
      %1147 = vmatmul.bf16.gmra.mxu0 %v1104
      %v1148 = vpop.f32.mrf.mxu0
      %v1149 = vadd.f32 %v1070, %v1148
      %v1150 = vpop.f32.mrf.mxu0
      %v1151 = vadd.f32 %v1070, %v1150
      %1152 = vmatmul.bf16.gmra.mxu0 %v1107
      %v1153 = vpop.f32.mrf.mxu0
      %v1154 = vadd.f32 %v1070, %v1153
      %v1155 = vpop.f32.mrf.mxu0
      %v1156 = vadd.f32 %v1070, %v1155
      %1157 = vdwg.mxu0
      %vm1158 = vcmask 105472
      %v1159 = vsel %vm1158, %v1119, -inf
      %1160 = vmax.xlane.f32.xlu0 %v1159
      %v1161 = vpop.xlane.xlu0 %1160
      %v1162 = vsel %vm1158, %v1121, -inf
      %1163 = vmax.xlane.f32.xlu0 %v1162
      %v1164 = vpop.xlane.xlu0 %1163
      %v1165 = vsel %vm1158, %v1124, -inf
      %1166 = vmax.xlane.f32.xlu0 %v1165
      %v1167 = vpop.xlane.xlu0 %1166
      %v1168 = vsel %vm1158, %v1126, -inf
      %1169 = vmax.xlane.f32.xlu0 %v1168
      %v1170 = vpop.xlane.xlu0 %1169
      %v1171 = vsel %vm1158, %v1129, -inf
      %1172 = vmax.xlane.f32.xlu0 %v1171
      %v1173 = vpop.xlane.xlu0 %1172
      %v1174 = vsel %vm1158, %v1131, -inf
      %1175 = vmax.xlane.f32.xlu0 %v1174
      %v1176 = vpop.xlane.xlu0 %1175
      %v1177 = vsel %vm1158, %v1134, -inf
      %1178 = vmax.xlane.f32.xlu0 %v1177
      %v1179 = vpop.xlane.xlu0 %1178
      %v1180 = vsel %vm1158, %v1136, -inf
      %1181 = vmax.xlane.f32.xlu0 %v1180
      %v1182 = vpop.xlane.xlu0 %1181
      %v1183 = vsel %vm1158, %v1139, -inf
      %1184 = vmax.xlane.f32.xlu0 %v1183
      %v1185 = vpop.xlane.xlu0 %1184
      %v1186 = vsel %vm1158, %v1141, -inf
      %1187 = vmax.xlane.f32.xlu0 %v1186
      %v1188 = vpop.xlane.xlu0 %1187
      %v1189 = vsel %vm1158, %v1144, -inf
      %1190 = vmax.xlane.f32.xlu0 %v1189
      %v1191 = vpop.xlane.xlu0 %1190
      %v1192 = vsel %vm1158, %v1146, -inf
      %1193 = vmax.xlane.f32.xlu0 %v1192
      %v1194 = vpop.xlane.xlu0 %1193
      %v1195 = vsel %vm1158, %v1149, -inf
      %1196 = vmax.xlane.f32.xlu0 %v1195
      %v1197 = vpop.xlane.xlu0 %1196
      %v1198 = vsel %vm1158, %v1151, -inf
      %1199 = vmax.xlane.f32.xlu0 %v1198
      %v1200 = vpop.xlane.xlu0 %1199
      %v1201 = vsel %vm1158, %v1154, -inf
      %1202 = vmax.xlane.f32.xlu0 %v1201
      %v1203 = vpop.xlane.xlu0 %1202
      %v1204 = vsel %vm1158, %v1156, -inf
      %1205 = vmax.xlane.f32.xlu0 %v1204
      %v1206 = vpop.xlane.xlu0 %1205
      %v1207 = vsub.f32 %v1119, %v1161
      %v1208 = vsub.f32 %v1121, %v1164
      %v1209 = vsub.f32 %v1124, %v1167
      %v1210 = vsub.f32 %v1126, %v1170
      %v1211 = vsub.f32 %v1129, %v1173
      %v1212 = vsub.f32 %v1131, %v1176
      %v1213 = vsub.f32 %v1134, %v1179
      %v1214 = vsub.f32 %v1136, %v1182
      %v1215 = vsub.f32 %v1139, %v1185
      %v1216 = vsub.f32 %v1141, %v1188
      %v1217 = vsub.f32 %v1144, %v1191
      %v1218 = vsub.f32 %v1146, %v1194
      %v1219 = vsub.f32 %v1149, %v1197
      %v1220 = vsub.f32 %v1151, %v1200
      %v1221 = vsub.f32 %v1154, %v1203
      %v1222 = vsub.f32 %v1156, %v1206
      %v1223 = vmul.f32 %v1207, 1.442695
      %v1224 = vpow.pop %v1223
      %v1225 = vmul.f32 %v1208, 1.442695
      %v1226 = vpow.pop %v1225
      %v1227 = vmul.f32 %v1209, 1.442695
      %v1228 = vpow.pop %v1227
      %v1229 = vmul.f32 %v1210, 1.442695
      %v1230 = vpow.pop %v1229
      %v1231 = vmul.f32 %v1211, 1.442695
      %v1232 = vpow.pop %v1231
      %v1233 = vmul.f32 %v1212, 1.442695
      %v1234 = vpow.pop %v1233
      %v1235 = vmul.f32 %v1213, 1.442695
      %v1236 = vpow.pop %v1235
      %v1237 = vmul.f32 %v1214, 1.442695
      %v1238 = vpow.pop %v1237
      %v1239 = vmul.f32 %v1215, 1.442695
      %v1240 = vpow.pop %v1239
      %v1241 = vmul.f32 %v1216, 1.442695
      %v1242 = vpow.pop %v1241
      %v1243 = vmul.f32 %v1217, 1.442695
      %v1244 = vpow.pop %v1243
      %v1245 = vmul.f32 %v1218, 1.442695
      %v1246 = vpow.pop %v1245
      %v1247 = vmul.f32 %v1219, 1.442695
      %v1248 = vpow.pop %v1247
      %v1249 = vmul.f32 %v1220, 1.442695
      %v1250 = vpow.pop %v1249
      %v1251 = vmul.f32 %v1221, 1.442695
      %v1252 = vpow.pop %v1251
      %v1253 = vmul.f32 %v1222, 1.442695
      %v1254 = vpow.pop %v1253
      %v1255 = vsel %vm1158, %v1224, 0.0
      %1256 = vadd.xlane.f32.xlu0 %v1255
      %v1257 = vpop.xlane.xlu0 %1256
      %v1258 = vsel %vm1158, %v1226, 0.0
      %1259 = vadd.xlane.f32.xlu0 %v1258
      %v1260 = vpop.xlane.xlu0 %1259
      %v1261 = vsel %vm1158, %v1228, 0.0
      %1262 = vadd.xlane.f32.xlu0 %v1261
      %v1263 = vpop.xlane.xlu0 %1262
      %v1264 = vsel %vm1158, %v1230, 0.0
      %1265 = vadd.xlane.f32.xlu0 %v1264
      %v1266 = vpop.xlane.xlu0 %1265
      %v1267 = vsel %vm1158, %v1232, 0.0
      %1268 = vadd.xlane.f32.xlu0 %v1267
      %v1269 = vpop.xlane.xlu0 %1268
      %v1270 = vsel %vm1158, %v1234, 0.0
      %1271 = vadd.xlane.f32.xlu0 %v1270
      %v1272 = vpop.xlane.xlu0 %1271
      %v1273 = vsel %vm1158, %v1236, 0.0
      %1274 = vadd.xlane.f32.xlu0 %v1273
      %v1275 = vpop.xlane.xlu0 %1274
      %v1276 = vsel %vm1158, %v1238, 0.0
      %1277 = vadd.xlane.f32.xlu0 %v1276
      %v1278 = vpop.xlane.xlu0 %1277
      %v1279 = vsel %vm1158, %v1240, 0.0
      %1280 = vadd.xlane.f32.xlu0 %v1279
      %v1281 = vpop.xlane.xlu0 %1280
      %v1282 = vsel %vm1158, %v1242, 0.0
      %1283 = vadd.xlane.f32.xlu0 %v1282
      %v1284 = vpop.xlane.xlu0 %1283
      %v1285 = vsel %vm1158, %v1244, 0.0
      %1286 = vadd.xlane.f32.xlu0 %v1285
      %v1287 = vpop.xlane.xlu0 %1286
      %v1288 = vsel %vm1158, %v1246, 0.0
      %1289 = vadd.xlane.f32.xlu0 %v1288
      %v1290 = vpop.xlane.xlu0 %1289
      %v1291 = vsel %vm1158, %v1248, 0.0
      %1292 = vadd.xlane.f32.xlu0 %v1291
      %v1293 = vpop.xlane.xlu0 %1292
      %v1294 = vsel %vm1158, %v1250, 0.0
      %1295 = vadd.xlane.f32.xlu0 %v1294
      %v1296 = vpop.xlane.xlu0 %1295
      %v1297 = vsel %vm1158, %v1252, 0.0
      %1298 = vadd.xlane.f32.xlu0 %v1297
      %v1299 = vpop.xlane.xlu0 %1298
      %v1300 = vsel %vm1158, %v1254, 0.0
      %1301 = vadd.xlane.f32.xlu0 %v1300
      %v1302 = vpop.xlane.xlu0 %1301
      %v1303 = vlog2.pop %v1257
      %v1304 = vmul.f32 %v1303, 0.6931472
      %v1305 = vlog2.pop %v1260
      %v1306 = vmul.f32 %v1305, 0.6931472
      %v1307 = vlog2.pop %v1263
      %v1308 = vmul.f32 %v1307, 0.6931472
      %v1309 = vlog2.pop %v1266
      %v1310 = vmul.f32 %v1309, 0.6931472
      %v1311 = vlog2.pop %v1269
      %v1312 = vmul.f32 %v1311, 0.6931472
      %v1313 = vlog2.pop %v1272
      %v1314 = vmul.f32 %v1313, 0.6931472
      %v1315 = vlog2.pop %v1275
      %v1316 = vmul.f32 %v1315, 0.6931472
      %v1317 = vlog2.pop %v1278
      %v1318 = vmul.f32 %v1317, 0.6931472
      %v1319 = vlog2.pop %v1281
      %v1320 = vmul.f32 %v1319, 0.6931472
      %v1321 = vlog2.pop %v1284
      %v1322 = vmul.f32 %v1321, 0.6931472
      %v1323 = vlog2.pop %v1287
      %v1324 = vmul.f32 %v1323, 0.6931472
      %v1325 = vlog2.pop %v1290
      %v1326 = vmul.f32 %v1325, 0.6931472
      %v1327 = vlog2.pop %v1293
      %v1328 = vmul.f32 %v1327, 0.6931472
      %v1329 = vlog2.pop %v1296
      %v1330 = vmul.f32 %v1329, 0.6931472
      %v1331 = vlog2.pop %v1299
      %v1332 = vmul.f32 %v1331, 0.6931472
      %v1333 = vlog2.pop %v1302
      %v1334 = vmul.f32 %v1333, 0.6931472
      %v1335 = vsub.f32 %v1207, %v1304
      %v1336 = vsub.f32 %v1208, %v1306
      %v1337 = vsub.f32 %v1209, %v1308
      %v1338 = vsub.f32 %v1210, %v1310
      %v1339 = vsub.f32 %v1211, %v1312
      %v1340 = vsub.f32 %v1212, %v1314
      %v1341 = vsub.f32 %v1213, %v1316
      %v1342 = vsub.f32 %v1214, %v1318
      %v1343 = vsub.f32 %v1215, %v1320
      %v1344 = vsub.f32 %v1216, %v1322
      %v1345 = vsub.f32 %v1217, %v1324
      %v1346 = vsub.f32 %v1218, %v1326
      %v1347 = vsub.f32 %v1219, %v1328
      %v1348 = vsub.f32 %v1220, %v1330
      %v1349 = vsub.f32 %v1221, %v1332
      %v1350 = vsub.f32 %v1222, %v1334
      %1351 = vst.msk [vmem:[%s441] sm:$0xff] %vm1158, %v1335
      %1352 = vst.msk [vmem:[%s441 + $0x8] sm:$0xff] %vm1158, %v1336
      %1353 = vst.msk [vmem:[%s441 + $0x10] sm:$0xff] %vm1158, %v1337
      %1354 = vst.msk [vmem:[%s441 + $0x18] sm:$0xff] %vm1158, %v1338
      %1355 = vst.msk [vmem:[%s441 + $0x20] sm:$0xff] %vm1158, %v1339
      %1356 = vst.msk [vmem:[%s441 + $0x28] sm:$0xff] %vm1158, %v1340
      %1357 = vst.msk [vmem:[%s441 + $0x30] sm:$0xff] %vm1158, %v1341
      %1358 = vst.msk [vmem:[%s441 + $0x38] sm:$0xff] %vm1158, %v1342
      %1359 = vst.msk [vmem:[%s441 + $0x40] sm:$0xff] %vm1158, %v1343
      %1360 = vst.msk [vmem:[%s441 + $0x48] sm:$0xff] %vm1158, %v1344
      %1361 = vst.msk [vmem:[%s441 + $0x50] sm:$0xff] %vm1158, %v1345
      %1362 = vst.msk [vmem:[%s441 + $0x58] sm:$0xff] %vm1158, %v1346
      %1363 = vst.msk [vmem:[%s441 + $0x60] sm:$0xff] %vm1158, %v1347
      %1364 = vst.msk [vmem:[%s441 + $0x68] sm:$0xff] %vm1158, %v1348
      %1365 = vst.msk [vmem:[%s441 + $0x70] sm:$0xff] %vm1158, %v1349
      %1366 = vst.msk [vmem:[%s441 + $0x78] sm:$0xff] %vm1158, %v1350
      %s1367 = smul.u32 16, %s27
      %p1368 = scmp.lt.s32.totalorder %s26, 1
      %s1369 = scalar_select %p1368, %s26, 1
      %p1370 = scmp.lt.s32.totalorder %s1367, 15
      %s1371 = scalar_select %p1370, %s1367, 15
      %s1372 = smul.addr %s1369, 16
      %s1373 = sadd.s32 %s1371, %s1372
      %s1374 = smul.addr %s1373, 8
      %s1375 = scalar_lea.vmem %s11, %s1374
      // Predicated region
      $region65: #{get_model_forward.9} parent=63 // pred_check
        %p1376 = pneg %p297
      $region66: #{get_model_forward.9} parent=63 // pred_check_branch
        %1378 = sbr.rel (%p1376) target = $region68
      $region67: #{get_model_forward.9} parent=63 // pred_region
        %s1379 = smul.u32 16, %s27
      $region68: #{get_model_forward.9} parent=63 // pred_fallthru
        _
    $region64: #{get_model_forward.9} parent=5 // pred_fallthru
      _
    %p1380 = scmp.le.s32.totalorder 2, %s17
    // Predicated region
    $region69: #{get_model_forward.9} parent=5 // pred_check
      %p1381 = pneg %p1380
    $region70: #{get_model_forward.9} parent=5 // pred_check_branch
      %1383 = sbr.rel (%p1381) target = $region72
    $region71: #{get_model_forward.9} parent=5 // pred_region
      %s1384 = ssub.s32 %s17, 2
      // Predicated region
      $region73: #{get_model_forward.9} parent=71 // pred_check
        %p1385 = pneg %p303
      $region74: #{get_model_forward.9} parent=71 // pred_check_branch
        %1387 = sbr.rel (%p1385) target = $region76
      $region75: #{get_model_forward.9} parent=71 // pred_region
        %s1388 = smul.u32 16, %s29
        %p1389 = scmp.lt.s32.totalorder %s28, 1
        %s1390 = scalar_select %p1389, %s28, 1
        %p1391 = scmp.lt.s32.totalorder %s1388, 15
        %s1392 = scalar_select %p1391, %s1388, 15
        %s1393 = smul.addr %s1390, 16
        %s1394 = sadd.s32 %s1392, %s1393
        %s1395 = smul.addr %s1394, 8
        %s1396 = scalar_lea.vmem %s11, %s1395
      $region76: #{get_model_forward.9} parent=71 // pred_fallthru
        _
    $region72: #{get_model_forward.9} parent=5 // pred_fallthru
      _
  $region6: #{get_model_forward.9} parent=0 // loop_footer
    %s21 = sadd.s32 1, %s17
  $region7: #{get_model_forward.9} parent=0 // loop_footer_branch
    %16 = sbr.rel target = $region3
  $region8: #{get_model_forward.9} parent=0 // loop_exit
    _

</llo_original>
